<compile_context>
chip_gen: v7x
topology: tpu7x:2x2x1
jax: 0.10.0
libtpu: 0.0.40
codegen_flags: <defaults>
</compile_context>

<pallas_src>
import math

import jax
import jax.numpy as jnp
from jax import lax
from jax.experimental import pallas as pl
from jax.experimental.pallas import tpu as pltpu


# ----------------------------------------------------------------------------
# Pallas kernel: one grid step == one batch element b.  All heads handled
# inside the body; weights stay resident via constant-index BlockSpecs.
# ----------------------------------------------------------------------------
def _rga_kernel(xq_ref, xk_ref, xv_ref,
                wq_ref, wk_ref, wv_ref,
                bq_ref, bk_ref, bv_ref,
                e_ref, wfc_ref, bfc_ref,
                o_ref):
    bf16 = jnp.bfloat16
    f32 = jnp.float32

    xq = xq_ref[0]                        # (L, d) bf16 (cast in wrapper)
    xk = xk_ref[0]
    xv = xv_ref[0]

    L, dh = e_ref.shape
    d = wq_ref.shape[1]
    h = d // dh
    scale = 1.0 / math.sqrt(dh)

    # Full-D projections: (L,d)x(d,d) bf16 MXU matmuls, f32 accumulation.
    # The 1/sqrt(dh) softmax scale is folded into q here (one (L,d) multiply)
    # instead of scaling each per-head (L,L) logits tile: both QK^T and Srel
    # are linear in q, so (QK^T + Srel)/sqrt(dh) == QK^T(q*s) + Srel(q*s).
    q_all = (jnp.dot(xq, wq_ref[...], preferred_element_type=f32)
             + bq_ref[...]) * scale
    k_all = jnp.dot(xk, wk_ref[...], preferred_element_type=f32) + bk_ref[...]
    v_all = jnp.dot(xv, wv_ref[...], preferred_element_type=f32) + bv_ref[...]

    # ---- Relative-position term, batched over heads -------------------------
    # Stack q heads along the sublane axis: (h*L, dh).  E is shared by all
    # heads, so QE for every head is one (h*L,dh)x(dh,L) MXU matmul instead of
    # h tiny ones (better MXU pipeline fill given the small K=dh contraction).
    q_flat = jnp.concatenate(
        [q_all[:, j * dh:(j + 1) * dh] for j in range(h)], axis=0).astype(bf16)
    e_t = e_ref[...]                                           # (L, dh) bf16
    qe = lax.dot_general(q_flat, e_t, (((1,), (1,)), ((), ())),
                         preferred_element_type=f32)           # (h*L, L)

    # The reference's QE-mask + pad + reshape "skewing" reduces exactly to
    #   Srel[s, c] = QE[s, L-1-s+c]  for c <= s,  0 otherwise,
    # i.e. a per-row left rotation of QE by (L-1-s) followed by a lower-
    # triangular mask.  Implemented ONCE for all heads as a log2(L) barrel
    # shift of pltpu.roll (XLU slot) + (h*L,1)-broadcast selects (VPU),
    # hoisted out of the per-head loop.
    row1 = lax.broadcasted_iota(jnp.int32, (L, 1), 0)          # 0..L-1
    row = jnp.concatenate([row1] * h, axis=0)                  # (h*L, 1)
    col = lax.broadcasted_iota(jnp.int32, (1, L), 1)           # (1, L)
    causal = col <= row                                        # (h*L, L) bool
    rot = (L - 1) - row                                        # (h*L, 1) int32
    nbits = max(1, (L - 1).bit_length())

    skew = qe
    for b in range(nbits):
        amt = 1 << b
        rolled = pltpu.roll(skew, shift=L - amt, axis=1)       # left-rot by amt
        take = ((rot >> b) & 1) == 1                           # (h*L, 1)
        skew = jnp.where(take, rolled, skew)
    srel = jnp.where(causal, skew, 0.0)                        # (h*L, L) f32

    # ---- Per-head attention --------------------------------------------------
    # Heads statically unrolled (h is small).
    # TODO(synk): only the mask=None, chord_grid=None, len_k == len_q path of
    # the reference forward is implemented (self-attention, no extra mask).
    heads_out = []
    for j in range(h):
        qj = q_flat[j * L:(j + 1) * L, :]                      # (L, dh) bf16
        kj = k_all[:, j * dh:(j + 1) * dh].astype(bf16)
        vj = v_all[:, j * dh:(j + 1) * dh].astype(bf16)
        srel_j = srel[j * L:(j + 1) * L, :]                    # (L, L) f32

        # q . k^T in the native trans_b dot_general form (no explicit kj
        # transpose is materialized).
        qkt = lax.dot_general(qj, kj, (((1,), (1,)), ((), ())),
                              preferred_element_type=f32)      # (L, L)
        logits = qkt + srel_j                    # 1/sqrt(dh) already folded in q

        # Softmax in f32 (v5e-friendly); divide goes to the EUP via
        # approximate reciprocal.
        m = jnp.max(logits, axis=-1, keepdims=True)
        p = jnp.exp(logits - m)
        attn_w = p * pl.reciprocal(jnp.sum(p, axis=-1, keepdims=True),
                                   approx=True)

        heads_out.append(jnp.dot(attn_w.astype(bf16), vj,
                                 preferred_element_type=f32))  # (L, dh)

    # One lane-dense (L, d) slab of concatenated heads feeds the fc matmul
    # directly (no masked per-head stores into a VMEM scratch, no read-back).
    attn_cat = jnp.concatenate(heads_out, axis=1).astype(bf16)
    out = (jnp.dot(attn_cat, wfc_ref[...], preferred_element_type=f32)
           + bfc_ref[...])
    o_ref[0] = out


# ----------------------------------------------------------------------------
# Wrapper (parameter layout + pallas_call)
# ----------------------------------------------------------------------------
def relative_global_attention(params, inputs):
    xq, xk, xv = inputs
    B, L, d = xq.shape
    h = params["h"]
    dh = d // h
    max_seq = params["E"].shape[0]
    assert L <= max_seq and xk.shape == (B, L, d) and xv.shape == (B, L, d)

    bf16 = jnp.bfloat16
    # Activations in bf16: halves HBM<->VMEM DMA bytes and the double-buffered
    # VMEM footprint; the kernel matmuls already use bf16 operands.
    xq = xq.astype(bf16)
    xk = xk.astype(bf16)
    xv = xv.astype(bf16)

    # torch Linear: y = x @ W.T + b  ->  pass W.T so the kernel does x @ w.
    wq = jnp.transpose(params["Wq_w"]).astype(bf16)      # (d, d)
    wk = jnp.transpose(params["Wk_w"]).astype(bf16)
    wv = jnp.transpose(params["Wv_w"]).astype(bf16)
    wfc = jnp.transpose(params["fc_w"]).astype(bf16)
    bq = params["Wq_b"].reshape(1, d)
    bk = params["Wk_b"].reshape(1, d)
    bv = params["Wv_b"].reshape(1, d)
    bfc = params["fc_b"].reshape(1, d)
    e = params["E"][max_seq - L:, :].astype(bf16)        # _get_left_embedding

    args = (xq, xk, xv, wq, wk, wv, bq, bk, bv, e, wfc, bfc)

    # Advisory cost estimate so XLA schedules surrounding ops sensibly.
    flops = B * (8 * L * d * d + 6 * L * L * d)
    transcendentals = B * h * L * L
    bytes_accessed = (3 * B * L * d * 2 + B * L * d * 4
                      + 4 * d * d * 2 + 4 * d * 4 + L * dh * 2)
    cost = pl.CostEstimate(flops=flops, transcendentals=transcendentals,
                           bytes_accessed=bytes_accessed)

    # VMEM budget: double-buffered activation/output blocks + single-buffered
    # resident weights + rough in-kernel f32 temporaries.  Capped at 48 MiB so
    # the same limit is safe under v7x's 64 MiB physical VMEM; on v5e/v6e
    # (128 MiB) this can be raised for the non-flash path at larger L.
    est = (2 * (3 * L * d * 2 + L * d * 4)
           + 4 * d * d * 2 + 4 * d * 4 + L * dh * 2
           + 4 * h * L * L * 4 + 8 * L * d * 4)
    vmem_limit = min(48 * 1024 * 1024, max(32 * 1024 * 1024, 2 * est))

    def call(single_buffer_resident):
        # Weights / biases / E use constant index maps (never change across
        # grid steps): single-buffer them so the second pipeline buffer isn't
        # dead VMEM.
        resident = (dict(pipeline_mode=pl.Buffered(1))
                    if single_buffer_resident else {})
        spec_x = pl.BlockSpec((1, L, d), lambda b: (b, 0, 0))
        spec_w = pl.BlockSpec((d, d), lambda b: (0, 0), **resident)
        spec_b = pl.BlockSpec((1, d), lambda b: (0, 0), **resident)
        spec_e = pl.BlockSpec((L, dh), lambda b: (0, 0), **resident)
        spec_o = pl.BlockSpec((1, L, d), lambda b: (b, 0, 0))
        return pl.pallas_call(
            _rga_kernel,
            out_shape=jax.ShapeDtypeStruct((B, L, d), jnp.float32),
            grid_spec=pltpu.PrefetchScalarGridSpec(
                num_scalar_prefetch=0,
                grid=(B,),
                in_specs=[spec_x, spec_x, spec_x,
                          spec_w, spec_w, spec_w,
                          spec_b, spec_b, spec_b,
                          spec_e, spec_w, spec_b],
                out_specs=spec_o,
            ),
            compiler_params=pltpu.CompilerParams(
                dimension_semantics=("parallel",),
                vmem_limit_bytes=vmem_limit,
            ),
            cost_estimate=cost,
        )(*args)

    try:
        return call(True)
    except Exception:
        # TODO(synk): this jax build rejected pl.Buffered(1) single-buffering
        # of the resident weight/bias/E blocks; fall back to the default
        # double-buffered pipeline (correctness unchanged, one extra VMEM copy
        # of the weights).
        return call(False)


# ----------------------------------------------------------------------------
# Deterministic parameter init (shapes from the module __init__)
# ----------------------------------------------------------------------------
def init_params(key, d=32, h=4, max_seq=64):
    dh = d // h
    ks = jax.random.split(key, 9)
    s = 0.1
    return dict(
        h=h, d=d,
        Wq_w=s * jax.random.normal(ks[0], (d, d), jnp.float32),
        Wq_b=s * jax.random.normal(ks[1], (d,), jnp.float32),
        Wk_w=s * jax.random.normal(ks[2], (d, d), jnp.float32),
        Wk_b=s * jax.random.normal(ks[3], (d,), jnp.float32),
        Wv_w=s * jax.random.normal(ks[4], (d, d), jnp.float32),
        Wv_b=s * jax.random.normal(ks[5], (d,), jnp.float32),
        fc_w=s * jax.random.normal(ks[6], (d, d), jnp.float32),
        fc_b=s * jax.random.normal(ks[7], (d,), jnp.float32),
        E=jax.random.normal(ks[8], (max_seq, dh), jnp.float32),
    )


# ----------------------------------------------------------------------------
# Pure-JAX reference mirroring the PyTorch forward op-by-op (for validation)
# ----------------------------------------------------------------------------
def reference_forward(params, inputs):
    xq, xk, xv = inputs
    B, L, d = xq.shape
    h = params["h"]
    dh = d // h
    max_seq = params["E"].shape[0]

    def lin(x, w, b):
        return x @ w.T + b

    def split_heads(x):
        return x.reshape(B, L, h, dh).transpose(0, 2, 1, 3)

    q = split_heads(lin(xq, params["Wq_w"], params["Wq_b"]))
    k = split_heads(lin(xk, params["Wk_w"], params["Wk_b"]))
    v = split_heads(lin(xv, params["Wv_w"], params["Wv_b"]))

    len_q = L
    E = params["E"][max(0, max_seq - len_q):, :]
    QE = jnp.einsum("bhld,md->bhlm", q, E)
    M = QE.shape[-1]
    lengths = jnp.arange(M - 1, M - len_q - 1, -1)
    keep = ~(jnp.arange(M)[None, :] < lengths[:, None])        # _qe_masking
    QE = keep.astype(QE.dtype) * QE
    padded = jnp.pad(QE, ((0, 0), (0, 0), (0, 0), (1, 0)))     # _skewing
    Srel = padded.reshape(B, h, M + 1, len_q)[:, :, 1:, :]
    QKt = jnp.einsum("bhld,bhmd->bhlm", q, k)
    logits = (QKt + Srel) / math.sqrt(dh)
    w = jax.nn.softmax(logits, axis=-1)
    attn = jnp.einsum("bhlm,bhmd->bhld", w, v)
    out = attn.transpose(0, 2, 1, 3).reshape(B, L, d)
    return out @ params["fc_w"].T + params["fc_b"]


if __name__ == "__main__":
    def _check(B, L, d, h, max_seq):
        key = jax.random.PRNGKey(0)
        kp, kx = jax.random.split(key)
        params = init_params(kp, d=d, h=h, max_seq=max_seq)
        x = jax.random.normal(kx, (B, L, d), jnp.float32)
        inputs = [x, x, x]                 # [Q, K, V] as in the PyTorch forward
        out = jax.block_until_ready(relative_global_attention(params, inputs))
        ref = reference_forward(params, inputs)
        assert out.shape == (B, L, d)
        max_err = float(jnp.max(jnp.abs(out - ref)))
        # bf16 activations/weights/E + approx reciprocal -> loosened tolerance.
        assert jnp.allclose(out, ref, rtol=2e-2, atol=2e-2), (
            f"B={B} L={L} d={d} h={h}: max_err={max_err}")

    # Primary small demo shape.
    _check(B=2, L=8, d=32, h=4, max_seq=64)
    # Barrel-shift skew re-validation (review concern): lane-aligned L >= 128
    # and a non-power-of-two L.
    _check(B=1, L=128, d=32, h=4, max_seq=256)
    _check(B=1, L=48, d=32, h=4, max_seq=64)
    print("KERNEL_OK")
</pallas_src>

<mosaic_0001>
module attributes {stable_mosaic.version = 11 : i64} {
  func.func @_rga_kernel(%arg0: i32, %arg1: memref<1x8x32xbf16, #tpu.memory_space<vmem>>, %arg2: memref<1x8x32xbf16, #tpu.memory_space<vmem>>, %arg3: memref<1x8x32xbf16, #tpu.memory_space<vmem>>, %arg4: memref<32x32xbf16, #tpu.memory_space<vmem>>, %arg5: memref<32x32xbf16, #tpu.memory_space<vmem>>, %arg6: memref<32x32xbf16, #tpu.memory_space<vmem>>, %arg7: memref<1x32xf32, #tpu.memory_space<vmem>>, %arg8: memref<1x32xf32, #tpu.memory_space<vmem>>, %arg9: memref<1x32xf32, #tpu.memory_space<vmem>>, %arg10: memref<8x8xbf16, #tpu.memory_space<vmem>>, %arg11: memref<32x32xbf16, #tpu.memory_space<vmem>>, %arg12: memref<1x32xf32, #tpu.memory_space<vmem>>, %arg13: memref<1x8x32xf32, #tpu.memory_space<vmem>>) attributes {dimension_semantics = [#tpu.dimension_semantics<parallel>], iteration_bounds = array<i64: 2>, scalar_prefetch = 0 : i64, scratch_operands = 0 : i64, tpu.core_type = #tpu.core_type<tc>, window_params = [{transform_indices = @transform_0, window_bounds = array<i64: 1, 8, 32>}, {transform_indices = @transform_1, window_bounds = array<i64: 1, 8, 32>}, {transform_indices = @transform_2, window_bounds = array<i64: 1, 8, 32>}, {pipeline_mode = #tpu.pipeline_mode<synchronous>, transform_indices = @transform_3, window_bounds = array<i64: 32, 32>}, {pipeline_mode = #tpu.pipeline_mode<synchronous>, transform_indices = @transform_4, window_bounds = array<i64: 32, 32>}, {pipeline_mode = #tpu.pipeline_mode<synchronous>, transform_indices = @transform_5, window_bounds = array<i64: 32, 32>}, {pipeline_mode = #tpu.pipeline_mode<synchronous>, transform_indices = @transform_6, window_bounds = array<i64: 1, 32>}, {pipeline_mode = #tpu.pipeline_mode<synchronous>, transform_indices = @transform_7, window_bounds = array<i64: 1, 32>}, {pipeline_mode = #tpu.pipeline_mode<synchronous>, transform_indices = @transform_8, window_bounds = array<i64: 1, 32>}, {pipeline_mode = #tpu.pipeline_mode<synchronous>, transform_indices = @transform_9, window_bounds = array<i64: 8, 8>}, {pipeline_mode = #tpu.pipeline_mode<synchronous>, transform_indices = @transform_10, window_bounds = array<i64: 32, 32>}, {pipeline_mode = #tpu.pipeline_mode<synchronous>, transform_indices = @transform_11, window_bounds = array<i64: 1, 32>}, {transform_indices = @transform_12, window_bounds = array<i64: 1, 8, 32>}]} {
    %c0 = arith.constant 0 : index
    %c0_0 = arith.constant 0 : index
    %c0_1 = arith.constant 0 : index
    %0 = vector.load %arg1[%c0, %c0_0, %c0_1] : memref<1x8x32xbf16, #tpu.memory_space<vmem>>, vector<1x8x32xbf16>
    %1 = vector.shape_cast %0 : vector<1x8x32xbf16> to vector<8x32xbf16>
    %c0_2 = arith.constant 0 : index
    %c0_3 = arith.constant 0 : index
    %c0_4 = arith.constant 0 : index
    %2 = vector.load %arg2[%c0_2, %c0_3, %c0_4] : memref<1x8x32xbf16, #tpu.memory_space<vmem>>, vector<1x8x32xbf16>
    %3 = vector.shape_cast %2 : vector<1x8x32xbf16> to vector<8x32xbf16>
    %c0_5 = arith.constant 0 : index
    %c0_6 = arith.constant 0 : index
    %c0_7 = arith.constant 0 : index
    %4 = vector.load %arg3[%c0_5, %c0_6, %c0_7] : memref<1x8x32xbf16, #tpu.memory_space<vmem>>, vector<1x8x32xbf16>
    %5 = vector.shape_cast %4 : vector<1x8x32xbf16> to vector<8x32xbf16>
    %c0_8 = arith.constant 0 : index
    %c0_9 = arith.constant 0 : index
    %6 = vector.load %arg4[%c0_8, %c0_9] : memref<32x32xbf16, #tpu.memory_space<vmem>>, vector<32x32xbf16>
    %cst = arith.constant dense<0.000000e+00> : vector<8x32xf32>
    %7 = tpu.matmul %1, %6, %cst {dimension_numbers = #tpu.dot_dimension_numbers<[1], [0], [0], [1], [0, 0, 1, 1], [], []>} : vector<8x32xbf16>, vector<32x32xbf16>, vector<8x32xf32> -> vector<8x32xf32>
    %c0_10 = arith.constant 0 : index
    %c0_11 = arith.constant 0 : index
    %8 = vector.load %arg7[%c0_10, %c0_11] : memref<1x32xf32, #tpu.memory_space<vmem>>, vector<1x32xf32>
    %9 = vector.broadcast %8 : vector<1x32xf32> to vector<8x32xf32>
    %10 = arith.addf %7, %9 : vector<8x32xf32>
    %cst_12 = arith.constant 0.353553385 : f32
    %11 = vector.broadcast %cst_12 : f32 to vector<8x32xf32>
    %12 = arith.mulf %10, %11 : vector<8x32xf32>
    %c0_13 = arith.constant 0 : index
    %c0_14 = arith.constant 0 : index
    %13 = vector.load %arg5[%c0_13, %c0_14] : memref<32x32xbf16, #tpu.memory_space<vmem>>, vector<32x32xbf16>
    %cst_15 = arith.constant dense<0.000000e+00> : vector<8x32xf32>
    %14 = tpu.matmul %3, %13, %cst_15 {dimension_numbers = #tpu.dot_dimension_numbers<[1], [0], [0], [1], [0, 0, 1, 1], [], []>} : vector<8x32xbf16>, vector<32x32xbf16>, vector<8x32xf32> -> vector<8x32xf32>
    %c0_16 = arith.constant 0 : index
    %c0_17 = arith.constant 0 : index
    %15 = vector.load %arg8[%c0_16, %c0_17] : memref<1x32xf32, #tpu.memory_space<vmem>>, vector<1x32xf32>
    %16 = vector.broadcast %15 : vector<1x32xf32> to vector<8x32xf32>
    %17 = arith.addf %14, %16 : vector<8x32xf32>
    %c0_18 = arith.constant 0 : index
    %c0_19 = arith.constant 0 : index
    %18 = vector.load %arg6[%c0_18, %c0_19] : memref<32x32xbf16, #tpu.memory_space<vmem>>, vector<32x32xbf16>
    %cst_20 = arith.constant dense<0.000000e+00> : vector<8x32xf32>
    %19 = tpu.matmul %5, %18, %cst_20 {dimension_numbers = #tpu.dot_dimension_numbers<[1], [0], [0], [1], [0, 0, 1, 1], [], []>} : vector<8x32xbf16>, vector<32x32xbf16>, vector<8x32xf32> -> vector<8x32xf32>
    %c0_21 = arith.constant 0 : index
    %c0_22 = arith.constant 0 : index
    %20 = vector.load %arg9[%c0_21, %c0_22] : memref<1x32xf32, #tpu.memory_space<vmem>>, vector<1x32xf32>
    %21 = vector.broadcast %20 : vector<1x32xf32> to vector<8x32xf32>
    %22 = arith.addf %19, %21 : vector<8x32xf32>
    %23 = vector.extract_strided_slice %12 {offsets = [0, 0], sizes = [8, 8], strides = [1, 1]} : vector<8x32xf32> to vector<8x8xf32>
    %24 = vector.extract_strided_slice %12 {offsets = [0, 8], sizes = [8, 8], strides = [1, 1]} : vector<8x32xf32> to vector<8x8xf32>
    %25 = vector.extract_strided_slice %12 {offsets = [0, 16], sizes = [8, 8], strides = [1, 1]} : vector<8x32xf32> to vector<8x8xf32>
    %26 = vector.extract_strided_slice %12 {offsets = [0, 24], sizes = [8, 8], strides = [1, 1]} : vector<8x32xf32> to vector<8x8xf32>
    %27 = tpu.concatenate %23, %24, %25, %26 in 0 : vector<8x8xf32>, vector<8x8xf32>, vector<8x8xf32>, vector<8x8xf32> -> vector<32x8xf32>
    %28 = arith.truncf %27 : vector<32x8xf32> to vector<32x8xbf16>
    %c0_23 = arith.constant 0 : index
    %c0_24 = arith.constant 0 : index
    %29 = vector.load %arg10[%c0_23, %c0_24] : memref<8x8xbf16, #tpu.memory_space<vmem>>, vector<8x8xbf16>
    %cst_25 = arith.constant dense<0.000000e+00> : vector<32x8xf32>
    %30 = tpu.matmul %28, %29, %cst_25 {dimension_numbers = #tpu.dot_dimension_numbers<[1], [1], [0], [0], [0, 0, 1, 0], [], []>} : vector<32x8xbf16>, vector<8x8xbf16>, vector<32x8xf32> -> vector<32x8xf32>
    %31 = tpu.iota {dimensions = array<i32: 0>} : vector<8x1xi32>
    %32 = tpu.concatenate %31, %31, %31, %31 in 0 : vector<8x1xi32>, vector<8x1xi32>, vector<8x1xi32>, vector<8x1xi32> -> vector<32x1xi32>
    %33 = tpu.iota {dimensions = array<i32: 1>} : vector<1x8xi32>
    %34 = vector.broadcast %33 : vector<1x8xi32> to vector<32x8xi32>
    %35 = vector.broadcast %32 : vector<32x1xi32> to vector<32x8xi32>
    %36 = arith.cmpi sle, %34, %35 : vector<32x8xi32>
    %c7_i32 = arith.constant 7 : i32
    %37 = vector.broadcast %c7_i32 : i32 to vector<32x1xi32>
    %38 = arith.subi %37, %32 : vector<32x1xi32>
    %c7_i32_26 = arith.constant 7 : i32
    %39 = tpu.dynamic_rotate %30 by %c7_i32_26 dim 1 : vector<32x8xf32>, i32 -> vector<32x8xf32>
    %c0_i32 = arith.constant 0 : i32
    %40 = vector.broadcast %c0_i32 : i32 to vector<32x1xi32>
    %41 = arith.shrsi %38, %40 : vector<32x1xi32>
    %c1_i32 = arith.constant 1 : i32
    %42 = vector.broadcast %c1_i32 : i32 to vector<32x1xi32>
    %43 = arith.andi %41, %42 : vector<32x1xi32>
    %c1_i32_27 = arith.constant 1 : i32
    %44 = vector.broadcast %c1_i32_27 : i32 to vector<32x1xi32>
    %45 = arith.cmpi eq, %43, %44 : vector<32x1xi32>
    %46 = vector.shape_cast %45 : vector<32x1xi1> to vector<32x1xi1>
    %47 = vector.broadcast %46 : vector<32x1xi1> to vector<32x8xi1>
    %48 = arith.select %47, %39, %30 : vector<32x8xi1>, vector<32x8xf32>
    %c6_i32 = arith.constant 6 : i32
    %49 = tpu.dynamic_rotate %48 by %c6_i32 dim 1 : vector<32x8xf32>, i32 -> vector<32x8xf32>
    %c1_i32_28 = arith.constant 1 : i32
    %50 = vector.broadcast %c1_i32_28 : i32 to vector<32x1xi32>
    %51 = arith.shrsi %38, %50 : vector<32x1xi32>
    %c1_i32_29 = arith.constant 1 : i32
    %52 = vector.broadcast %c1_i32_29 : i32 to vector<32x1xi32>
    %53 = arith.andi %51, %52 : vector<32x1xi32>
    %c1_i32_30 = arith.constant 1 : i32
    %54 = vector.broadcast %c1_i32_30 : i32 to vector<32x1xi32>
    %55 = arith.cmpi eq, %53, %54 : vector<32x1xi32>
    %56 = vector.shape_cast %55 : vector<32x1xi1> to vector<32x1xi1>
    %57 = vector.broadcast %56 : vector<32x1xi1> to vector<32x8xi1>
    %58 = arith.select %57, %49, %48 : vector<32x8xi1>, vector<32x8xf32>
    %c4_i32 = arith.constant 4 : i32
    %59 = tpu.dynamic_rotate %58 by %c4_i32 dim 1 : vector<32x8xf32>, i32 -> vector<32x8xf32>
    %c2_i32 = arith.constant 2 : i32
    %60 = vector.broadcast %c2_i32 : i32 to vector<32x1xi32>
    %61 = arith.shrsi %38, %60 : vector<32x1xi32>
    %c1_i32_31 = arith.constant 1 : i32
    %62 = vector.broadcast %c1_i32_31 : i32 to vector<32x1xi32>
    %63 = arith.andi %61, %62 : vector<32x1xi32>
    %c1_i32_32 = arith.constant 1 : i32
    %64 = vector.broadcast %c1_i32_32 : i32 to vector<32x1xi32>
    %65 = arith.cmpi eq, %63, %64 : vector<32x1xi32>
    %66 = vector.shape_cast %65 : vector<32x1xi1> to vector<32x1xi1>
    %67 = vector.broadcast %66 : vector<32x1xi1> to vector<32x8xi1>
    %68 = arith.select %67, %59, %58 : vector<32x8xi1>, vector<32x8xf32>
    %cst_33 = arith.constant 0.000000e+00 : f32
    %69 = vector.broadcast %cst_33 : f32 to vector<32x8xf32>
    %70 = arith.select %36, %68, %69 : vector<32x8xi1>, vector<32x8xf32>
    %71 = vector.extract_strided_slice %28 {offsets = [0, 0], sizes = [8, 8], strides = [1, 1]} : vector<32x8xbf16> to vector<8x8xbf16>
    %72 = vector.extract_strided_slice %17 {offsets = [0, 0], sizes = [8, 8], strides = [1, 1]} : vector<8x32xf32> to vector<8x8xf32>
    %73 = arith.truncf %72 : vector<8x8xf32> to vector<8x8xbf16>
    %74 = vector.extract_strided_slice %22 {offsets = [0, 0], sizes = [8, 8], strides = [1, 1]} : vector<8x32xf32> to vector<8x8xf32>
    %75 = arith.truncf %74 : vector<8x8xf32> to vector<8x8xbf16>
    %76 = vector.extract_strided_slice %70 {offsets = [0, 0], sizes = [8, 8], strides = [1, 1]} : vector<32x8xf32> to vector<8x8xf32>
    %cst_34 = arith.constant dense<0.000000e+00> : vector<8x8xf32>
    %77 = tpu.matmul %71, %73, %cst_34 {dimension_numbers = #tpu.dot_dimension_numbers<[1], [1], [0], [0], [0, 0, 1, 0], [], []>} : vector<8x8xbf16>, vector<8x8xbf16>, vector<8x8xf32> -> vector<8x8xf32>
    %78 = arith.addf %77, %76 : vector<8x8xf32>
    %cst_35 = arith.constant dense<0xFF800000> : vector<8xf32>
    %79 = vector.multi_reduction <maximumf>, %78, %cst_35 [1] : vector<8x8xf32> to vector<8xf32>
    %80 = vector.shape_cast %79 : vector<8xf32> to vector<8x1xf32>
    %81 = vector.broadcast %80 : vector<8x1xf32> to vector<8x8xf32>
    %82 = arith.subf %78, %81 : vector<8x8xf32>
    %83 = math.exp %82 : vector<8x8xf32>
    %cst_36 = arith.constant dense<0.000000e+00> : vector<8xf32>
    %84 = vector.multi_reduction <add>, %83, %cst_36 [1] : vector<8x8xf32> to vector<8xf32>
    %85 = vector.shape_cast %84 : vector<8xf32> to vector<8x1xf32>
    %86 = tpu.reciprocal %85 {approx = true} : vector<8x1xf32> -> vector<8x1xf32>
    %87 = vector.broadcast %86 : vector<8x1xf32> to vector<8x8xf32>
    %88 = arith.mulf %83, %87 : vector<8x8xf32>
    %89 = arith.truncf %88 : vector<8x8xf32> to vector<8x8xbf16>
    %cst_37 = arith.constant dense<0.000000e+00> : vector<8x8xf32>
    %90 = tpu.matmul %89, %75, %cst_37 {dimension_numbers = #tpu.dot_dimension_numbers<[1], [0], [0], [1], [0, 0, 1, 1], [], []>} : vector<8x8xbf16>, vector<8x8xbf16>, vector<8x8xf32> -> vector<8x8xf32>
    %91 = vector.extract_strided_slice %28 {offsets = [8, 0], sizes = [8, 8], strides = [1, 1]} : vector<32x8xbf16> to vector<8x8xbf16>
    %92 = vector.extract_strided_slice %17 {offsets = [0, 8], sizes = [8, 8], strides = [1, 1]} : vector<8x32xf32> to vector<8x8xf32>
    %93 = arith.truncf %92 : vector<8x8xf32> to vector<8x8xbf16>
    %94 = vector.extract_strided_slice %22 {offsets = [0, 8], sizes = [8, 8], strides = [1, 1]} : vector<8x32xf32> to vector<8x8xf32>
    %95 = arith.truncf %94 : vector<8x8xf32> to vector<8x8xbf16>
    %96 = vector.extract_strided_slice %70 {offsets = [8, 0], sizes = [8, 8], strides = [1, 1]} : vector<32x8xf32> to vector<8x8xf32>
    %cst_38 = arith.constant dense<0.000000e+00> : vector<8x8xf32>
    %97 = tpu.matmul %91, %93, %cst_38 {dimension_numbers = #tpu.dot_dimension_numbers<[1], [1], [0], [0], [0, 0, 1, 0], [], []>} : vector<8x8xbf16>, vector<8x8xbf16>, vector<8x8xf32> -> vector<8x8xf32>
    %98 = arith.addf %97, %96 : vector<8x8xf32>
    %cst_39 = arith.constant dense<0xFF800000> : vector<8xf32>
    %99 = vector.multi_reduction <maximumf>, %98, %cst_39 [1] : vector<8x8xf32> to vector<8xf32>
    %100 = vector.shape_cast %99 : vector<8xf32> to vector<8x1xf32>
    %101 = vector.broadcast %100 : vector<8x1xf32> to vector<8x8xf32>
    %102 = arith.subf %98, %101 : vector<8x8xf32>
    %103 = math.exp %102 : vector<8x8xf32>
    %cst_40 = arith.constant dense<0.000000e+00> : vector<8xf32>
    %104 = vector.multi_reduction <add>, %103, %cst_40 [1] : vector<8x8xf32> to vector<8xf32>
    %105 = vector.shape_cast %104 : vector<8xf32> to vector<8x1xf32>
    %106 = tpu.reciprocal %105 {approx = true} : vector<8x1xf32> -> vector<8x1xf32>
    %107 = vector.broadcast %106 : vector<8x1xf32> to vector<8x8xf32>
    %108 = arith.mulf %103, %107 : vector<8x8xf32>
    %109 = arith.truncf %108 : vector<8x8xf32> to vector<8x8xbf16>
    %cst_41 = arith.constant dense<0.000000e+00> : vector<8x8xf32>
    %110 = tpu.matmul %109, %95, %cst_41 {dimension_numbers = #tpu.dot_dimension_numbers<[1], [0], [0], [1], [0, 0, 1, 1], [], []>} : vector<8x8xbf16>, vector<8x8xbf16>, vector<8x8xf32> -> vector<8x8xf32>
    %111 = vector.extract_strided_slice %28 {offsets = [16, 0], sizes = [8, 8], strides = [1, 1]} : vector<32x8xbf16> to vector<8x8xbf16>
    %112 = vector.extract_strided_slice %17 {offsets = [0, 16], sizes = [8, 8], strides = [1, 1]} : vector<8x32xf32> to vector<8x8xf32>
    %113 = arith.truncf %112 : vector<8x8xf32> to vector<8x8xbf16>
    %114 = vector.extract_strided_slice %22 {offsets = [0, 16], sizes = [8, 8], strides = [1, 1]} : vector<8x32xf32> to vector<8x8xf32>
    %115 = arith.truncf %114 : vector<8x8xf32> to vector<8x8xbf16>
    %116 = vector.extract_strided_slice %70 {offsets = [16, 0], sizes = [8, 8], strides = [1, 1]} : vector<32x8xf32> to vector<8x8xf32>
    %cst_42 = arith.constant dense<0.000000e+00> : vector<8x8xf32>
    %117 = tpu.matmul %111, %113, %cst_42 {dimension_numbers = #tpu.dot_dimension_numbers<[1], [1], [0], [0], [0, 0, 1, 0], [], []>} : vector<8x8xbf16>, vector<8x8xbf16>, vector<8x8xf32> -> vector<8x8xf32>
    %118 = arith.addf %117, %116 : vector<8x8xf32>
    %cst_43 = arith.constant dense<0xFF800000> : vector<8xf32>
    %119 = vector.multi_reduction <maximumf>, %118, %cst_43 [1] : vector<8x8xf32> to vector<8xf32>
    %120 = vector.shape_cast %119 : vector<8xf32> to vector<8x1xf32>
    %121 = vector.broadcast %120 : vector<8x1xf32> to vector<8x8xf32>
    %122 = arith.subf %118, %121 : vector<8x8xf32>
    %123 = math.exp %122 : vector<8x8xf32>
    %cst_44 = arith.constant dense<0.000000e+00> : vector<8xf32>
    %124 = vector.multi_reduction <add>, %123, %cst_44 [1] : vector<8x8xf32> to vector<8xf32>
    %125 = vector.shape_cast %124 : vector<8xf32> to vector<8x1xf32>
    %126 = tpu.reciprocal %125 {approx = true} : vector<8x1xf32> -> vector<8x1xf32>
    %127 = vector.broadcast %126 : vector<8x1xf32> to vector<8x8xf32>
    %128 = arith.mulf %123, %127 : vector<8x8xf32>
    %129 = arith.truncf %128 : vector<8x8xf32> to vector<8x8xbf16>
    %cst_45 = arith.constant dense<0.000000e+00> : vector<8x8xf32>
    %130 = tpu.matmul %129, %115, %cst_45 {dimension_numbers = #tpu.dot_dimension_numbers<[1], [0], [0], [1], [0, 0, 1, 1], [], []>} : vector<8x8xbf16>, vector<8x8xbf16>, vector<8x8xf32> -> vector<8x8xf32>
    %131 = vector.extract_strided_slice %28 {offsets = [24, 0], sizes = [8, 8], strides = [1, 1]} : vector<32x8xbf16> to vector<8x8xbf16>
    %132 = vector.extract_strided_slice %17 {offsets = [0, 24], sizes = [8, 8], strides = [1, 1]} : vector<8x32xf32> to vector<8x8xf32>
    %133 = arith.truncf %132 : vector<8x8xf32> to vector<8x8xbf16>
    %134 = vector.extract_strided_slice %22 {offsets = [0, 24], sizes = [8, 8], strides = [1, 1]} : vector<8x32xf32> to vector<8x8xf32>
    %135 = arith.truncf %134 : vector<8x8xf32> to vector<8x8xbf16>
    %136 = vector.extract_strided_slice %70 {offsets = [24, 0], sizes = [8, 8], strides = [1, 1]} : vector<32x8xf32> to vector<8x8xf32>
    %cst_46 = arith.constant dense<0.000000e+00> : vector<8x8xf32>
    %137 = tpu.matmul %131, %133, %cst_46 {dimension_numbers = #tpu.dot_dimension_numbers<[1], [1], [0], [0], [0, 0, 1, 0], [], []>} : vector<8x8xbf16>, vector<8x8xbf16>, vector<8x8xf32> -> vector<8x8xf32>
    %138 = arith.addf %137, %136 : vector<8x8xf32>
    %cst_47 = arith.constant dense<0xFF800000> : vector<8xf32>
    %139 = vector.multi_reduction <maximumf>, %138, %cst_47 [1] : vector<8x8xf32> to vector<8xf32>
    %140 = vector.shape_cast %139 : vector<8xf32> to vector<8x1xf32>
    %141 = vector.broadcast %140 : vector<8x1xf32> to vector<8x8xf32>
    %142 = arith.subf %138, %141 : vector<8x8xf32>
    %143 = math.exp %142 : vector<8x8xf32>
    %cst_48 = arith.constant dense<0.000000e+00> : vector<8xf32>
    %144 = vector.multi_reduction <add>, %143, %cst_48 [1] : vector<8x8xf32> to vector<8xf32>
    %145 = vector.shape_cast %144 : vector<8xf32> to vector<8x1xf32>
    %146 = tpu.reciprocal %145 {approx = true} : vector<8x1xf32> -> vector<8x1xf32>
    %147 = vector.broadcast %146 : vector<8x1xf32> to vector<8x8xf32>
    %148 = arith.mulf %143, %147 : vector<8x8xf32>
    %149 = arith.truncf %148 : vector<8x8xf32> to vector<8x8xbf16>
    %cst_49 = arith.constant dense<0.000000e+00> : vector<8x8xf32>
    %150 = tpu.matmul %149, %135, %cst_49 {dimension_numbers = #tpu.dot_dimension_numbers<[1], [0], [0], [1], [0, 0, 1, 1], [], []>} : vector<8x8xbf16>, vector<8x8xbf16>, vector<8x8xf32> -> vector<8x8xf32>
    %151 = tpu.concatenate %90, %110, %130, %150 in 1 : vector<8x8xf32>, vector<8x8xf32>, vector<8x8xf32>, vector<8x8xf32> -> vector<8x32xf32>
    %152 = arith.truncf %151 : vector<8x32xf32> to vector<8x32xbf16>
    %c0_50 = arith.constant 0 : index
    %c0_51 = arith.constant 0 : index
    %153 = vector.load %arg11[%c0_50, %c0_51] : memref<32x32xbf16, #tpu.memory_space<vmem>>, vector<32x32xbf16>
    %cst_52 = arith.constant dense<0.000000e+00> : vector<8x32xf32>
    %154 = tpu.matmul %152, %153, %cst_52 {dimension_numbers = #tpu.dot_dimension_numbers<[1], [0], [0], [1], [0, 0, 1, 1], [], []>} : vector<8x32xbf16>, vector<32x32xbf16>, vector<8x32xf32> -> vector<8x32xf32>
    %c0_53 = arith.constant 0 : index
    %c0_54 = arith.constant 0 : index
    %155 = vector.load %arg12[%c0_53, %c0_54] : memref<1x32xf32, #tpu.memory_space<vmem>>, vector<1x32xf32>
    %156 = vector.broadcast %155 : vector<1x32xf32> to vector<8x32xf32>
    %157 = arith.addf %154, %156 : vector<8x32xf32>
    %c0_55 = arith.constant 0 : index
    %c0_56 = arith.constant 0 : index
    %c0_57 = arith.constant 0 : index
    %158 = vector.load %arg13[%c0_55, %c0_56, %c0_57] : memref<1x8x32xf32, #tpu.memory_space<vmem>>, vector<1x8x32xf32>
    %159 = vector.shape_cast %158 : vector<1x8x32xf32> to vector<8x32xf32>
    %160 = vector.shape_cast %157 : vector<8x32xf32> to vector<1x8x32xf32>
    tpu.vector_store %arg13[%c0_55, %c0_56, %c0_57], %160 {strides = array<i32>} : memref<1x8x32xf32, #tpu.memory_space<vmem>>, vector<1x8x32xf32>,
    return
  }
  func.func @transform_0(%arg0: i32) -> (i32, i32, i32) {
    %c0_i32 = arith.constant 0 : i32
    %c0_i32_0 = arith.constant 0 : i32
    %c0_i32_1 = arith.constant 0 : i32
    return %arg0, %c0_i32, %c0_i32_0 : i32, i32, i32
  }
  func.func @transform_1(%arg0: i32) -> (i32, i32, i32) {
    %c0_i32 = arith.constant 0 : i32
    %c0_i32_0 = arith.constant 0 : i32
    %c0_i32_1 = arith.constant 0 : i32
    return %arg0, %c0_i32, %c0_i32_0 : i32, i32, i32
  }
  func.func @transform_2(%arg0: i32) -> (i32, i32, i32) {
    %c0_i32 = arith.constant 0 : i32
    %c0_i32_0 = arith.constant 0 : i32
    %c0_i32_1 = arith.constant 0 : i32
    return %arg0, %c0_i32, %c0_i32_0 : i32, i32, i32
  }
  func.func @transform_3(%arg0: i32) -> (i32, i32) {
    %c0_i32 = arith.constant 0 : i32
    %c0_i32_0 = arith.constant 0 : i32
    %c0_i32_1 = arith.constant 0 : i32
    return %c0_i32, %c0_i32_0 : i32, i32
  }
  func.func @transform_4(%arg0: i32) -> (i32, i32) {
    %c0_i32 = arith.constant 0 : i32
    %c0_i32_0 = arith.constant 0 : i32
    %c0_i32_1 = arith.constant 0 : i32
    return %c0_i32, %c0_i32_0 : i32, i32
  }
  func.func @transform_5(%arg0: i32) -> (i32, i32) {
    %c0_i32 = arith.constant 0 : i32
    %c0_i32_0 = arith.constant 0 : i32
    %c0_i32_1 = arith.constant 0 : i32
    return %c0_i32, %c0_i32_0 : i32, i32
  }
  func.func @transform_6(%arg0: i32) -> (i32, i32) {
    %c0_i32 = arith.constant 0 : i32
    %c0_i32_0 = arith.constant 0 : i32
    %c0_i32_1 = arith.constant 0 : i32
    return %c0_i32, %c0_i32_0 : i32, i32
  }
  func.func @transform_7(%arg0: i32) -> (i32, i32) {
    %c0_i32 = arith.constant 0 : i32
    %c0_i32_0 = arith.constant 0 : i32
    %c0_i32_1 = arith.constant 0 : i32
    return %c0_i32, %c0_i32_0 : i32, i32
  }
  func.func @transform_8(%arg0: i32) -> (i32, i32) {
    %c0_i32 = arith.constant 0 : i32
    %c0_i32_0 = arith.constant 0 : i32
    %c0_i32_1 = arith.constant 0 : i32
    return %c0_i32, %c0_i32_0 : i32, i32
  }
  func.func @transform_9(%arg0: i32) -> (i32, i32) {
    %c0_i32 = arith.constant 0 : i32
    %c0_i32_0 = arith.constant 0 : i32
    %c0_i32_1 = arith.constant 0 : i32
    return %c0_i32, %c0_i32_0 : i32, i32
  }
  func.func @transform_10(%arg0: i32) -> (i32, i32) {
    %c0_i32 = arith.constant 0 : i32
    %c0_i32_0 = arith.constant 0 : i32
    %c0_i32_1 = arith.constant 0 : i32
    return %c0_i32, %c0_i32_0 : i32, i32
  }
  func.func @transform_11(%arg0: i32) -> (i32, i32) {
    %c0_i32 = arith.constant 0 : i32
    %c0_i32_0 = arith.constant 0 : i32
    %c0_i32_1 = arith.constant 0 : i32
    return %c0_i32, %c0_i32_0 : i32, i32
  }
  func.func @transform_12(%arg0: i32) -> (i32, i32, i32) {
    %c0_i32 = arith.constant 0 : i32
    %c0_i32_0 = arith.constant 0 : i32
    %c0_i32_1 = arith.constant 0 : i32
    return %arg0, %c0_i32, %c0_i32_0 : i32, i32, i32
  }
}

module attributes {stable_mosaic.version = 11 : i64} {
  func.func @_rga_kernel(%arg0: i32, %arg1: memref<1x8x32xbf16, #tpu.memory_space<vmem>>, %arg2: memref<1x8x32xbf16, #tpu.memory_space<vmem>>, %arg3: memref<1x8x32xbf16, #tpu.memory_space<vmem>>, %arg4: memref<32x32xbf16, #tpu.memory_space<vmem>>, %arg5: memref<32x32xbf16, #tpu.memory_space<vmem>>, %arg6: memref<32x32xbf16, #tpu.memory_space<vmem>>, %arg7: memref<1x32xf32, #tpu.memory_space<vmem>>, %arg8: memref<1x32xf32, #tpu.memory_space<vmem>>, %arg9: memref<1x32xf32, #tpu.memory_space<vmem>>, %arg10: memref<8x8xbf16, #tpu.memory_space<vmem>>, %arg11: memref<32x32xbf16, #tpu.memory_space<vmem>>, %arg12: memref<1x32xf32, #tpu.memory_space<vmem>>, %arg13: memref<1x8x32xf32, #tpu.memory_space<vmem>>) attributes {dimension_semantics = [#tpu.dimension_semantics<parallel>], iteration_bounds = array<i64: 2>, scalar_prefetch = 0 : i64, scratch_operands = 0 : i64, tpu.core_type = #tpu.core_type<tc>, window_params = [{transform_indices = @transform_0, window_bounds = array<i64: 1, 8, 32>}, {transform_indices = @transform_1, window_bounds = array<i64: 1, 8, 32>}, {transform_indices = @transform_2, window_bounds = array<i64: 1, 8, 32>}, {pipeline_mode = #tpu.pipeline_mode<synchronous>, transform_indices = @transform_3, window_bounds = array<i64: 32, 32>}, {pipeline_mode = #tpu.pipeline_mode<synchronous>, transform_indices = @transform_4, window_bounds = array<i64: 32, 32>}, {pipeline_mode = #tpu.pipeline_mode<synchronous>, transform_indices = @transform_5, window_bounds = array<i64: 32, 32>}, {pipeline_mode = #tpu.pipeline_mode<synchronous>, transform_indices = @transform_6, window_bounds = array<i64: 1, 32>}, {pipeline_mode = #tpu.pipeline_mode<synchronous>, transform_indices = @transform_7, window_bounds = array<i64: 1, 32>}, {pipeline_mode = #tpu.pipeline_mode<synchronous>, transform_indices = @transform_8, window_bounds = array<i64: 1, 32>}, {pipeline_mode = #tpu.pipeline_mode<synchronous>, transform_indices = @transform_9, window_bounds = array<i64: 8, 8>}, {pipeline_mode = #tpu.pipeline_mode<synchronous>, transform_indices = @transform_10, window_bounds = array<i64: 32, 32>}, {pipeline_mode = #tpu.pipeline_mode<synchronous>, transform_indices = @transform_11, window_bounds = array<i64: 1, 32>}, {transform_indices = @transform_12, window_bounds = array<i64: 1, 8, 32>}]} {
    %c0 = arith.constant 0 : index
    %c0_0 = arith.constant 0 : index
    %c0_1 = arith.constant 0 : index
    %0 = vector.load %arg1[%c0, %c0_0, %c0_1] : memref<1x8x32xbf16, #tpu.memory_space<vmem>>, vector<1x8x32xbf16>
    %1 = vector.shape_cast %0 : vector<1x8x32xbf16> to vector<8x32xbf16>
    %c0_2 = arith.constant 0 : index
    %c0_3 = arith.constant 0 : index
    %c0_4 = arith.constant 0 : index
    %2 = vector.load %arg2[%c0_2, %c0_3, %c0_4] : memref<1x8x32xbf16, #tpu.memory_space<vmem>>, vector<1x8x32xbf16>
    %3 = vector.shape_cast %2 : vector<1x8x32xbf16> to vector<8x32xbf16>
    %c0_5 = arith.constant 0 : index
    %c0_6 = arith.constant 0 : index
    %c0_7 = arith.constant 0 : index
    %4 = vector.load %arg3[%c0_5, %c0_6, %c0_7] : memref<1x8x32xbf16, #tpu.memory_space<vmem>>, vector<1x8x32xbf16>
    %5 = vector.shape_cast %4 : vector<1x8x32xbf16> to vector<8x32xbf16>
    %c0_8 = arith.constant 0 : index
    %c0_9 = arith.constant 0 : index
    %6 = vector.load %arg4[%c0_8, %c0_9] : memref<32x32xbf16, #tpu.memory_space<vmem>>, vector<32x32xbf16>
    %cst = arith.constant dense<0.000000e+00> : vector<8x32xf32>
    %7 = tpu.matmul %1, %6, %cst {dimension_numbers = #tpu.dot_dimension_numbers<[1], [0], [0], [1], [0, 0, 1, 1], [], []>} : vector<8x32xbf16>, vector<32x32xbf16>, vector<8x32xf32> -> vector<8x32xf32>
    %c0_10 = arith.constant 0 : index
    %c0_11 = arith.constant 0 : index
    %8 = vector.load %arg7[%c0_10, %c0_11] : memref<1x32xf32, #tpu.memory_space<vmem>>, vector<1x32xf32>
    %9 = vector.broadcast %8 : vector<1x32xf32> to vector<8x32xf32>
    %10 = arith.addf %7, %9 : vector<8x32xf32>
    %cst_12 = arith.constant 0.353553385 : f32
    %11 = vector.broadcast %cst_12 : f32 to vector<8x32xf32>
    %12 = arith.mulf %10, %11 : vector<8x32xf32>
    %c0_13 = arith.constant 0 : index
    %c0_14 = arith.constant 0 : index
    %13 = vector.load %arg5[%c0_13, %c0_14] : memref<32x32xbf16, #tpu.memory_space<vmem>>, vector<32x32xbf16>
    %cst_15 = arith.constant dense<0.000000e+00> : vector<8x32xf32>
    %14 = tpu.matmul %3, %13, %cst_15 {dimension_numbers = #tpu.dot_dimension_numbers<[1], [0], [0], [1], [0, 0, 1, 1], [], []>} : vector<8x32xbf16>, vector<32x32xbf16>, vector<8x32xf32> -> vector<8x32xf32>
    %c0_16 = arith.constant 0 : index
    %c0_17 = arith.constant 0 : index
    %15 = vector.load %arg8[%c0_16, %c0_17] : memref<1x32xf32, #tpu.memory_space<vmem>>, vector<1x32xf32>
    %16 = vector.broadcast %15 : vector<1x32xf32> to vector<8x32xf32>
    %17 = arith.addf %14, %16 : vector<8x32xf32>
    %c0_18 = arith.constant 0 : index
    %c0_19 = arith.constant 0 : index
    %18 = vector.load %arg6[%c0_18, %c0_19] : memref<32x32xbf16, #tpu.memory_space<vmem>>, vector<32x32xbf16>
    %cst_20 = arith.constant dense<0.000000e+00> : vector<8x32xf32>
    %19 = tpu.matmul %5, %18, %cst_20 {dimension_numbers = #tpu.dot_dimension_numbers<[1], [0], [0], [1], [0, 0, 1, 1], [], []>} : vector<8x32xbf16>, vector<32x32xbf16>, vector<8x32xf32> -> vector<8x32xf32>
    %c0_21 = arith.constant 0 : index
    %c0_22 = arith.constant 0 : index
    %20 = vector.load %arg9[%c0_21, %c0_22] : memref<1x32xf32, #tpu.memory_space<vmem>>, vector<1x32xf32>
    %21 = vector.broadcast %20 : vector<1x32xf32> to vector<8x32xf32>
    %22 = arith.addf %19, %21 : vector<8x32xf32>
    %23 = vector.extract_strided_slice %12 {offsets = [0, 0], sizes = [8, 8], strides = [1, 1]} : vector<8x32xf32> to vector<8x8xf32>
    %24 = vector.extract_strided_slice %12 {offsets = [0, 8], sizes = [8, 8], strides = [1, 1]} : vector<8x32xf32> to vector<8x8xf32>
    %25 = vector.extract_strided_slice %12 {offsets = [0, 16], sizes = [8, 8], strides = [1, 1]} : vector<8x32xf32> to vector<8x8xf32>
    %26 = vector.extract_strided_slice %12 {offsets = [0, 24], sizes = [8, 8], strides = [1, 1]} : vector<8x32xf32> to vector<8x8xf32>
    %27 = tpu.concatenate %23, %24, %25, %26 in 0 : vector<8x8xf32>, vector<8x8xf32>, vector<8x8xf32>, vector<8x8xf32> -> vector<32x8xf32>
    %28 = arith.truncf %27 : vector<32x8xf32> to vector<32x8xbf16>
    %c0_23 = arith.constant 0 : index
    %c0_24 = arith.constant 0 : index
    %29 = vector.load %arg10[%c0_23, %c0_24] : memref<8x8xbf16, #tpu.memory_space<vmem>>, vector<8x8xbf16>
    %cst_25 = arith.constant dense<0.000000e+00> : vector<32x8xf32>
    %30 = tpu.matmul %28, %29, %cst_25 {dimension_numbers = #tpu.dot_dimension_numbers<[1], [1], [0], [0], [0, 0, 1, 0], [], []>} : vector<32x8xbf16>, vector<8x8xbf16>, vector<32x8xf32> -> vector<32x8xf32>
    %31 = tpu.iota {dimensions = array<i32: 0>} : vector<8x1xi32>
    %32 = tpu.concatenate %31, %31, %31, %31 in 0 : vector<8x1xi32>, vector<8x1xi32>, vector<8x1xi32>, vector<8x1xi32> -> vector<32x1xi32>
    %33 = tpu.iota {dimensions = array<i32: 1>} : vector<1x8xi32>
    %34 = vector.broadcast %33 : vector<1x8xi32> to vector<32x8xi32>
    %35 = vector.broadcast %32 : vector<32x1xi32> to vector<32x8xi32>
    %36 = arith.cmpi sle, %34, %35 : vector<32x8xi32>
    %c7_i32 = arith.constant 7 : i32
    %37 = vector.broadcast %c7_i32 : i32 to vector<32x1xi32>
    %38 = arith.subi %37, %32 : vector<32x1xi32>
    %c7_i32_26 = arith.constant 7 : i32
    %39 = tpu.dynamic_rotate %30 by %c7_i32_26 dim 1 : vector<32x8xf32>, i32 -> vector<32x8xf32>
    %c0_i32 = arith.constant 0 : i32
    %40 = vector.broadcast %c0_i32 : i32 to vector<32x1xi32>
    %41 = arith.shrsi %38, %40 : vector<32x1xi32>
    %c1_i32 = arith.constant 1 : i32
    %42 = vector.broadcast %c1_i32 : i32 to vector<32x1xi32>
    %43 = arith.andi %41, %42 : vector<32x1xi32>
    %c1_i32_27 = arith.constant 1 : i32
    %44 = vector.broadcast %c1_i32_27 : i32 to vector<32x1xi32>
    %45 = arith.cmpi eq, %43, %44 : vector<32x1xi32>
    %46 = vector.shape_cast %45 : vector<32x1xi1> to vector<32x1xi1>
    %47 = vector.broadcast %46 : vector<32x1xi1> to vector<32x8xi1>
    %48 = arith.select %47, %39, %30 : vector<32x8xi1>, vector<32x8xf32>
    %c6_i32 = arith.constant 6 : i32
    %49 = tpu.dynamic_rotate %48 by %c6_i32 dim 1 : vector<32x8xf32>, i32 -> vector<32x8xf32>
    %c1_i32_28 = arith.constant 1 : i32
    %50 = vector.broadcast %c1_i32_28 : i32 to vector<32x1xi32>
    %51 = arith.shrsi %38, %50 : vector<32x1xi32>
    %c1_i32_29 = arith.constant 1 : i32
    %52 = vector.broadcast %c1_i32_29 : i32 to vector<32x1xi32>
    %53 = arith.andi %51, %52 : vector<32x1xi32>
    %c1_i32_30 = arith.constant 1 : i32
    %54 = vector.broadcast %c1_i32_30 : i32 to vector<32x1xi32>
    %55 = arith.cmpi eq, %53, %54 : vector<32x1xi32>
    %56 = vector.shape_cast %55 : vector<32x1xi1> to vector<32x1xi1>
    %57 = vector.broadcast %56 : vector<32x1xi1> to vector<32x8xi1>
    %58 = arith.select %57, %49, %48 : vector<32x8xi1>, vector<32x8xf32>
    %c4_i32 = arith.constant 4 : i32
    %59 = tpu.dynamic_rotate %58 by %c4_i32 dim 1 : vector<32x8xf32>, i32 -> vector<32x8xf32>
    %c2_i32 = arith.constant 2 : i32
    %60 = vector.broadcast %c2_i32 : i32 to vector<32x1xi32>
    %61 = arith.shrsi %38, %60 : vector<32x1xi32>
    %c1_i32_31 = arith.constant 1 : i32
    %62 = vector.broadcast %c1_i32_31 : i32 to vector<32x1xi32>
    %63 = arith.andi %61, %62 : vector<32x1xi32>
    %c1_i32_32 = arith.constant 1 : i32
    %64 = vector.broadcast %c1_i32_32 : i32 to vector<32x1xi32>
    %65 = arith.cmpi eq, %63, %64 : vector<32x1xi32>
    %66 = vector.shape_cast %65 : vector<32x1xi1> to vector<32x1xi1>
    %67 = vector.broadcast %66 : vector<32x1xi1> to vector<32x8xi1>
    %68 = arith.select %67, %59, %58 : vector<32x8xi1>, vector<32x8xf32>
    %cst_33 = arith.constant 0.000000e+00 : f32
    %69 = vector.broadcast %cst_33 : f32 to vector<32x8xf32>
    %70 = arith.select %36, %68, %69 : vector<32x8xi1>, vector<32x8xf32>
    %71 = vector.extract_strided_slice %28 {offsets = [0, 0], sizes = [8, 8], strides = [1, 1]} : vector<32x8xbf16> to vector<8x8xbf16>
    %72 = vector.extract_strided_slice %17 {offsets = [0, 0], sizes = [8, 8], strides = [1, 1]} : vector<8x32xf32> to vector<8x8xf32>
    %73 = arith.truncf %72 : vector<8x8xf32> to vector<8x8xbf16>
    %74 = vector.extract_strided_slice %22 {offsets = [0, 0], sizes = [8, 8], strides = [1, 1]} : vector<8x32xf32> to vector<8x8xf32>
    %75 = arith.truncf %74 : vector<8x8xf32> to vector<8x8xbf16>
    %76 = vector.extract_strided_slice %70 {offsets = [0, 0], sizes = [8, 8], strides = [1, 1]} : vector<32x8xf32> to vector<8x8xf32>
    %cst_34 = arith.constant dense<0.000000e+00> : vector<8x8xf32>
    %77 = tpu.matmul %71, %73, %cst_34 {dimension_numbers = #tpu.dot_dimension_numbers<[1], [1], [0], [0], [0, 0, 1, 0], [], []>} : vector<8x8xbf16>, vector<8x8xbf16>, vector<8x8xf32> -> vector<8x8xf32>
    %78 = arith.addf %77, %76 : vector<8x8xf32>
    %cst_35 = arith.constant dense<0xFF800000> : vector<8xf32>
    %79 = vector.multi_reduction <maximumf>, %78, %cst_35 [1] : vector<8x8xf32> to vector<8xf32>
    %80 = vector.shape_cast %79 : vector<8xf32> to vector<8x1xf32>
    %81 = vector.broadcast %80 : vector<8x1xf32> to vector<8x8xf32>
    %82 = arith.subf %78, %81 : vector<8x8xf32>
    %83 = math.exp %82 : vector<8x8xf32>
    %cst_36 = arith.constant dense<0.000000e+00> : vector<8xf32>
    %84 = vector.multi_reduction <add>, %83, %cst_36 [1] : vector<8x8xf32> to vector<8xf32>
    %85 = vector.shape_cast %84 : vector<8xf32> to vector<8x1xf32>
    %86 = tpu.reciprocal %85 {approx = true} : vector<8x1xf32> -> vector<8x1xf32>
    %87 = vector.broadcast %86 : vector<8x1xf32> to vector<8x8xf32>
    %88 = arith.mulf %83, %87 : vector<8x8xf32>
    %89 = arith.truncf %88 : vector<8x8xf32> to vector<8x8xbf16>
    %cst_37 = arith.constant dense<0.000000e+00> : vector<8x8xf32>
    %90 = tpu.matmul %89, %75, %cst_37 {dimension_numbers = #tpu.dot_dimension_numbers<[1], [0], [0], [1], [0, 0, 1, 1], [], []>} : vector<8x8xbf16>, vector<8x8xbf16>, vector<8x8xf32> -> vector<8x8xf32>
    %91 = vector.extract_strided_slice %28 {offsets = [8, 0], sizes = [8, 8], strides = [1, 1]} : vector<32x8xbf16> to vector<8x8xbf16>
    %92 = vector.extract_strided_slice %17 {offsets = [0, 8], sizes = [8, 8], strides = [1, 1]} : vector<8x32xf32> to vector<8x8xf32>
    %93 = arith.truncf %92 : vector<8x8xf32> to vector<8x8xbf16>
    %94 = vector.extract_strided_slice %22 {offsets = [0, 8], sizes = [8, 8], strides = [1, 1]} : vector<8x32xf32> to vector<8x8xf32>
    %95 = arith.truncf %94 : vector<8x8xf32> to vector<8x8xbf16>
    %96 = vector.extract_strided_slice %70 {offsets = [8, 0], sizes = [8, 8], strides = [1, 1]} : vector<32x8xf32> to vector<8x8xf32>
    %cst_38 = arith.constant dense<0.000000e+00> : vector<8x8xf32>
    %97 = tpu.matmul %91, %93, %cst_38 {dimension_numbers = #tpu.dot_dimension_numbers<[1], [1], [0], [0], [0, 0, 1, 0], [], []>} : vector<8x8xbf16>, vector<8x8xbf16>, vector<8x8xf32> -> vector<8x8xf32>
    %98 = arith.addf %97, %96 : vector<8x8xf32>
    %cst_39 = arith.constant dense<0xFF800000> : vector<8xf32>
    %99 = vector.multi_reduction <maximumf>, %98, %cst_39 [1] : vector<8x8xf32> to vector<8xf32>
    %100 = vector.shape_cast %99 : vector<8xf32> to vector<8x1xf32>
    %101 = vector.broadcast %100 : vector<8x1xf32> to vector<8x8xf32>
    %102 = arith.subf %98, %101 : vector<8x8xf32>
    %103 = math.exp %102 : vector<8x8xf32>
    %cst_40 = arith.constant dense<0.000000e+00> : vector<8xf32>
    %104 = vector.multi_reduction <add>, %103, %cst_40 [1] : vector<8x8xf32> to vector<8xf32>
    %105 = vector.shape_cast %104 : vector<8xf32> to vector<8x1xf32>
    %106 = tpu.reciprocal %105 {approx = true} : vector<8x1xf32> -> vector<8x1xf32>
    %107 = vector.broadcast %106 : vector<8x1xf32> to vector<8x8xf32>
    %108 = arith.mulf %103, %107 : vector<8x8xf32>
    %109 = arith.truncf %108 : vector<8x8xf32> to vector<8x8xbf16>
    %cst_41 = arith.constant dense<0.000000e+00> : vector<8x8xf32>
    %110 = tpu.matmul %109, %95, %cst_41 {dimension_numbers = #tpu.dot_dimension_numbers<[1], [0], [0], [1], [0, 0, 1, 1], [], []>} : vector<8x8xbf16>, vector<8x8xbf16>, vector<8x8xf32> -> vector<8x8xf32>
    %111 = vector.extract_strided_slice %28 {offsets = [16, 0], sizes = [8, 8], strides = [1, 1]} : vector<32x8xbf16> to vector<8x8xbf16>
    %112 = vector.extract_strided_slice %17 {offsets = [0, 16], sizes = [8, 8], strides = [1, 1]} : vector<8x32xf32> to vector<8x8xf32>
    %113 = arith.truncf %112 : vector<8x8xf32> to vector<8x8xbf16>
    %114 = vector.extract_strided_slice %22 {offsets = [0, 16], sizes = [8, 8], strides = [1, 1]} : vector<8x32xf32> to vector<8x8xf32>
    %115 = arith.truncf %114 : vector<8x8xf32> to vector<8x8xbf16>
    %116 = vector.extract_strided_slice %70 {offsets = [16, 0], sizes = [8, 8], strides = [1, 1]} : vector<32x8xf32> to vector<8x8xf32>
    %cst_42 = arith.constant dense<0.000000e+00> : vector<8x8xf32>
    %117 = tpu.matmul %111, %113, %cst_42 {dimension_numbers = #tpu.dot_dimension_numbers<[1], [1], [0], [0], [0, 0, 1, 0], [], []>} : vector<8x8xbf16>, vector<8x8xbf16>, vector<8x8xf32> -> vector<8x8xf32>
    %118 = arith.addf %117, %116 : vector<8x8xf32>
    %cst_43 = arith.constant dense<0xFF800000> : vector<8xf32>
    %119 = vector.multi_reduction <maximumf>, %118, %cst_43 [1] : vector<8x8xf32> to vector<8xf32>
    %120 = vector.shape_cast %119 : vector<8xf32> to vector<8x1xf32>
    %121 = vector.broadcast %120 : vector<8x1xf32> to vector<8x8xf32>
    %122 = arith.subf %118, %121 : vector<8x8xf32>
    %123 = math.exp %122 : vector<8x8xf32>
    %cst_44 = arith.constant dense<0.000000e+00> : vector<8xf32>
    %124 = vector.multi_reduction <add>, %123, %cst_44 [1] : vector<8x8xf32> to vector<8xf32>
    %125 = vector.shape_cast %124 : vector<8xf32> to vector<8x1xf32>
    %126 = tpu.reciprocal %125 {approx = true} : vector<8x1xf32> -> vector<8x1xf32>
    %127 = vector.broadcast %126 : vector<8x1xf32> to vector<8x8xf32>
    %128 = arith.mulf %123, %127 : vector<8x8xf32>
    %129 = arith.truncf %128 : vector<8x8xf32> to vector<8x8xbf16>
    %cst_45 = arith.constant dense<0.000000e+00> : vector<8x8xf32>
    %130 = tpu.matmul %129, %115, %cst_45 {dimension_numbers = #tpu.dot_dimension_numbers<[1], [0], [0], [1], [0, 0, 1, 1], [], []>} : vector<8x8xbf16>, vector<8x8xbf16>, vector<8x8xf32> -> vector<8x8xf32>
    %131 = vector.extract_strided_slice %28 {offsets = [24, 0], sizes = [8, 8], strides = [1, 1]} : vector<32x8xbf16> to vector<8x8xbf16>
    %132 = vector.extract_strided_slice %17 {offsets = [0, 24], sizes = [8, 8], strides = [1, 1]} : vector<8x32xf32> to vector<8x8xf32>
    %133 = arith.truncf %132 : vector<8x8xf32> to vector<8x8xbf16>
    %134 = vector.extract_strided_slice %22 {offsets = [0, 24], sizes = [8, 8], strides = [1, 1]} : vector<8x32xf32> to vector<8x8xf32>
    %135 = arith.truncf %134 : vector<8x8xf32> to vector<8x8xbf16>
    %136 = vector.extract_strided_slice %70 {offsets = [24, 0], sizes = [8, 8], strides = [1, 1]} : vector<32x8xf32> to vector<8x8xf32>
    %cst_46 = arith.constant dense<0.000000e+00> : vector<8x8xf32>
    %137 = tpu.matmul %131, %133, %cst_46 {dimension_numbers = #tpu.dot_dimension_numbers<[1], [1], [0], [0], [0, 0, 1, 0], [], []>} : vector<8x8xbf16>, vector<8x8xbf16>, vector<8x8xf32> -> vector<8x8xf32>
    %138 = arith.addf %137, %136 : vector<8x8xf32>
    %cst_47 = arith.constant dense<0xFF800000> : vector<8xf32>
    %139 = vector.multi_reduction <maximumf>, %138, %cst_47 [1] : vector<8x8xf32> to vector<8xf32>
    %140 = vector.shape_cast %139 : vector<8xf32> to vector<8x1xf32>
    %141 = vector.broadcast %140 : vector<8x1xf32> to vector<8x8xf32>
    %142 = arith.subf %138, %141 : vector<8x8xf32>
    %143 = math.exp %142 : vector<8x8xf32>
    %cst_48 = arith.constant dense<0.000000e+00> : vector<8xf32>
    %144 = vector.multi_reduction <add>, %143, %cst_48 [1] : vector<8x8xf32> to vector<8xf32>
    %145 = vector.shape_cast %144 : vector<8xf32> to vector<8x1xf32>
    %146 = tpu.reciprocal %145 {approx = true} : vector<8x1xf32> -> vector<8x1xf32>
    %147 = vector.broadcast %146 : vector<8x1xf32> to vector<8x8xf32>
    %148 = arith.mulf %143, %147 : vector<8x8xf32>
    %149 = arith.truncf %148 : vector<8x8xf32> to vector<8x8xbf16>
    %cst_49 = arith.constant dense<0.000000e+00> : vector<8x8xf32>
    %150 = tpu.matmul %149, %135, %cst_49 {dimension_numbers = #tpu.dot_dimension_numbers<[1], [0], [0], [1], [0, 0, 1, 1], [], []>} : vector<8x8xbf16>, vector<8x8xbf16>, vector<8x8xf32> -> vector<8x8xf32>
    %151 = tpu.concatenate %90, %110, %130, %150 in 1 : vector<8x8xf32>, vector<8x8xf32>, vector<8x8xf32>, vector<8x8xf32> -> vector<8x32xf32>
    %152 = arith.truncf %151 : vector<8x32xf32> to vector<8x32xbf16>
    %c0_50 = arith.constant 0 : index
    %c0_51 = arith.constant 0 : index
    %153 = vector.load %arg11[%c0_50, %c0_51] : memref<32x32xbf16, #tpu.memory_space<vmem>>, vector<32x32xbf16>
    %cst_52 = arith.constant dense<0.000000e+00> : vector<8x32xf32>
    %154 = tpu.matmul %152, %153, %cst_52 {dimension_numbers = #tpu.dot_dimension_numbers<[1], [0], [0], [1], [0, 0, 1, 1], [], []>} : vector<8x32xbf16>, vector<32x32xbf16>, vector<8x32xf32> -> vector<8x32xf32>
    %c0_53 = arith.constant 0 : index
    %c0_54 = arith.constant 0 : index
    %155 = vector.load %arg12[%c0_53, %c0_54] : memref<1x32xf32, #tpu.memory_space<vmem>>, vector<1x32xf32>
    %156 = vector.broadcast %155 : vector<1x32xf32> to vector<8x32xf32>
    %157 = arith.addf %154, %156 : vector<8x32xf32>
    %c0_55 = arith.constant 0 : index
    %c0_56 = arith.constant 0 : index
    %c0_57 = arith.constant 0 : index
    %158 = vector.load %arg13[%c0_55, %c0_56, %c0_57] : memref<1x8x32xf32, #tpu.memory_space<vmem>>, vector<1x8x32xf32>
    %159 = vector.shape_cast %158 : vector<1x8x32xf32> to vector<8x32xf32>
    %160 = vector.shape_cast %157 : vector<8x32xf32> to vector<1x8x32xf32>
    tpu.vector_store %arg13[%c0_55, %c0_56, %c0_57], %160 {strides = array<i32>} : memref<1x8x32xf32, #tpu.memory_space<vmem>>, vector<1x8x32xf32>,
    return
  }
  func.func @transform_0(%arg0: i32) -> (i32, i32, i32) {
    %c0_i32 = arith.constant 0 : i32
    %c0_i32_0 = arith.constant 0 : i32
    %c0_i32_1 = arith.constant 0 : i32
    return %arg0, %c0_i32, %c0_i32_0 : i32, i32, i32
  }
  func.func @transform_1(%arg0: i32) -> (i32, i32, i32) {
    %c0_i32 = arith.constant 0 : i32
    %c0_i32_0 = arith.constant 0 : i32
    %c0_i32_1 = arith.constant 0 : i32
    return %arg0, %c0_i32, %c0_i32_0 : i32, i32, i32
  }
  func.func @transform_2(%arg0: i32) -> (i32, i32, i32) {
    %c0_i32 = arith.constant 0 : i32
    %c0_i32_0 = arith.constant 0 : i32
    %c0_i32_1 = arith.constant 0 : i32
    return %arg0, %c0_i32, %c0_i32_0 : i32, i32, i32
  }
  func.func @transform_3(%arg0: i32) -> (i32, i32) {
    %c0_i32 = arith.constant 0 : i32
    %c0_i32_0 = arith.constant 0 : i32
    %c0_i32_1 = arith.constant 0 : i32
    return %c0_i32, %c0_i32_0 : i32, i32
  }
  func.func @transform_4(%arg0: i32) -> (i32, i32) {
    %c0_i32 = arith.constant 0 : i32
    %c0_i32_0 = arith.constant 0 : i32
    %c0_i32_1 = arith.constant 0 : i32
    return %c0_i32, %c0_i32_0 : i32, i32
  }
  func.func @transform_5(%arg0: i32) -> (i32, i32) {
    %c0_i32 = arith.constant 0 : i32
    %c0_i32_0 = arith.constant 0 : i32
    %c0_i32_1 = arith.constant 0 : i32
    return %c0_i32, %c0_i32_0 : i32, i32
  }
  func.func @transform_6(%arg0: i32) -> (i32, i32) {
    %c0_i32 = arith.constant 0 : i32
    %c0_i32_0 = arith.constant 0 : i32
    %c0_i32_1 = arith.constant 0 : i32
    return %c0_i32, %c0_i32_0 : i32, i32
  }
  func.func @transform_7(%arg0: i32) -> (i32, i32) {
    %c0_i32 = arith.constant 0 : i32
    %c0_i32_0 = arith.constant 0 : i32
    %c0_i32_1 = arith.constant 0 : i32
    return %c0_i32, %c0_i32_0 : i32, i32
  }
  func.func @transform_8(%arg0: i32) -> (i32, i32) {
    %c0_i32 = arith.constant 0 : i32
    %c0_i32_0 = arith.constant 0 : i32
    %c0_i32_1 = arith.constant 0 : i32
    return %c0_i32, %c0_i32_0 : i32, i32
  }
  func.func @transform_9(%arg0: i32) -> (i32, i32) {
    %c0_i32 = arith.constant 0 : i32
    %c0_i32_0 = arith.constant 0 : i32
    %c0_i32_1 = arith.constant 0 : i32
    return %c0_i32, %c0_i32_0 : i32, i32
  }
  func.func @transform_10(%arg0: i32) -> (i32, i32) {
    %c0_i32 = arith.constant 0 : i32
    %c0_i32_0 = arith.constant 0 : i32
    %c0_i32_1 = arith.constant 0 : i32
    return %c0_i32, %c0_i32_0 : i32, i32
  }
  func.func @transform_11(%arg0: i32) -> (i32, i32) {
    %c0_i32 = arith.constant 0 : i32
    %c0_i32_0 = arith.constant 0 : i32
    %c0_i32_1 = arith.constant 0 : i32
    return %c0_i32, %c0_i32_0 : i32, i32
  }
  func.func @transform_12(%arg0: i32) -> (i32, i32, i32) {
    %c0_i32 = arith.constant 0 : i32
    %c0_i32_0 = arith.constant 0 : i32
    %c0_i32_1 = arith.constant 0 : i32
    return %arg0, %c0_i32, %c0_i32_0 : i32, i32, i32
  }
}

</mosaic_0001>

<llo_original>
// kernel: tpu_custom_call.1
$region0: #{tpu_custom_call.1}
  #allocation0 [shape = 'u32[]', space=smem, size = 0x4, offset = 0x4, fixed_abs, tag = 'smem constant byte address 0x4 - core index']
  #allocation1 [shape = 'u32[144,128]{1,0:T(1,128)}', space=vmem, size = 0x12000, scoped, tag = 'internal scratch']
  %s0 = inlined_call_operand.hbm [shape: bf16[2,8,32], index: 0, kind: input, shape index: {}]
  %s1 = inlined_call_operand.hbm [shape: bf16[2,8,32], index: 1, kind: input, shape index: {}]
  %s2 = inlined_call_operand.hbm [shape: bf16[2,8,32], index: 2, kind: input, shape index: {}]
  %s3 = inlined_call_operand.hbm [shape: bf16[32,32], index: 3, kind: input, shape index: {}]
  %s4 = inlined_call_operand.hbm [shape: bf16[32,32], index: 4, kind: input, shape index: {}]
  %s5 = inlined_call_operand.vmem [shape: bf16[32,32], index: 5, kind: input, shape index: {}]
  %s6 = inlined_call_operand.vmem [shape: f32[1,32], index: 6, kind: input, shape index: {}]
  %s7 = inlined_call_operand.vmem [shape: f32[1,32], index: 7, kind: input, shape index: {}]
  %s8 = inlined_call_operand.hbm [shape: f32[1,32], index: 8, kind: input, shape index: {}]
  %s9 = inlined_call_operand.hbm [shape: bf16[8,8], index: 9, kind: input, shape index: {}]
  %s10 = inlined_call_operand.vmem [shape: bf16[32,32], index: 10, kind: input, shape index: {}]
  %s11 = inlined_call_operand.vmem [shape: f32[1,32], index: 11, kind: input, shape index: {}]
  %s12 = inlined_call_operand.hbm [shape: f32[2,8,32], index: 12, kind: output, shape index: {}]
  %s13 = sld [smem:[#allocation0]]
  $region109: #{tpu_custom_call.1} parent=0
    _
  %s15 = ssub.s32 1, %s13
  %s16 = scalar_select 0, %s15, %s13
  $region1: #{tpu_custom_call.1} parent=0
    #allocation2 [shape = 'u8[4096]{0}', space=vmem, size = 0x1000, scoped, tag = 'input window, operand 0']
    #allocation3 [shape = 's32[2]{0}', space=sflag, size = 0x8, scoped, tag = 'scoped memory for tpu_custom_call.1']
    #allocation4 [shape = 's32[2]{0}', space=sflag, size = 0x8, scoped, tag = 'scoped memory for tpu_custom_call.1']
    #allocation5 [shape = 'u8[4096]{0}', space=vmem, size = 0x1000, scoped, tag = 'input window, operand 1']
    #allocation6 [shape = 's32[2]{0}', space=sflag, size = 0x8, scoped, tag = 'scoped memory for tpu_custom_call.1']
    #allocation7 [shape = 'u8[4096]{0}', space=vmem, size = 0x1000, scoped, tag = 'input window, operand 2']
    #allocation8 [shape = 'u8[8192]{0}', space=vmem, size = 0x2000, scoped, tag = 'input window, operand 3, single buffered']
    #allocation9 [shape = 's32[1]{0}', space=sflag, size = 0x4, scoped, tag = 'scoped memory for tpu_custom_call.1']
    #allocation10 [shape = 'u8[8192]{0}', space=vmem, size = 0x2000, scoped, tag = 'input window, operand 4, single buffered']
    #allocation11 [shape = 'u8[512]{0}', space=vmem, size = 0x400, scoped, tag = 'input window, operand 8, single buffered']
    #allocation12 [shape = 's32[1]{0}', space=sflag, size = 0x4, scoped, tag = 'scoped memory for tpu_custom_call.1']
    #allocation13 [shape = 'u8[2048]{0}', space=vmem, size = 0x800, scoped, tag = 'input window, operand 9, single buffered']
    #allocation14 [shape = 'u8[8192]{0}', space=vmem, size = 0x2000, scoped, tag = 'output window, operand 0']
    %17 = vsyncpa [#allocation3], 0
    %s18 = scalar_lea.sflag [#allocation3], 1
    %19 = vsyncpa %s18, 0
    %20 = vsyncpa [#allocation6], 0
    %s21 = scalar_lea.sflag [#allocation6], 1
    %22 = vsyncpa %s21, 0
    %23 = vsyncpa [#allocation9], 0
    %24 = vsyncpa [#allocation12], 0
    %25 = vsyncpa [#allocation4], 0
    %s26 = scalar_lea.sflag [#allocation4], 1
    %27 = vsyncpa %s26, 0
    loop: start=0, step=1, limit=4
    $region2: #{tpu_custom_call.1} parent=1 // loop_pre_header
      _
    $region3: #{tpu_custom_call.1} parent=1 // loop_header
      %s29 = sphi 0, %s33
      %p30 = scmp.ge.s32.totalorder %s29, 4
      %s39 = sphi 0, %s41
      %s42 = sphi 0, %s39
      %s43 = sphi 0, %s42
      %s59 = sphi 0, %s43
      %s65 = sphi 0, %s67
      %s68 = sphi 0, %s65
      %s69 = sphi 0, %s68
      %s85 = sphi 0, %s69
      %s91 = sphi 0, %s93
      %s94 = sphi 0, %s91
      %s95 = sphi 0, %s94
      %s111 = sphi 0, %s95
      %s115 = sphi 0, %s115
      %s117 = sphi 0, %s115
      %s118 = sphi 0, %s117
      %s132 = sphi 0, %s118
      %s136 = sphi 0, %s136
      %s138 = sphi 0, %s136
      %s139 = sphi 0, %s138
      %s153 = sphi 0, %s139
      %s157 = sphi 0, %s157
      %s159 = sphi 0, %s157
      %s160 = sphi 0, %s159
      %s174 = sphi 0, %s160
      %s178 = sphi 0, %s178
      %s180 = sphi 0, %s178
      %s181 = sphi 0, %s180
      %s195 = sphi 0, %s181
      %s199 = sphi 0, %s199
      %s201 = sphi 0, %s199
      %s202 = sphi 0, %s201
      %s216 = sphi 0, %s202
      %s220 = sphi 0, %s220
      %s222 = sphi 0, %s220
      %s223 = sphi 0, %s222
      %s237 = sphi 0, %s223
      %s241 = sphi 0, %s241
      %s243 = sphi 0, %s241
      %s244 = sphi 0, %s243
      %s258 = sphi 0, %s244
      %s262 = sphi 0, %s262
      %s264 = sphi 0, %s262
      %s265 = sphi 0, %s264
      %s279 = sphi 0, %s265
      %s283 = sphi 0, %s283
      %s285 = sphi 0, %s283
      %s286 = sphi 0, %s285
      %s300 = sphi 0, %s286
      %s306 = sphi 0, %s308
      %s309 = sphi 0, %s306
      %s310 = sphi 0, %s309
      %s326 = sphi 0, %s310
    $region4: #{tpu_custom_call.1} parent=1 // loop_header_branch
      %32 = sbr.rel (%p30) target = $region8
    $region5: #{tpu_custom_call.1} parent=1 // loop_body
      %s34 = ssub.s32 %s29, 1
      %s35 = ssub.s32 %s29, 2
      %s36 = sadd.s32 %s29, 1
      %s37 = ssub.s32 %s29, %s36
      %p38 = scmp.eq.s32.totalorder %s37, 0
      %s40 = sadd.s32 %s39, 1
      %s41 = scalar_select %p38, %s39, %s40
      %p44 = pneg %p38
      %p45 = scmp.eq.s32.totalorder %s29, 1
      %p46 = por %p44, %p45
      %p47 = scmp.ne.s32.totalorder %s39, %s42
      %p48 = scmp.eq.s32.totalorder %s29, 0
      %p49 = por %p47, %p48
      %p50 = scmp.ne.s32.totalorder %s39, %s42
      %p51 = scmp.eq.s32.totalorder %s34, 1
      %p52 = por %p50, %p51
      %p53 = scmp.ne.s32.totalorder %s42, %s43
      %p54 = scmp.eq.s32.totalorder %s34, 0
      %p55 = por %p53, %p54
      %p56 = scmp.ne.s32.totalorder %s42, %s43
      %p57 = scmp.eq.s32.totalorder %s35, 1
      %p58 = por %p56, %p57
      %p60 = scmp.ne.s32.totalorder %s43, %s59
      %p61 = scmp.eq.s32.totalorder %s35, 0
      %p62 = por %p60, %p61
      %s63 = ssub.s32 %s29, %s36
      %p64 = scmp.eq.s32.totalorder %s63, 0
      %s66 = sadd.s32 %s65, 1
      %s67 = scalar_select %p64, %s65, %s66
      %p70 = pneg %p64
      %p71 = scmp.eq.s32.totalorder %s29, 1
      %p72 = por %p70, %p71
      %p73 = scmp.ne.s32.totalorder %s65, %s68
      %p74 = scmp.eq.s32.totalorder %s29, 0
      %p75 = por %p73, %p74
      %p76 = scmp.ne.s32.totalorder %s65, %s68
      %p77 = scmp.eq.s32.totalorder %s34, 1
      %p78 = por %p76, %p77
      %p79 = scmp.ne.s32.totalorder %s68, %s69
      %p80 = scmp.eq.s32.totalorder %s34, 0
      %p81 = por %p79, %p80
      %p82 = scmp.ne.s32.totalorder %s68, %s69
      %p83 = scmp.eq.s32.totalorder %s35, 1
      %p84 = por %p82, %p83
      %p86 = scmp.ne.s32.totalorder %s69, %s85
      %p87 = scmp.eq.s32.totalorder %s35, 0
      %p88 = por %p86, %p87
      %s89 = ssub.s32 %s29, %s36
      %p90 = scmp.eq.s32.totalorder %s89, 0
      %s92 = sadd.s32 %s91, 1
      %s93 = scalar_select %p90, %s91, %s92
      %p96 = pneg %p90
      %p97 = scmp.eq.s32.totalorder %s29, 1
      %p98 = por %p96, %p97
      %p99 = scmp.ne.s32.totalorder %s91, %s94
      %p100 = scmp.eq.s32.totalorder %s29, 0
      %p101 = por %p99, %p100
      %p102 = scmp.ne.s32.totalorder %s91, %s94
      %p103 = scmp.eq.s32.totalorder %s34, 1
      %p104 = por %p102, %p103
      %p105 = scmp.ne.s32.totalorder %s94, %s95
      %p106 = scmp.eq.s32.totalorder %s34, 0
      %p107 = por %p105, %p106
      %p108 = scmp.ne.s32.totalorder %s94, %s95
      %p109 = scmp.eq.s32.totalorder %s35, 1
      %p110 = por %p108, %p109
      %p112 = scmp.ne.s32.totalorder %s95, %s111
      %p113 = scmp.eq.s32.totalorder %s35, 0
      %p114 = por %p112, %p113
      %s116 = sadd.s32 %s115, 1
      %p119 = scmp.eq.s32.totalorder %s29, 1
      %p120 = scmp.ne.s32.totalorder %s115, %s117
      %p121 = scmp.eq.s32.totalorder %s29, 0
      %p122 = por %p120, %p121
      %p123 = scmp.ne.s32.totalorder %s115, %s117
      %p124 = scmp.eq.s32.totalorder %s34, 1
      %p125 = por %p123, %p124
      %p126 = scmp.ne.s32.totalorder %s117, %s118
      %p127 = scmp.eq.s32.totalorder %s34, 0
      %p128 = por %p126, %p127
      %p129 = scmp.ne.s32.totalorder %s117, %s118
      %p130 = scmp.eq.s32.totalorder %s35, 1
      %p131 = por %p129, %p130
      %p133 = scmp.ne.s32.totalorder %s118, %s132
      %p134 = scmp.eq.s32.totalorder %s35, 0
      %p135 = por %p133, %p134
      %s137 = sadd.s32 %s136, 1
      %p140 = scmp.eq.s32.totalorder %s29, 1
      %p141 = scmp.ne.s32.totalorder %s136, %s138
      %p142 = scmp.eq.s32.totalorder %s29, 0
      %p143 = por %p141, %p142
      %p144 = scmp.ne.s32.totalorder %s136, %s138
      %p145 = scmp.eq.s32.totalorder %s34, 1
      %p146 = por %p144, %p145
      %p147 = scmp.ne.s32.totalorder %s138, %s139
      %p148 = scmp.eq.s32.totalorder %s34, 0
      %p149 = por %p147, %p148
      %p150 = scmp.ne.s32.totalorder %s138, %s139
      %p151 = scmp.eq.s32.totalorder %s35, 1
      %p152 = por %p150, %p151
      %p154 = scmp.ne.s32.totalorder %s139, %s153
      %p155 = scmp.eq.s32.totalorder %s35, 0
      %p156 = por %p154, %p155
      %s158 = sadd.s32 %s157, 1
      %p161 = scmp.eq.s32.totalorder %s29, 1
      %p162 = scmp.ne.s32.totalorder %s157, %s159
      %p163 = scmp.eq.s32.totalorder %s29, 0
      %p164 = por %p162, %p163
      %p165 = scmp.ne.s32.totalorder %s157, %s159
      %p166 = scmp.eq.s32.totalorder %s34, 1
      %p167 = por %p165, %p166
      %p168 = scmp.ne.s32.totalorder %s159, %s160
      %p169 = scmp.eq.s32.totalorder %s34, 0
      %p170 = por %p168, %p169
      %p171 = scmp.ne.s32.totalorder %s159, %s160
      %p172 = scmp.eq.s32.totalorder %s35, 1
      %p173 = por %p171, %p172
      %p175 = scmp.ne.s32.totalorder %s160, %s174
      %p176 = scmp.eq.s32.totalorder %s35, 0
      %p177 = por %p175, %p176
      %s179 = sadd.s32 %s178, 1
      %p182 = scmp.eq.s32.totalorder %s29, 1
      %p183 = scmp.ne.s32.totalorder %s178, %s180
      %p184 = scmp.eq.s32.totalorder %s29, 0
      %p185 = por %p183, %p184
      %p186 = scmp.ne.s32.totalorder %s178, %s180
      %p187 = scmp.eq.s32.totalorder %s34, 1
      %p188 = por %p186, %p187
      %p189 = scmp.ne.s32.totalorder %s180, %s181
      %p190 = scmp.eq.s32.totalorder %s34, 0
      %p191 = por %p189, %p190
      %p192 = scmp.ne.s32.totalorder %s180, %s181
      %p193 = scmp.eq.s32.totalorder %s35, 1
      %p194 = por %p192, %p193
      %p196 = scmp.ne.s32.totalorder %s181, %s195
      %p197 = scmp.eq.s32.totalorder %s35, 0
      %p198 = por %p196, %p197
      %s200 = sadd.s32 %s199, 1
      %p203 = scmp.eq.s32.totalorder %s29, 1
      %p204 = scmp.ne.s32.totalorder %s199, %s201
      %p205 = scmp.eq.s32.totalorder %s29, 0
      %p206 = por %p204, %p205
      %p207 = scmp.ne.s32.totalorder %s199, %s201
      %p208 = scmp.eq.s32.totalorder %s34, 1
      %p209 = por %p207, %p208
      %p210 = scmp.ne.s32.totalorder %s201, %s202
      %p211 = scmp.eq.s32.totalorder %s34, 0
      %p212 = por %p210, %p211
      %p213 = scmp.ne.s32.totalorder %s201, %s202
      %p214 = scmp.eq.s32.totalorder %s35, 1
      %p215 = por %p213, %p214
      %p217 = scmp.ne.s32.totalorder %s202, %s216
      %p218 = scmp.eq.s32.totalorder %s35, 0
      %p219 = por %p217, %p218
      %s221 = sadd.s32 %s220, 1
      %p224 = scmp.eq.s32.totalorder %s29, 1
      %p225 = scmp.ne.s32.totalorder %s220, %s222
      %p226 = scmp.eq.s32.totalorder %s29, 0
      %p227 = por %p225, %p226
      %p228 = scmp.ne.s32.totalorder %s220, %s222
      %p229 = scmp.eq.s32.totalorder %s34, 1
      %p230 = por %p228, %p229
      %p231 = scmp.ne.s32.totalorder %s222, %s223
      %p232 = scmp.eq.s32.totalorder %s34, 0
      %p233 = por %p231, %p232
      %p234 = scmp.ne.s32.totalorder %s222, %s223
      %p235 = scmp.eq.s32.totalorder %s35, 1
      %p236 = por %p234, %p235
      %p238 = scmp.ne.s32.totalorder %s223, %s237
      %p239 = scmp.eq.s32.totalorder %s35, 0
      %p240 = por %p238, %p239
      %s242 = sadd.s32 %s241, 1
      %p245 = scmp.eq.s32.totalorder %s29, 1
      %p246 = scmp.ne.s32.totalorder %s241, %s243
      %p247 = scmp.eq.s32.totalorder %s29, 0
      %p248 = por %p246, %p247
      %p249 = scmp.ne.s32.totalorder %s241, %s243
      %p250 = scmp.eq.s32.totalorder %s34, 1
      %p251 = por %p249, %p250
      %p252 = scmp.ne.s32.totalorder %s243, %s244
      %p253 = scmp.eq.s32.totalorder %s34, 0
      %p254 = por %p252, %p253
      %p255 = scmp.ne.s32.totalorder %s243, %s244
      %p256 = scmp.eq.s32.totalorder %s35, 1
      %p257 = por %p255, %p256
      %p259 = scmp.ne.s32.totalorder %s244, %s258
      %p260 = scmp.eq.s32.totalorder %s35, 0
      %p261 = por %p259, %p260
      %s263 = sadd.s32 %s262, 1
      %p266 = scmp.eq.s32.totalorder %s29, 1
      %p267 = scmp.ne.s32.totalorder %s262, %s264
      %p268 = scmp.eq.s32.totalorder %s29, 0
      %p269 = por %p267, %p268
      %p270 = scmp.ne.s32.totalorder %s262, %s264
      %p271 = scmp.eq.s32.totalorder %s34, 1
      %p272 = por %p270, %p271
      %p273 = scmp.ne.s32.totalorder %s264, %s265
      %p274 = scmp.eq.s32.totalorder %s34, 0
      %p275 = por %p273, %p274
      %p276 = scmp.ne.s32.totalorder %s264, %s265
      %p277 = scmp.eq.s32.totalorder %s35, 1
      %p278 = por %p276, %p277
      %p280 = scmp.ne.s32.totalorder %s265, %s279
      %p281 = scmp.eq.s32.totalorder %s35, 0
      %p282 = por %p280, %p281
      %s284 = sadd.s32 %s283, 1
      %p287 = scmp.eq.s32.totalorder %s29, 1
      %p288 = scmp.ne.s32.totalorder %s283, %s285
      %p289 = scmp.eq.s32.totalorder %s29, 0
      %p290 = por %p288, %p289
      %p291 = scmp.ne.s32.totalorder %s283, %s285
      %p292 = scmp.eq.s32.totalorder %s34, 1
      %p293 = por %p291, %p292
      %p294 = scmp.ne.s32.totalorder %s285, %s286
      %p295 = scmp.eq.s32.totalorder %s34, 0
      %p296 = por %p294, %p295
      %p297 = scmp.ne.s32.totalorder %s285, %s286
      %p298 = scmp.eq.s32.totalorder %s35, 1
      %p299 = por %p297, %p298
      %p301 = scmp.ne.s32.totalorder %s286, %s300
      %p302 = scmp.eq.s32.totalorder %s35, 0
      %p303 = por %p301, %p302
      %s304 = ssub.s32 %s29, %s36
      %p305 = scmp.eq.s32.totalorder %s304, 0
      %s307 = sadd.s32 %s306, 1
      %s308 = scalar_select %p305, %s306, %s307
      %p311 = pneg %p305
      %p312 = scmp.eq.s32.totalorder %s29, 1
      %p313 = por %p311, %p312
      %p314 = scmp.ne.s32.totalorder %s306, %s309
      %p315 = scmp.eq.s32.totalorder %s29, 0
      %p316 = por %p314, %p315
      %p317 = scmp.ne.s32.totalorder %s306, %s309
      %p318 = scmp.eq.s32.totalorder %s34, 1
      %p319 = por %p317, %p318
      %p320 = scmp.ne.s32.totalorder %s309, %s310
      %p321 = scmp.eq.s32.totalorder %s34, 0
      %p322 = por %p320, %p321
      %p323 = scmp.ne.s32.totalorder %s309, %s310
      %p324 = scmp.eq.s32.totalorder %s35, 1
      %p325 = por %p323, %p324
      %p327 = scmp.ne.s32.totalorder %s310, %s326
      %p328 = scmp.eq.s32.totalorder %s35, 0
      %p329 = por %p327, %p328
      %p330 = scmp.le.s32.totalorder 1, %s29
      %p331 = scmp.lt.s32.totalorder %s29, 3
      %p332 = pnand %p330, %p331
      %p333 = pneg %p332
      // Predicated region
      $region9: #{tpu_custom_call.1} parent=5 // pred_check
        _
      $region10: #{tpu_custom_call.1} parent=5 // pred_check_branch
        %335 = sbr.rel (%p332) target = $region12
      $region11: #{tpu_custom_call.1} parent=5 // pred_region
        %s336 = ssub.s32 %s29, 1
        // Predicated region
        $region13: #{tpu_custom_call.1} parent=11 // pred_check
          %p337 = pneg %p128
        $region14: #{tpu_custom_call.1} parent=11 // pred_check_branch
          %339 = sbr.rel (%p337) target = $region16
        $region15: #{tpu_custom_call.1} parent=11 // pred_region
          %s341 = ssub.s32 256, 256
          %342 = vsyncadd [#allocation9], %s341
          %s343 = sshll.u32 [#allocation8], 4
          %s344 = int_to_ptr.vmem [resolvable:$true] %s343
          %349 = dma.hbm_to_vmem [thread:$0]  %s3, 256, %s344, [#allocation9], 64, 64, 4
        $region16: #{tpu_custom_call.1} parent=11 // pred_fallthru
          _
        // Predicated region
        $region17: #{tpu_custom_call.1} parent=11 // pred_check
          %p350 = pneg %p149
        $region18: #{tpu_custom_call.1} parent=11 // pred_check_branch
          %352 = sbr.rel (%p350) target = $region20
        $region19: #{tpu_custom_call.1} parent=11 // pred_region
          %s354 = ssub.s32 256, 256
          %355 = vsyncadd [#allocation9], %s354
          %s356 = sshll.u32 [#allocation10], 4
          %s357 = int_to_ptr.vmem [resolvable:$true] %s356
          %362 = dma.hbm_to_vmem [thread:$0]  %s4, 256, %s357, [#allocation9], 64, 64, 4
        $region20: #{tpu_custom_call.1} parent=11 // pred_fallthru
          _
        // Predicated region
        $region21: #{tpu_custom_call.1} parent=11 // pred_check
          %p363 = pneg %p170
        $region22: #{tpu_custom_call.1} parent=11 // pred_check_branch
          %365 = sbr.rel (%p363) target = $region24
        $region23: #{tpu_custom_call.1} parent=11 // pred_region
          _
        $region24: #{tpu_custom_call.1} parent=11 // pred_fallthru
          _
        // Predicated region
        $region25: #{tpu_custom_call.1} parent=11 // pred_check
          %p366 = pneg %p191
        $region26: #{tpu_custom_call.1} parent=11 // pred_check_branch
          %368 = sbr.rel (%p366) target = $region28
        $region27: #{tpu_custom_call.1} parent=11 // pred_region
          _
        $region28: #{tpu_custom_call.1} parent=11 // pred_fallthru
          _
        // Predicated region
        $region29: #{tpu_custom_call.1} parent=11 // pred_check
          %p369 = pneg %p212
        $region30: #{tpu_custom_call.1} parent=11 // pred_check_branch
          %371 = sbr.rel (%p369) target = $region32
        $region31: #{tpu_custom_call.1} parent=11 // pred_region
          _
        $region32: #{tpu_custom_call.1} parent=11 // pred_fallthru
          _
        // Predicated region
        $region33: #{tpu_custom_call.1} parent=11 // pred_check
          %p372 = pneg %p233
        $region34: #{tpu_custom_call.1} parent=11 // pred_check_branch
          %374 = sbr.rel (%p372) target = $region36
        $region35: #{tpu_custom_call.1} parent=11 // pred_region
          %s376 = ssub.s32 16, 16
          %377 = vsyncadd [#allocation12], %s376
          %s379 = sshll.u32 [#allocation11], 4
          %s380 = int_to_ptr.vmem [resolvable:$true] %s379
          %382 = dma.hbm_to_vmem [thread:$0]  %s8, 16, %s380, [#allocation12]
        $region36: #{tpu_custom_call.1} parent=11 // pred_fallthru
          _
        // Predicated region
        $region37: #{tpu_custom_call.1} parent=11 // pred_check
          %p383 = pneg %p254
        $region38: #{tpu_custom_call.1} parent=11 // pred_check_branch
          %385 = sbr.rel (%p383) target = $region40
        $region39: #{tpu_custom_call.1} parent=11 // pred_region
          %s387 = ssub.s32 64, 64
          %388 = vsyncadd [#allocation12], %s387
          %s390 = sshll.u32 [#allocation13], 4
          %s391 = int_to_ptr.vmem [resolvable:$true] %s390
          %393 = dma.hbm_to_vmem [thread:$0]  %s9, 64, %s391, [#allocation12]
        $region40: #{tpu_custom_call.1} parent=11 // pred_fallthru
          _
        // Predicated region
        $region41: #{tpu_custom_call.1} parent=11 // pred_check
          %p394 = pneg %p275
        $region42: #{tpu_custom_call.1} parent=11 // pred_check_branch
          %396 = sbr.rel (%p394) target = $region44
        $region43: #{tpu_custom_call.1} parent=11 // pred_region
          _
        $region44: #{tpu_custom_call.1} parent=11 // pred_fallthru
          _
        // Predicated region
        $region45: #{tpu_custom_call.1} parent=11 // pred_check
          %p397 = pneg %p296
        $region46: #{tpu_custom_call.1} parent=11 // pred_check_branch
          %399 = sbr.rel (%p397) target = $region48
        $region47: #{tpu_custom_call.1} parent=11 // pred_region
          _
        $region48: #{tpu_custom_call.1} parent=11 // pred_fallthru
          _
      $region12: #{tpu_custom_call.1} parent=5 // pred_fallthru
        _
      %p400 = scmp.lt.s32.totalorder %s29, 2
      // Predicated region
      $region49: #{tpu_custom_call.1} parent=5 // pred_check
        %p401 = pneg %p400
      $region50: #{tpu_custom_call.1} parent=5 // pred_check_branch
        %403 = sbr.rel (%p401) target = $region52
      $region51: #{tpu_custom_call.1} parent=5 // pred_region
        // Predicated region
        $region53: #{tpu_custom_call.1} parent=51 // pred_check
          %p404 = pneg %p49
        $region54: #{tpu_custom_call.1} parent=51 // pred_check_branch
          %406 = sbr.rel (%p404) target = $region56
        $region55: #{tpu_custom_call.1} parent=51 // pred_region
          %s407 = sand.u32 %s39, 1
          %s408 = scalar_lea.sflag [#allocation3], %s407
          %s409 = sand.u32 %s39, 1
          %s410 = smul.addr %s409, 4
          %s411 = scalar_lea.vmem [#allocation2], %s410
          %s413 = ssub.s32 64, 64
          %414 = vsyncadd %s408, %s413
          %s415 = smul.addr %s29, 64
          %s416 = scalar_lea.hbm %s0, %s415
          %s418 = sshll.u32 %s411, 4
          %s419 = int_to_ptr.vmem [resolvable:$true] %s418
          %421 = dma.hbm_to_vmem [thread:$0]  %s416, 64, %s419, %s408
        $region56: #{tpu_custom_call.1} parent=51 // pred_fallthru
          _
        // Predicated region
        $region57: #{tpu_custom_call.1} parent=51 // pred_check
          %p422 = pneg %p75
        $region58: #{tpu_custom_call.1} parent=51 // pred_check_branch
          %424 = sbr.rel (%p422) target = $region60
        $region59: #{tpu_custom_call.1} parent=51 // pred_region
          %s425 = sand.u32 %s29, 1
          %s426 = scalar_lea.sflag [#allocation6], %s425
          %s427 = sand.u32 %s65, 1
          %s428 = smul.addr %s427, 4
          %s429 = scalar_lea.vmem [#allocation5], %s428
          %s431 = ssub.s32 64, 64
          %432 = vsyncadd %s426, %s431
          %s433 = smul.addr %s29, 64
          %s434 = scalar_lea.hbm %s1, %s433
          %s436 = sshll.u32 %s429, 4
          %s437 = int_to_ptr.vmem [resolvable:$true] %s436
          %439 = dma.hbm_to_vmem [thread:$0]  %s434, 64, %s437, %s426
        $region60: #{tpu_custom_call.1} parent=51 // pred_fallthru
          _
        // Predicated region
        $region61: #{tpu_custom_call.1} parent=51 // pred_check
          %p440 = pneg %p101
        $region62: #{tpu_custom_call.1} parent=51 // pred_check_branch
          %442 = sbr.rel (%p440) target = $region64
        $region63: #{tpu_custom_call.1} parent=51 // pred_region
          %s443 = sand.u32 %s29, 1
          %s444 = scalar_lea.sflag [#allocation6], %s443
          %s445 = sand.u32 %s91, 1
          %s446 = smul.addr %s445, 4
          %s447 = scalar_lea.vmem [#allocation7], %s446
          %s449 = ssub.s32 64, 64
          %450 = vsyncadd %s444, %s449
          %s451 = smul.addr %s29, 64
          %s452 = scalar_lea.hbm %s2, %s451
          %s454 = sshll.u32 %s447, 4
          %s455 = int_to_ptr.vmem [resolvable:$true] %s454
          %457 = dma.hbm_to_vmem [thread:$0]  %s452, 64, %s455, %s444
        $region64: #{tpu_custom_call.1} parent=51 // pred_fallthru
          _
      $region52: #{tpu_custom_call.1} parent=5 // pred_fallthru
        _
      %p458 = scmp.le.s32.totalorder 1, %s29
      %p459 = scmp.lt.s32.totalorder %s29, 3
      %p460 = pnand %p458, %p459
      %p461 = pneg %p460
      // Predicated region
      $region65: #{tpu_custom_call.1} parent=5 // pred_check
        _
      $region66: #{tpu_custom_call.1} parent=5 // pred_check_branch
        %463 = sbr.rel (%p460) target = $region68
      $region67: #{tpu_custom_call.1} parent=5 // pred_region
        %s464 = ssub.s32 %s29, 1
        %s465 = sand.u32 %s42, 1
        %s466 = scalar_lea.sflag [#allocation3], %s465
        %s467 = sand.u32 %s42, 1
        %s468 = smul.addr %s467, 4
        %s469 = scalar_lea.vmem [#allocation2], %s468
        // Predicated region
        $region69: #{tpu_custom_call.1} parent=67 // pred_check
          %p470 = pneg %p55
        $region70: #{tpu_custom_call.1} parent=67 // pred_check_branch
          %472 = sbr.rel (%p470) target = $region72
        $region71: #{tpu_custom_call.1} parent=67 // pred_region
          %473 = dma.done %s466, 64
        $region72: #{tpu_custom_call.1} parent=67 // pred_fallthru
          _
        %s474 = sand.u32 %s34, 1
        %s475 = scalar_lea.sflag [#allocation6], %s474
        %s476 = sand.u32 %s68, 1
        %s477 = smul.addr %s476, 4
        %s478 = scalar_lea.vmem [#allocation5], %s477
        // Predicated region
        $region73: #{tpu_custom_call.1} parent=67 // pred_check
          %p479 = pneg %p81
        $region74: #{tpu_custom_call.1} parent=67 // pred_check_branch
          %481 = sbr.rel (%p479) target = $region76
        $region75: #{tpu_custom_call.1} parent=67 // pred_region
          %482 = dma.done %s475, 64
        $region76: #{tpu_custom_call.1} parent=67 // pred_fallthru
          _
        %s483 = sand.u32 %s34, 1
        %s484 = scalar_lea.sflag [#allocation6], %s483
        %s485 = sand.u32 %s94, 1
        %s486 = smul.addr %s485, 4
        %s487 = scalar_lea.vmem [#allocation7], %s486
        // Predicated region
        $region77: #{tpu_custom_call.1} parent=67 // pred_check
          %p488 = pneg %p107
        $region78: #{tpu_custom_call.1} parent=67 // pred_check_branch
          %490 = sbr.rel (%p488) target = $region80
        $region79: #{tpu_custom_call.1} parent=67 // pred_region
          %491 = dma.done %s484, 64
        $region80: #{tpu_custom_call.1} parent=67 // pred_fallthru
          _
        // Predicated region
        $region81: #{tpu_custom_call.1} parent=67 // pred_check
          %p492 = pneg %p128
        $region82: #{tpu_custom_call.1} parent=67 // pred_check_branch
          %494 = sbr.rel (%p492) target = $region84
        $region83: #{tpu_custom_call.1} parent=67 // pred_region
          %495 = dma.done [#allocation9], 256
        $region84: #{tpu_custom_call.1} parent=67 // pred_fallthru
          _
        // Predicated region
        $region85: #{tpu_custom_call.1} parent=67 // pred_check
          %p496 = pneg %p149
        $region86: #{tpu_custom_call.1} parent=67 // pred_check_branch
          %498 = sbr.rel (%p496) target = $region88
        $region87: #{tpu_custom_call.1} parent=67 // pred_region
          %499 = dma.done [#allocation9], 256
        $region88: #{tpu_custom_call.1} parent=67 // pred_fallthru
          _
        // Predicated region
        $region89: #{tpu_custom_call.1} parent=67 // pred_check
          %p500 = pneg %p233
        $region90: #{tpu_custom_call.1} parent=67 // pred_check_branch
          %502 = sbr.rel (%p500) target = $region92
        $region91: #{tpu_custom_call.1} parent=67 // pred_region
          %503 = dma.done [#allocation12], 16
        $region92: #{tpu_custom_call.1} parent=67 // pred_fallthru
          _
        // Predicated region
        $region93: #{tpu_custom_call.1} parent=67 // pred_check
          %p504 = pneg %p254
        $region94: #{tpu_custom_call.1} parent=67 // pred_check_branch
          %506 = sbr.rel (%p504) target = $region96
        $region95: #{tpu_custom_call.1} parent=67 // pred_region
          %507 = dma.done [#allocation12], 64
        $region96: #{tpu_custom_call.1} parent=67 // pred_fallthru
          _
        %s508 = sand.u32 %s42, 1
        %s509 = scalar_lea.sflag [#allocation3], %s508
        %s510 = sand.u32 %s42, 1
        %s511 = smul.addr %s510, 4
        %s512 = scalar_lea.vmem [#allocation2], %s511
        %p513 = pneg %p55
        %p514 = pneg %p52
        %s515 = sand.u32 %s34, 1
        %s516 = scalar_lea.sflag [#allocation6], %s515
        %s517 = sand.u32 %s68, 1
        %s518 = smul.addr %s517, 4
        %s519 = scalar_lea.vmem [#allocation5], %s518
        %p520 = pneg %p81
        %p521 = pneg %p78
        %s522 = sand.u32 %s34, 1
        %s523 = scalar_lea.sflag [#allocation6], %s522
        %s524 = sand.u32 %s94, 1
        %s525 = smul.addr %s524, 4
        %s526 = scalar_lea.vmem [#allocation7], %s525
        %p527 = pneg %p107
        %p528 = pneg %p104
        %p529 = pneg %p128
        %p530 = pneg %p125
        %p531 = pneg %p149
        %p532 = pneg %p146
        %p533 = pneg %p170
        %p534 = pneg %p167
        %p535 = pneg %p191
        %p536 = pneg %p188
        %p537 = pneg %p212
        %p538 = pneg %p209
        %p539 = pneg %p233
        %p540 = pneg %p230
        %p541 = pneg %p254
        %p542 = pneg %p251
        %p543 = pneg %p275
        %p544 = pneg %p272
        %p545 = pneg %p296
        %p546 = pneg %p293
        %p547 = pneg %p322
        %p548 = pneg %p319
        %s549 = sand.u32 %s309, 1
        %s550 = scalar_lea.sflag [#allocation4], %s549
        %s551 = sand.u32 %s309, 1
        %s552 = smul.addr %s551, 8
        %s553 = scalar_lea.vmem [#allocation14], %s552
        %v555 = vld [vmem:[%s469] sm:$0xf]
        %v556 = vld [vmem:[%s478] sm:$0xf]
        %v557 = vld [vmem:[%s487] sm:$0xf]
        %v558 = vld [vmem:[#allocation8] sm:$0xf]
        %v559 = vld [vmem:[#allocation8 + $0x4] sm:$0xf]
        %v560 = vld [vmem:[#allocation8 + $0x8] sm:$0xf]
        %v561 = vld [vmem:[#allocation8 + $0xc] sm:$0xf]
        %v562 = vld [vmem:[%s6] sm:$0x1]
        %v564 = vlaneseq
        %v565 = vshrl.u32 %v564, 7
        %v566 = vsub.s32 0, %v565
        %v567 = vrot.slane %v562, %v566
        %v573 = vunpack.c.l.b16 %v558
        %v574 = vunpack.c.l.b16 %v559
        %v575 = vunpack.c.l.b16 %v560
        %v576 = vunpack.c.l.b16 %v561
        %v577 = vpack.c.b16 %v574, %v573
        %v578 = vpack.c.b16 %v576, %v575
        %vm581 = vcmask 261120
        %v583 = vsel %vm581, %v555, 0
        %585 = vmatprep.subr.bf16.mxu0 0
        %586 = vmatpush1.bf16.msra.mxu0 %v577
        %587 = vmatprep.subr.bf16.mxu0 0
        %588 = vmatpush1.bf16.msra.mxu0 %v578
        %589 = vmatprep.subr.bf16.mxu0 0
        %590 = vmatpush1.bf16.msra.mxu0 0
        %591 = vmatprep.subr.bf16.mxu0 0
        %592 = vmatpush1.bf16.msra.mxu0 0
        %593 = vmatprep.subr.bf16.mxu0 0
        %594 = vmatpush1.bf16.msra.mxu0 0
        %595 = vmatprep.subr.bf16.mxu0 0
        %596 = vmatpush1.bf16.msra.mxu0 0
        %597 = vmatprep.subr.bf16.mxu0 0
        %598 = vmatpush1.bf16.msra.mxu0 0
        %599 = vmatprep.subr.bf16.mxu0 0
        %600 = vmatpush1.bf16.msra.mxu0 0
        %601 = vmatprep.subr.bf16.mxu0 0
        %602 = vmatpush1.bf16.msra.mxu0 0
        %603 = vmatprep.subr.bf16.mxu0 0
        %604 = vmatpush1.bf16.msra.mxu0 0
        %605 = vmatprep.subr.bf16.mxu0 0
        %606 = vmatpush1.bf16.msra.mxu0 0
        %607 = vmatprep.subr.bf16.mxu0 0
        %608 = vmatpush1.bf16.msra.mxu0 0
        %609 = vmatprep.subr.bf16.mxu0 0
        %610 = vmatpush1.bf16.msra.mxu0 0
        %611 = vmatprep.subr.bf16.mxu0 0
        %612 = vmatpush1.bf16.msra.mxu0 0
        %613 = vmatprep.subr.bf16.mxu0 0
        %614 = vmatpush1.bf16.msra.mxu0 0
        %615 = vmatprep.subr.bf16.mxu0 0
        %616 = vmatpush1.bf16.msra.mxu0 0
        %617 = vmatprep.mubr.bf16.mxu0 0
        %618 = vmatmul.mubr.bf16.gmra.mrb[0].mxu0 %v583
        %v619 = vpop.f32.mrb[0].mxu0
        %v620 = vadd.f32 %v567, %v619
        %v621 = vpop.f32.mrb[0].mxu0
        %v622 = vpop.f32.mrb[0].mxu0
        %v623 = vpop.f32.mrb[0].mxu0
        %624 = vdwg.mxu0
        %v625 = vmul.f32 %v620, 0.35355338
        %v626 = vld [vmem:[#allocation10] sm:$0xf]
        %v627 = vld [vmem:[#allocation10 + $0x4] sm:$0xf]
        %v628 = vld [vmem:[#allocation10 + $0x8] sm:$0xf]
        %v629 = vld [vmem:[#allocation10 + $0xc] sm:$0xf]
        %v630 = vld [vmem:[%s7] sm:$0x1]
        %v632 = vlaneseq
        %v633 = vshrl.u32 %v632, 7
        %v634 = vsub.s32 0, %v633
        %v635 = vrot.slane %v630, %v634
        %v641 = vunpack.c.l.b16 %v626
        %v642 = vunpack.c.l.b16 %v627
        %v643 = vunpack.c.l.b16 %v628
        %v644 = vunpack.c.l.b16 %v629
        %v645 = vpack.c.b16 %v642, %v641
        %v646 = vpack.c.b16 %v644, %v643
        %v650 = vsel %vm581, %v556, 0
        %652 = vmatprep.subr.bf16.mxu0 0
        %653 = vmatpush1.bf16.msra.mxu0 %v645
        %654 = vmatprep.subr.bf16.mxu0 0
        %655 = vmatpush1.bf16.msra.mxu0 %v646
        %656 = vmatprep.subr.bf16.mxu0 0
        %657 = vmatpush1.bf16.msra.mxu0 0
        %658 = vmatprep.subr.bf16.mxu0 0
        %659 = vmatpush1.bf16.msra.mxu0 0
        %660 = vmatprep.subr.bf16.mxu0 0
        %661 = vmatpush1.bf16.msra.mxu0 0
        %662 = vmatprep.subr.bf16.mxu0 0
        %663 = vmatpush1.bf16.msra.mxu0 0
        %664 = vmatprep.subr.bf16.mxu0 0
        %665 = vmatpush1.bf16.msra.mxu0 0
        %666 = vmatprep.subr.bf16.mxu0 0
        %667 = vmatpush1.bf16.msra.mxu0 0
        %668 = vmatprep.subr.bf16.mxu0 0
        %669 = vmatpush1.bf16.msra.mxu0 0
        %670 = vmatprep.subr.bf16.mxu0 0
        %671 = vmatpush1.bf16.msra.mxu0 0
        %672 = vmatprep.subr.bf16.mxu0 0
        %673 = vmatpush1.bf16.msra.mxu0 0
        %674 = vmatprep.subr.bf16.mxu0 0
        %675 = vmatpush1.bf16.msra.mxu0 0
        %676 = vmatprep.subr.bf16.mxu0 0
        %677 = vmatpush1.bf16.msra.mxu0 0
        %678 = vmatprep.subr.bf16.mxu0 0
        %679 = vmatpush1.bf16.msra.mxu0 0
        %680 = vmatprep.subr.bf16.mxu0 0
        %681 = vmatpush1.bf16.msra.mxu0 0
        %682 = vmatprep.subr.bf16.mxu0 0
        %683 = vmatpush1.bf16.msra.mxu0 0
        %684 = vmatprep.mubr.bf16.mxu0 0
        %685 = vmatmul.mubr.bf16.gmra.mrb[0].mxu0 %v650
        %v686 = vpop.f32.mrb[0].mxu0
        %v687 = vadd.f32 %v635, %v686
        %v688 = vpop.f32.mrb[0].mxu0
        %v689 = vpop.f32.mrb[0].mxu0
        %v690 = vpop.f32.mrb[0].mxu0
        %691 = vdwg.mxu0
        %v692 = vld [vmem:[%s5] sm:$0xf]
        %v693 = vld [vmem:[%s5 + $0x4] sm:$0xf]
        %v694 = vld [vmem:[%s5 + $0x8] sm:$0xf]
        %v695 = vld [vmem:[%s5 + $0xc] sm:$0xf]
        %v696 = vld [vmem:[#allocation11] sm:$0x1]
        %v698 = vlaneseq
        %v699 = vshrl.u32 %v698, 7
        %v700 = vsub.s32 0, %v699
        %v701 = vrot.slane %v696, %v700
        %v707 = vunpack.c.l.b16 %v692
        %v708 = vunpack.c.l.b16 %v693
        %v709 = vunpack.c.l.b16 %v694
        %v710 = vunpack.c.l.b16 %v695
        %v711 = vpack.c.b16 %v708, %v707
        %v712 = vpack.c.b16 %v710, %v709
        %v716 = vsel %vm581, %v557, 0
        %718 = vmatprep.subr.bf16.mxu0 0
        %719 = vmatpush1.bf16.msra.mxu0 %v711
        %720 = vmatprep.subr.bf16.mxu0 0
        %721 = vmatpush1.bf16.msra.mxu0 %v712
        %722 = vmatprep.subr.bf16.mxu0 0
        %723 = vmatpush1.bf16.msra.mxu0 0
        %724 = vmatprep.subr.bf16.mxu0 0
        %725 = vmatpush1.bf16.msra.mxu0 0
        %726 = vmatprep.subr.bf16.mxu0 0
        %727 = vmatpush1.bf16.msra.mxu0 0
        %728 = vmatprep.subr.bf16.mxu0 0
        %729 = vmatpush1.bf16.msra.mxu0 0
        %730 = vmatprep.subr.bf16.mxu0 0
        %731 = vmatpush1.bf16.msra.mxu0 0
        %732 = vmatprep.subr.bf16.mxu0 0
        %733 = vmatpush1.bf16.msra.mxu0 0
        %734 = vmatprep.subr.bf16.mxu0 0
        %735 = vmatpush1.bf16.msra.mxu0 0
        %736 = vmatprep.subr.bf16.mxu0 0
        %737 = vmatpush1.bf16.msra.mxu0 0
        %738 = vmatprep.subr.bf16.mxu0 0
        %739 = vmatpush1.bf16.msra.mxu0 0
        %740 = vmatprep.subr.bf16.mxu0 0
        %741 = vmatpush1.bf16.msra.mxu0 0
        %742 = vmatprep.subr.bf16.mxu0 0
        %743 = vmatpush1.bf16.msra.mxu0 0
        %744 = vmatprep.subr.bf16.mxu0 0
        %745 = vmatpush1.bf16.msra.mxu0 0
        %746 = vmatprep.subr.bf16.mxu0 0
        %747 = vmatpush1.bf16.msra.mxu0 0
        %748 = vmatprep.subr.bf16.mxu0 0
        %749 = vmatpush1.bf16.msra.mxu0 0
        %750 = vmatprep.mubr.bf16.mxu0 0
        %751 = vmatmul.mubr.bf16.gmra.mrb[0].mxu0 %v716
        %v752 = vpop.f32.mrb[0].mxu0
        %v753 = vadd.f32 %v701, %v752
        %v754 = vpop.f32.mrb[0].mxu0
        %v755 = vpop.f32.mrb[0].mxu0
        %v756 = vpop.f32.mrb[0].mxu0
        %757 = vdwg.mxu0
        %759 = vrot.lane.b32.xlu0 %v625, 120
        %v760 = vpop.permute.xlu0 %759
        %762 = vrot.lane.b32.xlu0 %v625, 112
        %v763 = vpop.permute.xlu0 %762
        %765 = vrot.lane.b32.xlu0 %v625, 104
        %v766 = vpop.permute.xlu0 %765
        %v768 = vpack.c.bf16 %v760, %v625
        %v769 = vpack.c.bf16 %v766, %v763
        %v770 = vld [vmem:[#allocation13] sm:$0xf]
        %vm771 = vcmask 64512
        %v773 = vsel %vm771, %v768, 0
        %v776 = vsel %vm771, %v769, 0
        %v779 = vsel %vm771, %v770, 0
        %781 = vmatprep.subr.bf16.mxu0 0
        %782 = vmatpush1.bf16.xpose.msra.mxu0 %v779
        %783 = vmatprep.subr.bf16.mxu0 0
        %784 = vmatpush1.bf16.xpose.msra.mxu0 0
        %785 = vmatprep.subr.bf16.mxu0 0
        %786 = vmatpush1.bf16.xpose.msra.mxu0 0
        %787 = vmatprep.subr.bf16.mxu0 0
        %788 = vmatpush1.bf16.xpose.msra.mxu0 0
        %789 = vmatprep.subr.bf16.mxu0 0
        %790 = vmatpush1.bf16.xpose.msra.mxu0 0
        %791 = vmatprep.subr.bf16.mxu0 0
        %792 = vmatpush1.bf16.xpose.msra.mxu0 0
        %793 = vmatprep.subr.bf16.mxu0 0
        %794 = vmatpush1.bf16.xpose.msra.mxu0 0
        %795 = vmatprep.subr.bf16.mxu0 0
        %796 = vmatpush1.bf16.xpose.msra.mxu0 0
        %797 = vmatprep.subr.bf16.mxu0 0
        %798 = vmatpush1.bf16.xpose.msra.mxu0 0
        %799 = vmatprep.subr.bf16.mxu0 0
        %800 = vmatpush1.bf16.xpose.msra.mxu0 0
        %801 = vmatprep.subr.bf16.mxu0 0
        %802 = vmatpush1.bf16.xpose.msra.mxu0 0
        %803 = vmatprep.subr.bf16.mxu0 0
        %804 = vmatpush1.bf16.xpose.msra.mxu0 0
        %805 = vmatprep.subr.bf16.mxu0 0
        %806 = vmatpush1.bf16.xpose.msra.mxu0 0
        %807 = vmatprep.subr.bf16.mxu0 0
        %808 = vmatpush1.bf16.xpose.msra.mxu0 0
        %809 = vmatprep.subr.bf16.mxu0 0
        %810 = vmatpush1.bf16.xpose.msra.mxu0 0
        %811 = vmatprep.subr.bf16.mxu0 0
        %812 = vmatpush1.bf16.xpose.msra.mxu0 0
        %813 = vmatprep.mubr.bf16.mxu0 0
        %814 = vmatmul.mubr.bf16.gmra.mrb[0].mxu0 %v773
        %v815 = vpop.f32.mrb[0].mxu0
        %v816 = vadd.f32 0.0, %v815
        %v817 = vpop.f32.mrb[0].mxu0
        %v818 = vpop.f32.mrb[0].mxu0
        %v819 = vadd.f32 0.0, %v818
        %v820 = vpop.f32.mrb[0].mxu0
        %821 = vmatprep.mubr.bf16.mxu0 0
        %822 = vmatmul.mubr.bf16.gmra.mrb[0].mxu0 %v776
        %v823 = vpop.f32.mrb[0].mxu0
        %v824 = vadd.f32 0.0, %v823
        %v825 = vpop.f32.mrb[0].mxu0
        %v826 = vpop.f32.mrb[0].mxu0
        %v827 = vadd.f32 0.0, %v826
        %v828 = vpop.f32.mrb[0].mxu0
        %829 = vdwg.mxu0
        %v830 = vlaneseq
        %v831 = vshrl.u32 %v830, 7
        %v832 = vlaneseq
        %v833 = vand.u32 %v832, 127
        %834 = vset.pattern.permute.xlu0 0
        %835 = vperm.xlu0 %834, %v831
        %v836 = vpop.permute.xlu0 %835
        %vm837 = vcmp.le.s32.totalorder %v833, %v836
        %v838 = vsub.s32 7, %v831
        %vm839 = vcmask 1047616
        %840 = vrot.lane.b32.xlu0 %v816, 8
        %v841 = vpop.permute.xlu0 %840
        %v842 = vsel %vm839, %v841, %v816
        %843 = vrot.lane.b32.xlu0 %v819, 8
        %v844 = vpop.permute.xlu0 %843
        %v845 = vsel %vm839, %v844, %v819
        %846 = vrot.lane.b32.xlu0 %v824, 8
        %v847 = vpop.permute.xlu0 %846
        %v848 = vsel %vm839, %v847, %v824
        %849 = vrot.lane.b32.xlu0 %v827, 8
        %v850 = vpop.permute.xlu0 %849
        %v851 = vsel %vm839, %v850, %v827
        %852 = vrot.lane.b32.xlu0 %v842, 8
        %v853 = vpop.permute.xlu0 %852
        %854 = vrot.lane.b32.xlu0 %v845, 8
        %v855 = vpop.permute.xlu0 %854
        %856 = vrot.lane.b32.xlu0 %v848, 8
        %v857 = vpop.permute.xlu0 %856
        %858 = vrot.lane.b32.xlu0 %v851, 8
        %v859 = vpop.permute.xlu0 %858
        %v860 = vsel %vm839, %v853, %v816
        %v861 = vsel %vm839, %v855, %v819
        %v862 = vsel %vm839, %v857, %v824
        %v863 = vsel %vm839, %v859, %v827
        %v864 = vand.u32 %v838, 1
        %vm865 = vcmp.eq.s32.totalorder %v864, 1
        %v866 = vsel %vm865, 1, 0
        %867 = vset.pattern.permute.xlu0 0
        %868 = vperm.xlu0 %867, %v866
        %v869 = vpop.permute.xlu0 %868
        %vm870 = vcmp.eq.s32.totalorder %v869, 1
        %875 = vrot.lane.b32.xlu0 %v816, 1
        %v876 = vpop.permute.xlu0 %875
        %877 = vrot.lane.b32.xlu0 %v819, 1
        %v878 = vpop.permute.xlu0 %877
        %879 = vrot.lane.b32.xlu0 %v824, 1
        %v880 = vpop.permute.xlu0 %879
        %881 = vrot.lane.b32.xlu0 %v827, 1
        %v882 = vpop.permute.xlu0 %881
        %v887 = vsel %vm870, %v860, %v876
        %v888 = vsel %vm870, %v861, %v878
        %v889 = vsel %vm870, %v862, %v880
        %v890 = vsel %vm870, %v863, %v882
        %895 = vrot.lane.b32.xlu0 %v887, 127
        %v896 = vpop.permute.xlu0 %895
        %897 = vrot.lane.b32.xlu0 %v888, 127
        %v898 = vpop.permute.xlu0 %897
        %899 = vrot.lane.b32.xlu0 %v889, 127
        %v900 = vpop.permute.xlu0 %899
        %901 = vrot.lane.b32.xlu0 %v890, 127
        %v902 = vpop.permute.xlu0 %901
        %907 = vrot.lane.b32.xlu0 %v896, 8
        %v908 = vpop.permute.xlu0 %907
        %v909 = vsel %vm839, %v908, %v896
        %910 = vrot.lane.b32.xlu0 %v898, 8
        %v911 = vpop.permute.xlu0 %910
        %v912 = vsel %vm839, %v911, %v898
        %913 = vrot.lane.b32.xlu0 %v900, 8
        %v914 = vpop.permute.xlu0 %913
        %v915 = vsel %vm839, %v914, %v900
        %916 = vrot.lane.b32.xlu0 %v902, 8
        %v917 = vpop.permute.xlu0 %916
        %v918 = vsel %vm839, %v917, %v902
        %919 = vrot.lane.b32.xlu0 %v909, 8
        %v920 = vpop.permute.xlu0 %919
        %921 = vrot.lane.b32.xlu0 %v912, 8
        %v922 = vpop.permute.xlu0 %921
        %923 = vrot.lane.b32.xlu0 %v915, 8
        %v924 = vpop.permute.xlu0 %923
        %925 = vrot.lane.b32.xlu0 %v918, 8
        %v926 = vpop.permute.xlu0 %925
        %v927 = vsel %vm839, %v920, %v896
        %v928 = vsel %vm839, %v922, %v898
        %v929 = vsel %vm839, %v924, %v900
        %v930 = vsel %vm839, %v926, %v902
        %v931 = vshra.s32 %v838, 1
        %v932 = vand.u32 %v931, 1
        %vm933 = vcmp.eq.s32.totalorder %v932, 1
        %v934 = vsel %vm933, 1, 0
        %935 = vset.pattern.permute.xlu0 0
        %936 = vperm.xlu0 %935, %v934
        %v937 = vpop.permute.xlu0 %936
        %vm938 = vcmp.eq.s32.totalorder %v937, 1
        %939 = vrot.lane.b32.xlu0 %v887, 1
        %v940 = vpop.permute.xlu0 %939
        %941 = vrot.lane.b32.xlu0 %v888, 1
        %v942 = vpop.permute.xlu0 %941
        %943 = vrot.lane.b32.xlu0 %v889, 1
        %v944 = vpop.permute.xlu0 %943
        %945 = vrot.lane.b32.xlu0 %v890, 1
        %v946 = vpop.permute.xlu0 %945
        %v951 = vsel %vm938, %v927, %v940
        %v952 = vsel %vm938, %v928, %v942
        %v953 = vsel %vm938, %v929, %v944
        %v954 = vsel %vm938, %v930, %v946
        %959 = vrot.lane.b32.xlu0 %v951, 126
        %v960 = vpop.permute.xlu0 %959
        %961 = vrot.lane.b32.xlu0 %v952, 126
        %v962 = vpop.permute.xlu0 %961
        %963 = vrot.lane.b32.xlu0 %v953, 126
        %v964 = vpop.permute.xlu0 %963
        %965 = vrot.lane.b32.xlu0 %v954, 126
        %v966 = vpop.permute.xlu0 %965
        %971 = vrot.lane.b32.xlu0 %v960, 8
        %v972 = vpop.permute.xlu0 %971
        %v973 = vsel %vm839, %v972, %v960
        %974 = vrot.lane.b32.xlu0 %v962, 8
        %v975 = vpop.permute.xlu0 %974
        %v976 = vsel %vm839, %v975, %v962
        %977 = vrot.lane.b32.xlu0 %v964, 8
        %v978 = vpop.permute.xlu0 %977
        %v979 = vsel %vm839, %v978, %v964
        %980 = vrot.lane.b32.xlu0 %v966, 8
        %v981 = vpop.permute.xlu0 %980
        %v982 = vsel %vm839, %v981, %v966
        %983 = vrot.lane.b32.xlu0 %v973, 8
        %v984 = vpop.permute.xlu0 %983
        %985 = vrot.lane.b32.xlu0 %v976, 8
        %v986 = vpop.permute.xlu0 %985
        %987 = vrot.lane.b32.xlu0 %v979, 8
        %v988 = vpop.permute.xlu0 %987
        %989 = vrot.lane.b32.xlu0 %v982, 8
        %v990 = vpop.permute.xlu0 %989
        %v991 = vsel %vm839, %v984, %v960
        %v992 = vsel %vm839, %v986, %v962
        %v993 = vsel %vm839, %v988, %v964
        %v994 = vsel %vm839, %v990, %v966
        %v995 = vshra.s32 %v838, 2
        %v996 = vand.u32 %v995, 1
        %vm997 = vcmp.eq.s32.totalorder %v996, 1
        %v998 = vsel %vm997, 1, 0
        %999 = vset.pattern.permute.xlu0 0
        %1000 = vperm.xlu0 %999, %v998
        %v1001 = vpop.permute.xlu0 %1000
        %vm1002 = vcmp.eq.s32.totalorder %v1001, 1
        %1003 = vrot.lane.b32.xlu0 %v951, 2
        %v1004 = vpop.permute.xlu0 %1003
        %1005 = vrot.lane.b32.xlu0 %v952, 2
        %v1006 = vpop.permute.xlu0 %1005
        %1007 = vrot.lane.b32.xlu0 %v953, 2
        %v1008 = vpop.permute.xlu0 %1007
        %1009 = vrot.lane.b32.xlu0 %v954, 2
        %v1010 = vpop.permute.xlu0 %1009
        %v1015 = vsel %vm1002, %v991, %v1004
        %v1016 = vsel %vm1002, %v992, %v1006
        %v1017 = vsel %vm1002, %v993, %v1008
        %v1018 = vsel %vm1002, %v994, %v1010
        %1023 = vrot.lane.b32.xlu0 %v1015, 124
        %v1024 = vpop.permute.xlu0 %1023
        %1025 = vrot.lane.b32.xlu0 %v1016, 124
        %v1026 = vpop.permute.xlu0 %1025
        %1027 = vrot.lane.b32.xlu0 %v1017, 124
        %v1028 = vpop.permute.xlu0 %1027
        %1029 = vrot.lane.b32.xlu0 %v1018, 124
        %v1030 = vpop.permute.xlu0 %1029
        %v1035 = vsel %vm837, %v1024, 0.0
        %v1036 = vsel %vm837, %v1026, 0.0
        %v1037 = vsel %vm837, %v1028, 0.0
        %v1038 = vsel %vm837, %v1030, 0.0
        %v1039 = vpack.c.bf16 %v687, %v687
        %v1040 = vpack.c.bf16 %v753, %v753
        %v1042 = vsel %vm771, %v1039, 0
        %1044 = vmatprep.subr.bf16.mxu0 0
        %1045 = vmatpush1.bf16.xpose.msra.mxu0 %v1042
        %1046 = vmatprep.subr.bf16.mxu0 0
        %1047 = vmatpush1.bf16.xpose.msra.mxu0 0
        %1048 = vmatprep.subr.bf16.mxu0 0
        %1049 = vmatpush1.bf16.xpose.msra.mxu0 0
        %1050 = vmatprep.subr.bf16.mxu0 0
        %1051 = vmatpush1.bf16.xpose.msra.mxu0 0
        %1052 = vmatprep.subr.bf16.mxu0 0
        %1053 = vmatpush1.bf16.xpose.msra.mxu0 0
        %1054 = vmatprep.subr.bf16.mxu0 0
        %1055 = vmatpush1.bf16.xpose.msra.mxu0 0
        %1056 = vmatprep.subr.bf16.mxu0 0
        %1057 = vmatpush1.bf16.xpose.msra.mxu0 0
        %1058 = vmatprep.subr.bf16.mxu0 0
        %1059 = vmatpush1.bf16.xpose.msra.mxu0 0
        %1060 = vmatprep.subr.bf16.mxu0 0
        %1061 = vmatpush1.bf16.xpose.msra.mxu0 0
        %1062 = vmatprep.subr.bf16.mxu0 0
        %1063 = vmatpush1.bf16.xpose.msra.mxu0 0
        %1064 = vmatprep.subr.bf16.mxu0 0
        %1065 = vmatpush1.bf16.xpose.msra.mxu0 0
        %1066 = vmatprep.subr.bf16.mxu0 0
        %1067 = vmatpush1.bf16.xpose.msra.mxu0 0
        %1068 = vmatprep.subr.bf16.mxu0 0
        %1069 = vmatpush1.bf16.xpose.msra.mxu0 0
        %1070 = vmatprep.subr.bf16.mxu0 0
        %1071 = vmatpush1.bf16.xpose.msra.mxu0 0
        %1072 = vmatprep.subr.bf16.mxu0 0
        %1073 = vmatpush1.bf16.xpose.msra.mxu0 0
        %1074 = vmatprep.subr.bf16.mxu0 0
        %1075 = vmatpush1.bf16.xpose.msra.mxu0 0
        %1076 = vmatprep.mubr.bf16.mxu0 0
        %1077 = vmatmul.mubr.bf16.gmra.mrb[0].mxu0 %v773
        %v1078 = vpop.f32.mrb[0].mxu0
        %v1079 = vadd.f32 %v1035, %v1078
        %v1080 = vpop.f32.mrb[0].mxu0
        %v1081 = vpop.f32.mrb[0].mxu0
        %v1082 = vpop.f32.mrb[0].mxu0
        %1083 = vdwg.mxu0
        %v1084 = vsel %vm771, %v1079, -inf
        %1085 = vmax.xlane.f32.xlu0 %v1084
        %v1086 = vpop.xlane.xlu0 %1085
        %v1087 = vsub.f32 %v1079, %v1086
        %v1088 = vmul.f32 %v1087, 1.442695
        %v1089 = vpow.pop %v1088
        %v1090 = vsel %vm771, %v1089, 0.0
        %1091 = vadd.xlane.f32.xlu0 %v1090
        %v1092 = vpop.xlane.xlu0 %1091
        %v1093 = vrcp.pop %v1092
        %v1094 = vmul.f32 %v1089, %v1093
        %v1095 = vpack.c.bf16 %v1094, %v1094
        %v1097 = vsel %vm771, %v1095, 0
        %vm1099 = vcmask 1043456
        %v1101 = vsel %vm1099, %v1040, 0
        %1103 = vmatprep.subr.bf16.mxu0 0
        %1104 = vmatpush1.bf16.msra.mxu0 %v1101
        %1105 = vmatprep.subr.bf16.mxu0 0
        %1106 = vmatpush1.bf16.msra.mxu0 0
        %1107 = vmatprep.subr.bf16.mxu0 0
        %1108 = vmatpush1.bf16.msra.mxu0 0
        %1109 = vmatprep.subr.bf16.mxu0 0
        %1110 = vmatpush1.bf16.msra.mxu0 0
        %1111 = vmatprep.subr.bf16.mxu0 0
        %1112 = vmatpush1.bf16.msra.mxu0 0
        %1113 = vmatprep.subr.bf16.mxu0 0
        %1114 = vmatpush1.bf16.msra.mxu0 0
        %1115 = vmatprep.subr.bf16.mxu0 0
        %1116 = vmatpush1.bf16.msra.mxu0 0
        %1117 = vmatprep.subr.bf16.mxu0 0
        %1118 = vmatpush1.bf16.msra.mxu0 0
        %1119 = vmatprep.subr.bf16.mxu0 0
        %1120 = vmatpush1.bf16.msra.mxu0 0
        %1121 = vmatprep.subr.bf16.mxu0 0
        %1122 = vmatpush1.bf16.msra.mxu0 0
        %1123 = vmatprep.subr.bf16.mxu0 0
        %1124 = vmatpush1.bf16.msra.mxu0 0
        %1125 = vmatprep.subr.bf16.mxu0 0
        %1126 = vmatpush1.bf16.msra.mxu0 0
        %1127 = vmatprep.subr.bf16.mxu0 0
        %1128 = vmatpush1.bf16.msra.mxu0 0
        %1129 = vmatprep.subr.bf16.mxu0 0
        %1130 = vmatpush1.bf16.msra.mxu0 0
        %1131 = vmatprep.subr.bf16.mxu0 0
        %1132 = vmatpush1.bf16.msra.mxu0 0
        %1133 = vmatprep.subr.bf16.mxu0 0
        %1134 = vmatpush1.bf16.msra.mxu0 0
        %1135 = vmatprep.mubr.bf16.mxu0 0
        %1136 = vmatmul.mubr.bf16.gmra.mrb[0].mxu0 %v1097
        %v1137 = vpop.f32.mrb[0].mxu0
        %v1138 = vadd.f32 0.0, %v1137
        %v1139 = vpop.f32.mrb[0].mxu0
        %v1140 = vpop.f32.mrb[0].mxu0
        %v1141 = vpop.f32.mrb[0].mxu0
        %1142 = vdwg.mxu0
        %v1144 = vrot.slane %v768, 4
        %1146 = vrot.lane.b32.xlu0 %v1039, 120
        %v1147 = vpop.permute.xlu0 %1146
        %v1149 = vsel %vm771, %v1144, 0
        %v1152 = vsel %vm771, %v1147, 0
        %1154 = vmatprep.subr.bf16.mxu0 0
        %1155 = vmatpush1.bf16.xpose.msra.mxu0 %v1152
        %1156 = vmatprep.subr.bf16.mxu0 0
        %1157 = vmatpush1.bf16.xpose.msra.mxu0 0
        %1158 = vmatprep.subr.bf16.mxu0 0
        %1159 = vmatpush1.bf16.xpose.msra.mxu0 0
        %1160 = vmatprep.subr.bf16.mxu0 0
        %1161 = vmatpush1.bf16.xpose.msra.mxu0 0
        %1162 = vmatprep.subr.bf16.mxu0 0
        %1163 = vmatpush1.bf16.xpose.msra.mxu0 0
        %1164 = vmatprep.subr.bf16.mxu0 0
        %1165 = vmatpush1.bf16.xpose.msra.mxu0 0
        %1166 = vmatprep.subr.bf16.mxu0 0
        %1167 = vmatpush1.bf16.xpose.msra.mxu0 0
        %1168 = vmatprep.subr.bf16.mxu0 0
        %1169 = vmatpush1.bf16.xpose.msra.mxu0 0
        %1170 = vmatprep.subr.bf16.mxu0 0
        %1171 = vmatpush1.bf16.xpose.msra.mxu0 0
        %1172 = vmatprep.subr.bf16.mxu0 0
        %1173 = vmatpush1.bf16.xpose.msra.mxu0 0
        %1174 = vmatprep.subr.bf16.mxu0 0
        %1175 = vmatpush1.bf16.xpose.msra.mxu0 0
        %1176 = vmatprep.subr.bf16.mxu0 0
        %1177 = vmatpush1.bf16.xpose.msra.mxu0 0
        %1178 = vmatprep.subr.bf16.mxu0 0
        %1179 = vmatpush1.bf16.xpose.msra.mxu0 0
        %1180 = vmatprep.subr.bf16.mxu0 0
        %1181 = vmatpush1.bf16.xpose.msra.mxu0 0
        %1182 = vmatprep.subr.bf16.mxu0 0
        %1183 = vmatpush1.bf16.xpose.msra.mxu0 0
        %1184 = vmatprep.subr.bf16.mxu0 0
        %1185 = vmatpush1.bf16.xpose.msra.mxu0 0
        %1186 = vmatprep.mubr.bf16.mxu0 0
        %1187 = vmatmul.mubr.bf16.gmra.mrb[0].mxu0 %v1149
        %v1188 = vpop.f32.mrb[0].mxu0
        %v1189 = vadd.f32 %v1036, %v1188
        %v1190 = vpop.f32.mrb[0].mxu0
        %v1191 = vpop.f32.mrb[0].mxu0
        %v1192 = vpop.f32.mrb[0].mxu0
        %1193 = vdwg.mxu0
        %v1194 = vsel %vm771, %v1189, -inf
        %1195 = vmax.xlane.f32.xlu0 %v1194
        %v1196 = vpop.xlane.xlu0 %1195
        %v1197 = vsub.f32 %v1189, %v1196
        %v1198 = vmul.f32 %v1197, 1.442695
        %v1199 = vpow.pop %v1198
        %v1200 = vsel %vm771, %v1199, 0.0
        %1201 = vadd.xlane.f32.xlu0 %v1200
        %v1202 = vpop.xlane.xlu0 %1201
        %v1203 = vrcp.pop %v1202
        %v1204 = vmul.f32 %v1199, %v1203
        %v1205 = vpack.c.bf16 %v1204, %v1204
        %1207 = vrot.lane.b32.xlu0 %v1040, 120
        %v1208 = vpop.permute.xlu0 %1207
        %v1210 = vsel %vm771, %v1205, 0
        %v1213 = vsel %vm1099, %v1208, 0
        %1215 = vmatprep.subr.bf16.mxu0 0
        %1216 = vmatpush1.bf16.msra.mxu0 %v1213
        %1217 = vmatprep.subr.bf16.mxu0 0
        %1218 = vmatpush1.bf16.msra.mxu0 0
        %1219 = vmatprep.subr.bf16.mxu0 0
        %1220 = vmatpush1.bf16.msra.mxu0 0
        %1221 = vmatprep.subr.bf16.mxu0 0
        %1222 = vmatpush1.bf16.msra.mxu0 0
        %1223 = vmatprep.subr.bf16.mxu0 0
        %1224 = vmatpush1.bf16.msra.mxu0 0
        %1225 = vmatprep.subr.bf16.mxu0 0
        %1226 = vmatpush1.bf16.msra.mxu0 0
        %1227 = vmatprep.subr.bf16.mxu0 0
        %1228 = vmatpush1.bf16.msra.mxu0 0
        %1229 = vmatprep.subr.bf16.mxu0 0
        %1230 = vmatpush1.bf16.msra.mxu0 0
        %1231 = vmatprep.subr.bf16.mxu0 0
        %1232 = vmatpush1.bf16.msra.mxu0 0
        %1233 = vmatprep.subr.bf16.mxu0 0
        %1234 = vmatpush1.bf16.msra.mxu0 0
        %1235 = vmatprep.subr.bf16.mxu0 0
        %1236 = vmatpush1.bf16.msra.mxu0 0
        %1237 = vmatprep.subr.bf16.mxu0 0
        %1238 = vmatpush1.bf16.msra.mxu0 0
        %1239 = vmatprep.subr.bf16.mxu0 0
        %1240 = vmatpush1.bf16.msra.mxu0 0
        %1241 = vmatprep.subr.bf16.mxu0 0
        %1242 = vmatpush1.bf16.msra.mxu0 0
        %1243 = vmatprep.subr.bf16.mxu0 0
        %1244 = vmatpush1.bf16.msra.mxu0 0
        %1245 = vmatprep.subr.bf16.mxu0 0
        %1246 = vmatpush1.bf16.msra.mxu0 0
        %1247 = vmatprep.mubr.bf16.mxu0 0
        %1248 = vmatmul.mubr.bf16.gmra.mrb[0].mxu0 %v1210
        %v1249 = vpop.f32.mrb[0].mxu0
        %v1250 = vadd.f32 0.0, %v1249
        %v1251 = vpop.f32.mrb[0].mxu0
        %v1252 = vpop.f32.mrb[0].mxu0
        %v1253 = vpop.f32.mrb[0].mxu0
        %1254 = vdwg.mxu0
        %1255 = vrot.lane.b32.xlu0 %v1039, 112
        %v1256 = vpop.permute.xlu0 %1255
        %v1258 = vsel %vm771, %v1256, 0
        %1260 = vmatprep.subr.bf16.mxu0 0
        %1261 = vmatpush1.bf16.xpose.msra.mxu0 %v1258
        %1262 = vmatprep.subr.bf16.mxu0 0
        %1263 = vmatpush1.bf16.xpose.msra.mxu0 0
        %1264 = vmatprep.subr.bf16.mxu0 0
        %1265 = vmatpush1.bf16.xpose.msra.mxu0 0
        %1266 = vmatprep.subr.bf16.mxu0 0
        %1267 = vmatpush1.bf16.xpose.msra.mxu0 0
        %1268 = vmatprep.subr.bf16.mxu0 0
        %1269 = vmatpush1.bf16.xpose.msra.mxu0 0
        %1270 = vmatprep.subr.bf16.mxu0 0
        %1271 = vmatpush1.bf16.xpose.msra.mxu0 0
        %1272 = vmatprep.subr.bf16.mxu0 0
        %1273 = vmatpush1.bf16.xpose.msra.mxu0 0
        %1274 = vmatprep.subr.bf16.mxu0 0
        %1275 = vmatpush1.bf16.xpose.msra.mxu0 0
        %1276 = vmatprep.subr.bf16.mxu0 0
        %1277 = vmatpush1.bf16.xpose.msra.mxu0 0
        %1278 = vmatprep.subr.bf16.mxu0 0
        %1279 = vmatpush1.bf16.xpose.msra.mxu0 0
        %1280 = vmatprep.subr.bf16.mxu0 0
        %1281 = vmatpush1.bf16.xpose.msra.mxu0 0
        %1282 = vmatprep.subr.bf16.mxu0 0
        %1283 = vmatpush1.bf16.xpose.msra.mxu0 0
        %1284 = vmatprep.subr.bf16.mxu0 0
        %1285 = vmatpush1.bf16.xpose.msra.mxu0 0
        %1286 = vmatprep.subr.bf16.mxu0 0
        %1287 = vmatpush1.bf16.xpose.msra.mxu0 0
        %1288 = vmatprep.subr.bf16.mxu0 0
        %1289 = vmatpush1.bf16.xpose.msra.mxu0 0
        %1290 = vmatprep.subr.bf16.mxu0 0
        %1291 = vmatpush1.bf16.xpose.msra.mxu0 0
        %1292 = vmatprep.mubr.bf16.mxu0 0
        %1293 = vmatmul.mubr.bf16.gmra.mrb[0].mxu0 %v776
        %v1294 = vpop.f32.mrb[0].mxu0
        %v1295 = vadd.f32 %v1037, %v1294
        %v1296 = vpop.f32.mrb[0].mxu0
        %v1297 = vpop.f32.mrb[0].mxu0
        %v1298 = vpop.f32.mrb[0].mxu0
        %1299 = vdwg.mxu0
        %v1300 = vsel %vm771, %v1295, -inf
        %1301 = vmax.xlane.f32.xlu0 %v1300
        %v1302 = vpop.xlane.xlu0 %1301
        %v1303 = vsub.f32 %v1295, %v1302
        %v1304 = vmul.f32 %v1303, 1.442695
        %v1305 = vpow.pop %v1304
        %v1306 = vsel %vm771, %v1305, 0.0
        %1307 = vadd.xlane.f32.xlu0 %v1306
        %v1308 = vpop.xlane.xlu0 %1307
        %v1309 = vrcp.pop %v1308
        %v1310 = vmul.f32 %v1305, %v1309
        %v1311 = vpack.c.bf16 %v1310, %v1310
        %1312 = vrot.lane.b32.xlu0 %v1040, 112
        %v1313 = vpop.permute.xlu0 %1312
        %v1315 = vsel %vm771, %v1311, 0
        %v1318 = vsel %vm1099, %v1313, 0
        %1320 = vmatprep.subr.bf16.mxu0 0
        %1321 = vmatpush1.bf16.msra.mxu0 %v1318
        %1322 = vmatprep.subr.bf16.mxu0 0
        %1323 = vmatpush1.bf16.msra.mxu0 0
        %1324 = vmatprep.subr.bf16.mxu0 0
        %1325 = vmatpush1.bf16.msra.mxu0 0
        %1326 = vmatprep.subr.bf16.mxu0 0
        %1327 = vmatpush1.bf16.msra.mxu0 0
        %1328 = vmatprep.subr.bf16.mxu0 0
        %1329 = vmatpush1.bf16.msra.mxu0 0
        %1330 = vmatprep.subr.bf16.mxu0 0
        %1331 = vmatpush1.bf16.msra.mxu0 0
        %1332 = vmatprep.subr.bf16.mxu0 0
        %1333 = vmatpush1.bf16.msra.mxu0 0
        %1334 = vmatprep.subr.bf16.mxu0 0
        %1335 = vmatpush1.bf16.msra.mxu0 0
        %1336 = vmatprep.subr.bf16.mxu0 0
        %1337 = vmatpush1.bf16.msra.mxu0 0
        %1338 = vmatprep.subr.bf16.mxu0 0
        %1339 = vmatpush1.bf16.msra.mxu0 0
        %1340 = vmatprep.subr.bf16.mxu0 0
        %1341 = vmatpush1.bf16.msra.mxu0 0
        %1342 = vmatprep.subr.bf16.mxu0 0
        %1343 = vmatpush1.bf16.msra.mxu0 0
        %1344 = vmatprep.subr.bf16.mxu0 0
        %1345 = vmatpush1.bf16.msra.mxu0 0
        %1346 = vmatprep.subr.bf16.mxu0 0
        %1347 = vmatpush1.bf16.msra.mxu0 0
        %1348 = vmatprep.subr.bf16.mxu0 0
        %1349 = vmatpush1.bf16.msra.mxu0 0
        %1350 = vmatprep.subr.bf16.mxu0 0
        %1351 = vmatpush1.bf16.msra.mxu0 0
        %1352 = vmatprep.mubr.bf16.mxu0 0
        %1353 = vmatmul.mubr.bf16.gmra.mrb[0].mxu0 %v1315
        %v1354 = vpop.f32.mrb[0].mxu0
        %v1355 = vadd.f32 0.0, %v1354
        %v1356 = vpop.f32.mrb[0].mxu0
        %v1357 = vpop.f32.mrb[0].mxu0
        %v1358 = vpop.f32.mrb[0].mxu0
        %1359 = vdwg.mxu0
        %v1361 = vrot.slane %v769, 4
        %1362 = vrot.lane.b32.xlu0 %v1039, 104
        %v1363 = vpop.permute.xlu0 %1362
        %v1365 = vsel %vm771, %v1361, 0
        %v1368 = vsel %vm771, %v1363, 0
        %1370 = vmatprep.subr.bf16.mxu0 0
        %1371 = vmatpush1.bf16.xpose.msra.mxu0 %v1368
        %1372 = vmatprep.subr.bf16.mxu0 0
        %1373 = vmatpush1.bf16.xpose.msra.mxu0 0
        %1374 = vmatprep.subr.bf16.mxu0 0
        %1375 = vmatpush1.bf16.xpose.msra.mxu0 0
        %1376 = vmatprep.subr.bf16.mxu0 0
        %1377 = vmatpush1.bf16.xpose.msra.mxu0 0
        %1378 = vmatprep.subr.bf16.mxu0 0
        %1379 = vmatpush1.bf16.xpose.msra.mxu0 0
        %1380 = vmatprep.subr.bf16.mxu0 0
        %1381 = vmatpush1.bf16.xpose.msra.mxu0 0
        %1382 = vmatprep.subr.bf16.mxu0 0
        %1383 = vmatpush1.bf16.xpose.msra.mxu0 0
        %1384 = vmatprep.subr.bf16.mxu0 0
        %1385 = vmatpush1.bf16.xpose.msra.mxu0 0
        %1386 = vmatprep.subr.bf16.mxu0 0
        %1387 = vmatpush1.bf16.xpose.msra.mxu0 0
        %1388 = vmatprep.subr.bf16.mxu0 0
        %1389 = vmatpush1.bf16.xpose.msra.mxu0 0
        %1390 = vmatprep.subr.bf16.mxu0 0
        %1391 = vmatpush1.bf16.xpose.msra.mxu0 0
        %1392 = vmatprep.subr.bf16.mxu0 0
        %1393 = vmatpush1.bf16.xpose.msra.mxu0 0
        %1394 = vmatprep.subr.bf16.mxu0 0
        %1395 = vmatpush1.bf16.xpose.msra.mxu0 0
        %1396 = vmatprep.subr.bf16.mxu0 0
        %1397 = vmatpush1.bf16.xpose.msra.mxu0 0
        %1398 = vmatprep.subr.bf16.mxu0 0
        %1399 = vmatpush1.bf16.xpose.msra.mxu0 0
        %1400 = vmatprep.subr.bf16.mxu0 0
        %1401 = vmatpush1.bf16.xpose.msra.mxu0 0
        %1402 = vmatprep.mubr.bf16.mxu0 0
        %1403 = vmatmul.mubr.bf16.gmra.mrb[0].mxu0 %v1365
        %v1404 = vpop.f32.mrb[0].mxu0
        %v1405 = vadd.f32 %v1038, %v1404
        %v1406 = vpop.f32.mrb[0].mxu0
        %v1407 = vpop.f32.mrb[0].mxu0
        %v1408 = vpop.f32.mrb[0].mxu0
        %1409 = vdwg.mxu0
        %v1410 = vsel %vm771, %v1405, -inf
        %1411 = vmax.xlane.f32.xlu0 %v1410
        %v1412 = vpop.xlane.xlu0 %1411
        %v1413 = vsub.f32 %v1405, %v1412
        %v1414 = vmul.f32 %v1413, 1.442695
        %v1415 = vpow.pop %v1414
        %v1416 = vsel %vm771, %v1415, 0.0
        %1417 = vadd.xlane.f32.xlu0 %v1416
        %v1418 = vpop.xlane.xlu0 %1417
        %v1419 = vrcp.pop %v1418
        %v1420 = vmul.f32 %v1415, %v1419
        %v1421 = vpack.c.bf16 %v1420, %v1420
        %1422 = vrot.lane.b32.xlu0 %v1040, 104
        %v1423 = vpop.permute.xlu0 %1422
        %v1425 = vsel %vm771, %v1421, 0
        %v1428 = vsel %vm1099, %v1423, 0
        %1430 = vmatprep.subr.bf16.mxu0 0
        %1431 = vmatpush1.bf16.msra.mxu0 %v1428
        %1432 = vmatprep.subr.bf16.mxu0 0
        %1433 = vmatpush1.bf16.msra.mxu0 0
        %1434 = vmatprep.subr.bf16.mxu0 0
        %1435 = vmatpush1.bf16.msra.mxu0 0
        %1436 = vmatprep.subr.bf16.mxu0 0
        %1437 = vmatpush1.bf16.msra.mxu0 0
        %1438 = vmatprep.subr.bf16.mxu0 0
        %1439 = vmatpush1.bf16.msra.mxu0 0
        %1440 = vmatprep.subr.bf16.mxu0 0
        %1441 = vmatpush1.bf16.msra.mxu0 0
        %1442 = vmatprep.subr.bf16.mxu0 0
        %1443 = vmatpush1.bf16.msra.mxu0 0
        %1444 = vmatprep.subr.bf16.mxu0 0
        %1445 = vmatpush1.bf16.msra.mxu0 0
        %1446 = vmatprep.subr.bf16.mxu0 0
        %1447 = vmatpush1.bf16.msra.mxu0 0
        %1448 = vmatprep.subr.bf16.mxu0 0
        %1449 = vmatpush1.bf16.msra.mxu0 0
        %1450 = vmatprep.subr.bf16.mxu0 0
        %1451 = vmatpush1.bf16.msra.mxu0 0
        %1452 = vmatprep.subr.bf16.mxu0 0
        %1453 = vmatpush1.bf16.msra.mxu0 0
        %1454 = vmatprep.subr.bf16.mxu0 0
        %1455 = vmatpush1.bf16.msra.mxu0 0
        %1456 = vmatprep.subr.bf16.mxu0 0
        %1457 = vmatpush1.bf16.msra.mxu0 0
        %1458 = vmatprep.subr.bf16.mxu0 0
        %1459 = vmatpush1.bf16.msra.mxu0 0
        %1460 = vmatprep.subr.bf16.mxu0 0
        %1461 = vmatpush1.bf16.msra.mxu0 0
        %1462 = vmatprep.mubr.bf16.mxu0 0
        %1463 = vmatmul.mubr.bf16.gmra.mrb[0].mxu0 %v1425
        %v1464 = vpop.f32.mrb[0].mxu0
        %v1465 = vadd.f32 0.0, %v1464
        %v1466 = vpop.f32.mrb[0].mxu0
        %v1467 = vpop.f32.mrb[0].mxu0
        %v1468 = vpop.f32.mrb[0].mxu0
        %1469 = vdwg.mxu0
        %1471 = vrot.lane.b32.xlu0 %v1250, 8
        %v1472 = vpop.permute.xlu0 %1471
        %1475 = vrot.lane.b32.xlu0 %v1355, 16
        %v1476 = vpop.permute.xlu0 %1475
        %1479 = vrot.lane.b32.xlu0 %v1465, 24
        %v1480 = vpop.permute.xlu0 %1479
        %v1482 = vsel %vm771, %v1138, %v1472
        %vm1483 = vcmask 130048
        %v1484 = vsel %vm1483, %v1482, %v1476
        %vm1485 = vcmask 195584
        %v1486 = vsel %vm1485, %v1484, %v1480
        %v1487 = vpack.c.bf16 %v1486, %v1486
        %v1488 = vld [vmem:[%s10] sm:$0xf]
        %v1489 = vld [vmem:[%s10 + $0x4] sm:$0xf]
        %v1490 = vld [vmem:[%s10 + $0x8] sm:$0xf]
        %v1491 = vld [vmem:[%s10 + $0xc] sm:$0xf]
        %v1492 = vld [vmem:[%s11] sm:$0x1]
        %v1494 = vlaneseq
        %v1495 = vshrl.u32 %v1494, 7
        %v1496 = vsub.s32 0, %v1495
        %v1497 = vrot.slane %v1492, %v1496
        %v1503 = vunpack.c.l.b16 %v1488
        %v1504 = vunpack.c.l.b16 %v1489
        %v1505 = vunpack.c.l.b16 %v1490
        %v1506 = vunpack.c.l.b16 %v1491
        %v1507 = vpack.c.b16 %v1504, %v1503
        %v1508 = vpack.c.b16 %v1506, %v1505
        %v1512 = vsel %vm581, %v1487, 0
        %1514 = vmatprep.subr.bf16.mxu0 0
        %1515 = vmatpush1.bf16.msra.mxu0 %v1507
        %1516 = vmatprep.subr.bf16.mxu0 0
        %1517 = vmatpush1.bf16.msra.mxu0 %v1508
        %1518 = vmatprep.subr.bf16.mxu0 0
        %1519 = vmatpush1.bf16.msra.mxu0 0
        %1520 = vmatprep.subr.bf16.mxu0 0
        %1521 = vmatpush1.bf16.msra.mxu0 0
        %1522 = vmatprep.subr.bf16.mxu0 0
        %1523 = vmatpush1.bf16.msra.mxu0 0
        %1524 = vmatprep.subr.bf16.mxu0 0
        %1525 = vmatpush1.bf16.msra.mxu0 0
        %1526 = vmatprep.subr.bf16.mxu0 0
        %1527 = vmatpush1.bf16.msra.mxu0 0
        %1528 = vmatprep.subr.bf16.mxu0 0
        %1529 = vmatpush1.bf16.msra.mxu0 0
        %1530 = vmatprep.subr.bf16.mxu0 0
        %1531 = vmatpush1.bf16.msra.mxu0 0
        %1532 = vmatprep.subr.bf16.mxu0 0
        %1533 = vmatpush1.bf16.msra.mxu0 0
        %1534 = vmatprep.subr.bf16.mxu0 0
        %1535 = vmatpush1.bf16.msra.mxu0 0
        %1536 = vmatprep.subr.bf16.mxu0 0
        %1537 = vmatpush1.bf16.msra.mxu0 0
        %1538 = vmatprep.subr.bf16.mxu0 0
        %1539 = vmatpush1.bf16.msra.mxu0 0
        %1540 = vmatprep.subr.bf16.mxu0 0
        %1541 = vmatpush1.bf16.msra.mxu0 0
        %1542 = vmatprep.subr.bf16.mxu0 0
        %1543 = vmatpush1.bf16.msra.mxu0 0
        %1544 = vmatprep.subr.bf16.mxu0 0
        %1545 = vmatpush1.bf16.msra.mxu0 0
        %1546 = vmatprep.mubr.bf16.mxu0 0
        %1547 = vmatmul.mubr.bf16.gmra.mrb[0].mxu0 %v1512
        %v1548 = vpop.f32.mrb[0].mxu0
        %v1549 = vadd.f32 %v1497, %v1548
        %v1550 = vpop.f32.mrb[0].mxu0
        %v1551 = vpop.f32.mrb[0].mxu0
        %v1552 = vpop.f32.mrb[0].mxu0
        %1553 = vdwg.mxu0
        %1554 = vst.msk [vmem:[%s553] sm:$0xff] %vm581, %v1549
        %s1555 = sand.u32 %s309, 1
        %s1556 = scalar_lea.sflag [#allocation4], %s1555
        %s1557 = sand.u32 %s309, 1
        %s1558 = smul.addr %s1557, 8
        %s1559 = scalar_lea.vmem [#allocation14], %s1558
        // Predicated region
        $region97: #{tpu_custom_call.1} parent=67 // pred_check
          %p1560 = pneg %p319
        $region98: #{tpu_custom_call.1} parent=67 // pred_check_branch
          %1562 = sbr.rel (%p1560) target = $region100
        $region99: #{tpu_custom_call.1} parent=67 // pred_region
          %s1564 = ssub.s32 128, 128
          %1565 = vsyncadd %s1556, %s1564
          %s1566 = smul.addr %s34, 128
          %s1567 = scalar_lea.hbm %s12, %s1566
          %s1569 = sshll.u32 %s1559, 4
          %s1570 = int_to_ptr.vmem [resolvable:$true] %s1569
          %1572 = dma.vmem_to_hbm [thread:$0]  %s1570, 128, %s1567, %s1556
        $region100: #{tpu_custom_call.1} parent=67 // pred_fallthru
          _
      $region68: #{tpu_custom_call.1} parent=5 // pred_fallthru
        _
      %p1573 = scmp.le.s32.totalorder 2, %s29
      // Predicated region
      $region101: #{tpu_custom_call.1} parent=5 // pred_check
        %p1574 = pneg %p1573
      $region102: #{tpu_custom_call.1} parent=5 // pred_check_branch
        %1576 = sbr.rel (%p1574) target = $region104
      $region103: #{tpu_custom_call.1} parent=5 // pred_region
        %s1577 = ssub.s32 %s29, 2
        // Predicated region
        $region105: #{tpu_custom_call.1} parent=103 // pred_check
          %p1578 = pneg %p325
        $region106: #{tpu_custom_call.1} parent=103 // pred_check_branch
          %1580 = sbr.rel (%p1578) target = $region108
        $region107: #{tpu_custom_call.1} parent=103 // pred_region
          %s1581 = sand.u32 %s310, 1
          %s1582 = scalar_lea.sflag [#allocation4], %s1581
          %s1583 = sand.u32 %s310, 1
          %s1584 = smul.addr %s1583, 8
          %s1585 = scalar_lea.vmem [#allocation14], %s1584
          %1586 = dma.done %s1582, 128
        $region108: #{tpu_custom_call.1} parent=103 // pred_fallthru
          _
      $region104: #{tpu_custom_call.1} parent=5 // pred_fallthru
        _
    $region6: #{tpu_custom_call.1} parent=1 // loop_footer
      %s33 = sadd.s32 1, %s29
    $region7: #{tpu_custom_call.1} parent=1 // loop_footer_branch
      %28 = sbr.rel target = $region3
    $region8: #{tpu_custom_call.1} parent=1 // loop_exit
      _
    %1587 = vsyncpa [#allocation3], 1
    %s1588 = scalar_lea.sflag [#allocation3], 1
    %1589 = vsyncpa %s1588, 1
    %1590 = vsyncpa [#allocation6], 1
    %s1591 = scalar_lea.sflag [#allocation6], 1
    %1592 = vsyncpa %s1591, 1
    %1593 = vsyncpa [#allocation9], 1
    %1594 = vsyncpa [#allocation12], 1
    %1595 = vsyncpa [#allocation4], 1
    %s1596 = scalar_lea.sflag [#allocation4], 1
    %1597 = vsyncpa %s1596, 1

// kernel: tpu_custom_call.1
$region0: #{tpu_custom_call.1}
  #allocation0 [shape = 'u32[]', space=smem, size = 0x4, offset = 0x4, fixed_abs, tag = 'smem constant byte address 0x4 - core index']
  #allocation1 [shape = 'u32[144,128]{1,0:T(1,128)}', space=vmem, size = 0x12000, scoped, tag = 'internal scratch']
  %s0 = inlined_call_operand.hbm [shape: bf16[2,8,32], index: 0, kind: input, shape index: {}]
  %s1 = inlined_call_operand.hbm [shape: bf16[2,8,32], index: 1, kind: input, shape index: {}]
  %s2 = inlined_call_operand.hbm [shape: bf16[2,8,32], index: 2, kind: input, shape index: {}]
  %s3 = inlined_call_operand.hbm [shape: bf16[32,32], index: 3, kind: input, shape index: {}]
  %s4 = inlined_call_operand.hbm [shape: bf16[32,32], index: 4, kind: input, shape index: {}]
  %s5 = inlined_call_operand.vmem [shape: bf16[32,32], index: 5, kind: input, shape index: {}]
  %s6 = inlined_call_operand.vmem [shape: f32[1,32], index: 6, kind: input, shape index: {}]
  %s7 = inlined_call_operand.vmem [shape: f32[1,32], index: 7, kind: input, shape index: {}]
  %s8 = inlined_call_operand.hbm [shape: f32[1,32], index: 8, kind: input, shape index: {}]
  %s9 = inlined_call_operand.hbm [shape: bf16[8,8], index: 9, kind: input, shape index: {}]
  %s10 = inlined_call_operand.vmem [shape: bf16[32,32], index: 10, kind: input, shape index: {}]
  %s11 = inlined_call_operand.vmem [shape: f32[1,32], index: 11, kind: input, shape index: {}]
  %s12 = inlined_call_operand.hbm [shape: f32[2,8,32], index: 12, kind: output, shape index: {}]
  %s13 = sld [smem:[#allocation0]]
  $region109: #{tpu_custom_call.1} parent=0
    _
  %s15 = ssub.s32 1, %s13
  %s16 = scalar_select 0, %s15, %s13
  $region1: #{tpu_custom_call.1} parent=0
    #allocation2 [shape = 'u8[4096]{0}', space=vmem, size = 0x1000, scoped, tag = 'input window, operand 0']
    #allocation3 [shape = 's32[2]{0}', space=sflag, size = 0x8, scoped, tag = 'scoped memory for tpu_custom_call.1']
    #allocation4 [shape = 's32[2]{0}', space=sflag, size = 0x8, scoped, tag = 'scoped memory for tpu_custom_call.1']
    #allocation5 [shape = 'u8[4096]{0}', space=vmem, size = 0x1000, scoped, tag = 'input window, operand 1']
    #allocation6 [shape = 's32[2]{0}', space=sflag, size = 0x8, scoped, tag = 'scoped memory for tpu_custom_call.1']
    #allocation7 [shape = 'u8[4096]{0}', space=vmem, size = 0x1000, scoped, tag = 'input window, operand 2']
    #allocation8 [shape = 'u8[8192]{0}', space=vmem, size = 0x2000, scoped, tag = 'input window, operand 3, single buffered']
    #allocation9 [shape = 's32[1]{0}', space=sflag, size = 0x4, scoped, tag = 'scoped memory for tpu_custom_call.1']
    #allocation10 [shape = 'u8[8192]{0}', space=vmem, size = 0x2000, scoped, tag = 'input window, operand 4, single buffered']
    #allocation11 [shape = 'u8[512]{0}', space=vmem, size = 0x400, scoped, tag = 'input window, operand 8, single buffered']
    #allocation12 [shape = 's32[1]{0}', space=sflag, size = 0x4, scoped, tag = 'scoped memory for tpu_custom_call.1']
    #allocation13 [shape = 'u8[2048]{0}', space=vmem, size = 0x800, scoped, tag = 'input window, operand 9, single buffered']
    #allocation14 [shape = 'u8[8192]{0}', space=vmem, size = 0x2000, scoped, tag = 'output window, operand 0']
    %17 = vsyncpa [#allocation3], 0
    %s18 = scalar_lea.sflag [#allocation3], 1
    %19 = vsyncpa %s18, 0
    %20 = vsyncpa [#allocation6], 0
    %s21 = scalar_lea.sflag [#allocation6], 1
    %22 = vsyncpa %s21, 0
    %23 = vsyncpa [#allocation9], 0
    %24 = vsyncpa [#allocation12], 0
    %25 = vsyncpa [#allocation4], 0
    %s26 = scalar_lea.sflag [#allocation4], 1
    %27 = vsyncpa %s26, 0
    loop: start=0, step=1, limit=4
    $region2: #{tpu_custom_call.1} parent=1 // loop_pre_header
      _
    $region3: #{tpu_custom_call.1} parent=1 // loop_header
      %s29 = sphi 0, %s33
      %p30 = scmp.ge.s32.totalorder %s29, 4
      %s39 = sphi 0, %s41
      %s42 = sphi 0, %s39
      %s43 = sphi 0, %s42
      %s59 = sphi 0, %s43
      %s65 = sphi 0, %s67
      %s68 = sphi 0, %s65
      %s69 = sphi 0, %s68
      %s85 = sphi 0, %s69
      %s91 = sphi 0, %s93
      %s94 = sphi 0, %s91
      %s95 = sphi 0, %s94
      %s111 = sphi 0, %s95
      %s115 = sphi 0, %s115
      %s117 = sphi 0, %s115
      %s118 = sphi 0, %s117
      %s132 = sphi 0, %s118
      %s136 = sphi 0, %s136
      %s138 = sphi 0, %s136
      %s139 = sphi 0, %s138
      %s153 = sphi 0, %s139
      %s157 = sphi 0, %s157
      %s159 = sphi 0, %s157
      %s160 = sphi 0, %s159
      %s174 = sphi 0, %s160
      %s178 = sphi 0, %s178
      %s180 = sphi 0, %s178
      %s181 = sphi 0, %s180
      %s195 = sphi 0, %s181
      %s199 = sphi 0, %s199
      %s201 = sphi 0, %s199
      %s202 = sphi 0, %s201
      %s216 = sphi 0, %s202
      %s220 = sphi 0, %s220
      %s222 = sphi 0, %s220
      %s223 = sphi 0, %s222
      %s237 = sphi 0, %s223
      %s241 = sphi 0, %s241
      %s243 = sphi 0, %s241
      %s244 = sphi 0, %s243
      %s258 = sphi 0, %s244
      %s262 = sphi 0, %s262
      %s264 = sphi 0, %s262
      %s265 = sphi 0, %s264
      %s279 = sphi 0, %s265
      %s283 = sphi 0, %s283
      %s285 = sphi 0, %s283
      %s286 = sphi 0, %s285
      %s300 = sphi 0, %s286
      %s306 = sphi 0, %s308
      %s309 = sphi 0, %s306
      %s310 = sphi 0, %s309
      %s326 = sphi 0, %s310
    $region4: #{tpu_custom_call.1} parent=1 // loop_header_branch
      %32 = sbr.rel (%p30) target = $region8
    $region5: #{tpu_custom_call.1} parent=1 // loop_body
      %s34 = ssub.s32 %s29, 1
      %s35 = ssub.s32 %s29, 2
      %s36 = sadd.s32 %s29, 1
      %s37 = ssub.s32 %s29, %s36
      %p38 = scmp.eq.s32.totalorder %s37, 0
      %s40 = sadd.s32 %s39, 1
      %s41 = scalar_select %p38, %s39, %s40
      %p44 = pneg %p38
      %p45 = scmp.eq.s32.totalorder %s29, 1
      %p46 = por %p44, %p45
      %p47 = scmp.ne.s32.totalorder %s39, %s42
      %p48 = scmp.eq.s32.totalorder %s29, 0
      %p49 = por %p47, %p48
      %p50 = scmp.ne.s32.totalorder %s39, %s42
      %p51 = scmp.eq.s32.totalorder %s34, 1
      %p52 = por %p50, %p51
      %p53 = scmp.ne.s32.totalorder %s42, %s43
      %p54 = scmp.eq.s32.totalorder %s34, 0
      %p55 = por %p53, %p54
      %p56 = scmp.ne.s32.totalorder %s42, %s43
      %p57 = scmp.eq.s32.totalorder %s35, 1
      %p58 = por %p56, %p57
      %p60 = scmp.ne.s32.totalorder %s43, %s59
      %p61 = scmp.eq.s32.totalorder %s35, 0
      %p62 = por %p60, %p61
      %s63 = ssub.s32 %s29, %s36
      %p64 = scmp.eq.s32.totalorder %s63, 0
      %s66 = sadd.s32 %s65, 1
      %s67 = scalar_select %p64, %s65, %s66
      %p70 = pneg %p64
      %p71 = scmp.eq.s32.totalorder %s29, 1
      %p72 = por %p70, %p71
      %p73 = scmp.ne.s32.totalorder %s65, %s68
      %p74 = scmp.eq.s32.totalorder %s29, 0
      %p75 = por %p73, %p74
      %p76 = scmp.ne.s32.totalorder %s65, %s68
      %p77 = scmp.eq.s32.totalorder %s34, 1
      %p78 = por %p76, %p77
      %p79 = scmp.ne.s32.totalorder %s68, %s69
      %p80 = scmp.eq.s32.totalorder %s34, 0
      %p81 = por %p79, %p80
      %p82 = scmp.ne.s32.totalorder %s68, %s69
      %p83 = scmp.eq.s32.totalorder %s35, 1
      %p84 = por %p82, %p83
      %p86 = scmp.ne.s32.totalorder %s69, %s85
      %p87 = scmp.eq.s32.totalorder %s35, 0
      %p88 = por %p86, %p87
      %s89 = ssub.s32 %s29, %s36
      %p90 = scmp.eq.s32.totalorder %s89, 0
      %s92 = sadd.s32 %s91, 1
      %s93 = scalar_select %p90, %s91, %s92
      %p96 = pneg %p90
      %p97 = scmp.eq.s32.totalorder %s29, 1
      %p98 = por %p96, %p97
      %p99 = scmp.ne.s32.totalorder %s91, %s94
      %p100 = scmp.eq.s32.totalorder %s29, 0
      %p101 = por %p99, %p100
      %p102 = scmp.ne.s32.totalorder %s91, %s94
      %p103 = scmp.eq.s32.totalorder %s34, 1
      %p104 = por %p102, %p103
      %p105 = scmp.ne.s32.totalorder %s94, %s95
      %p106 = scmp.eq.s32.totalorder %s34, 0
      %p107 = por %p105, %p106
      %p108 = scmp.ne.s32.totalorder %s94, %s95
      %p109 = scmp.eq.s32.totalorder %s35, 1
      %p110 = por %p108, %p109
      %p112 = scmp.ne.s32.totalorder %s95, %s111
      %p113 = scmp.eq.s32.totalorder %s35, 0
      %p114 = por %p112, %p113
      %s116 = sadd.s32 %s115, 1
      %p119 = scmp.eq.s32.totalorder %s29, 1
      %p120 = scmp.ne.s32.totalorder %s115, %s117
      %p121 = scmp.eq.s32.totalorder %s29, 0
      %p122 = por %p120, %p121
      %p123 = scmp.ne.s32.totalorder %s115, %s117
      %p124 = scmp.eq.s32.totalorder %s34, 1
      %p125 = por %p123, %p124
      %p126 = scmp.ne.s32.totalorder %s117, %s118
      %p127 = scmp.eq.s32.totalorder %s34, 0
      %p128 = por %p126, %p127
      %p129 = scmp.ne.s32.totalorder %s117, %s118
      %p130 = scmp.eq.s32.totalorder %s35, 1
      %p131 = por %p129, %p130
      %p133 = scmp.ne.s32.totalorder %s118, %s132
      %p134 = scmp.eq.s32.totalorder %s35, 0
      %p135 = por %p133, %p134
      %s137 = sadd.s32 %s136, 1
      %p140 = scmp.eq.s32.totalorder %s29, 1
      %p141 = scmp.ne.s32.totalorder %s136, %s138
      %p142 = scmp.eq.s32.totalorder %s29, 0
      %p143 = por %p141, %p142
      %p144 = scmp.ne.s32.totalorder %s136, %s138
      %p145 = scmp.eq.s32.totalorder %s34, 1
      %p146 = por %p144, %p145
      %p147 = scmp.ne.s32.totalorder %s138, %s139
      %p148 = scmp.eq.s32.totalorder %s34, 0
      %p149 = por %p147, %p148
      %p150 = scmp.ne.s32.totalorder %s138, %s139
      %p151 = scmp.eq.s32.totalorder %s35, 1
      %p152 = por %p150, %p151
      %p154 = scmp.ne.s32.totalorder %s139, %s153
      %p155 = scmp.eq.s32.totalorder %s35, 0
      %p156 = por %p154, %p155
      %s158 = sadd.s32 %s157, 1
      %p161 = scmp.eq.s32.totalorder %s29, 1
      %p162 = scmp.ne.s32.totalorder %s157, %s159
      %p163 = scmp.eq.s32.totalorder %s29, 0
      %p164 = por %p162, %p163
      %p165 = scmp.ne.s32.totalorder %s157, %s159
      %p166 = scmp.eq.s32.totalorder %s34, 1
      %p167 = por %p165, %p166
      %p168 = scmp.ne.s32.totalorder %s159, %s160
      %p169 = scmp.eq.s32.totalorder %s34, 0
      %p170 = por %p168, %p169
      %p171 = scmp.ne.s32.totalorder %s159, %s160
      %p172 = scmp.eq.s32.totalorder %s35, 1
      %p173 = por %p171, %p172
      %p175 = scmp.ne.s32.totalorder %s160, %s174
      %p176 = scmp.eq.s32.totalorder %s35, 0
      %p177 = por %p175, %p176
      %s179 = sadd.s32 %s178, 1
      %p182 = scmp.eq.s32.totalorder %s29, 1
      %p183 = scmp.ne.s32.totalorder %s178, %s180
      %p184 = scmp.eq.s32.totalorder %s29, 0
      %p185 = por %p183, %p184
      %p186 = scmp.ne.s32.totalorder %s178, %s180
      %p187 = scmp.eq.s32.totalorder %s34, 1
      %p188 = por %p186, %p187
      %p189 = scmp.ne.s32.totalorder %s180, %s181
      %p190 = scmp.eq.s32.totalorder %s34, 0
      %p191 = por %p189, %p190
      %p192 = scmp.ne.s32.totalorder %s180, %s181
      %p193 = scmp.eq.s32.totalorder %s35, 1
      %p194 = por %p192, %p193
      %p196 = scmp.ne.s32.totalorder %s181, %s195
      %p197 = scmp.eq.s32.totalorder %s35, 0
      %p198 = por %p196, %p197
      %s200 = sadd.s32 %s199, 1
      %p203 = scmp.eq.s32.totalorder %s29, 1
      %p204 = scmp.ne.s32.totalorder %s199, %s201
      %p205 = scmp.eq.s32.totalorder %s29, 0
      %p206 = por %p204, %p205
      %p207 = scmp.ne.s32.totalorder %s199, %s201
      %p208 = scmp.eq.s32.totalorder %s34, 1
      %p209 = por %p207, %p208
      %p210 = scmp.ne.s32.totalorder %s201, %s202
      %p211 = scmp.eq.s32.totalorder %s34, 0
      %p212 = por %p210, %p211
      %p213 = scmp.ne.s32.totalorder %s201, %s202
      %p214 = scmp.eq.s32.totalorder %s35, 1
      %p215 = por %p213, %p214
      %p217 = scmp.ne.s32.totalorder %s202, %s216
      %p218 = scmp.eq.s32.totalorder %s35, 0
      %p219 = por %p217, %p218
      %s221 = sadd.s32 %s220, 1
      %p224 = scmp.eq.s32.totalorder %s29, 1
      %p225 = scmp.ne.s32.totalorder %s220, %s222
      %p226 = scmp.eq.s32.totalorder %s29, 0
      %p227 = por %p225, %p226
      %p228 = scmp.ne.s32.totalorder %s220, %s222
      %p229 = scmp.eq.s32.totalorder %s34, 1
      %p230 = por %p228, %p229
      %p231 = scmp.ne.s32.totalorder %s222, %s223
      %p232 = scmp.eq.s32.totalorder %s34, 0
      %p233 = por %p231, %p232
      %p234 = scmp.ne.s32.totalorder %s222, %s223
      %p235 = scmp.eq.s32.totalorder %s35, 1
      %p236 = por %p234, %p235
      %p238 = scmp.ne.s32.totalorder %s223, %s237
      %p239 = scmp.eq.s32.totalorder %s35, 0
      %p240 = por %p238, %p239
      %s242 = sadd.s32 %s241, 1
      %p245 = scmp.eq.s32.totalorder %s29, 1
      %p246 = scmp.ne.s32.totalorder %s241, %s243
      %p247 = scmp.eq.s32.totalorder %s29, 0
      %p248 = por %p246, %p247
      %p249 = scmp.ne.s32.totalorder %s241, %s243
      %p250 = scmp.eq.s32.totalorder %s34, 1
      %p251 = por %p249, %p250
      %p252 = scmp.ne.s32.totalorder %s243, %s244
      %p253 = scmp.eq.s32.totalorder %s34, 0
      %p254 = por %p252, %p253
      %p255 = scmp.ne.s32.totalorder %s243, %s244
      %p256 = scmp.eq.s32.totalorder %s35, 1
      %p257 = por %p255, %p256
      %p259 = scmp.ne.s32.totalorder %s244, %s258
      %p260 = scmp.eq.s32.totalorder %s35, 0
      %p261 = por %p259, %p260
      %s263 = sadd.s32 %s262, 1
      %p266 = scmp.eq.s32.totalorder %s29, 1
      %p267 = scmp.ne.s32.totalorder %s262, %s264
      %p268 = scmp.eq.s32.totalorder %s29, 0
      %p269 = por %p267, %p268
      %p270 = scmp.ne.s32.totalorder %s262, %s264
      %p271 = scmp.eq.s32.totalorder %s34, 1
      %p272 = por %p270, %p271
      %p273 = scmp.ne.s32.totalorder %s264, %s265
      %p274 = scmp.eq.s32.totalorder %s34, 0
      %p275 = por %p273, %p274
      %p276 = scmp.ne.s32.totalorder %s264, %s265
      %p277 = scmp.eq.s32.totalorder %s35, 1
      %p278 = por %p276, %p277
      %p280 = scmp.ne.s32.totalorder %s265, %s279
      %p281 = scmp.eq.s32.totalorder %s35, 0
      %p282 = por %p280, %p281
      %s284 = sadd.s32 %s283, 1
      %p287 = scmp.eq.s32.totalorder %s29, 1
      %p288 = scmp.ne.s32.totalorder %s283, %s285
      %p289 = scmp.eq.s32.totalorder %s29, 0
      %p290 = por %p288, %p289
      %p291 = scmp.ne.s32.totalorder %s283, %s285
      %p292 = scmp.eq.s32.totalorder %s34, 1
      %p293 = por %p291, %p292
      %p294 = scmp.ne.s32.totalorder %s285, %s286
      %p295 = scmp.eq.s32.totalorder %s34, 0
      %p296 = por %p294, %p295
      %p297 = scmp.ne.s32.totalorder %s285, %s286
      %p298 = scmp.eq.s32.totalorder %s35, 1
      %p299 = por %p297, %p298
      %p301 = scmp.ne.s32.totalorder %s286, %s300
      %p302 = scmp.eq.s32.totalorder %s35, 0
      %p303 = por %p301, %p302
      %s304 = ssub.s32 %s29, %s36
      %p305 = scmp.eq.s32.totalorder %s304, 0
      %s307 = sadd.s32 %s306, 1
      %s308 = scalar_select %p305, %s306, %s307
      %p311 = pneg %p305
      %p312 = scmp.eq.s32.totalorder %s29, 1
      %p313 = por %p311, %p312
      %p314 = scmp.ne.s32.totalorder %s306, %s309
      %p315 = scmp.eq.s32.totalorder %s29, 0
      %p316 = por %p314, %p315
      %p317 = scmp.ne.s32.totalorder %s306, %s309
      %p318 = scmp.eq.s32.totalorder %s34, 1
      %p319 = por %p317, %p318
      %p320 = scmp.ne.s32.totalorder %s309, %s310
      %p321 = scmp.eq.s32.totalorder %s34, 0
      %p322 = por %p320, %p321
      %p323 = scmp.ne.s32.totalorder %s309, %s310
      %p324 = scmp.eq.s32.totalorder %s35, 1
      %p325 = por %p323, %p324
      %p327 = scmp.ne.s32.totalorder %s310, %s326
      %p328 = scmp.eq.s32.totalorder %s35, 0
      %p329 = por %p327, %p328
      %p330 = scmp.le.s32.totalorder 1, %s29
      %p331 = scmp.lt.s32.totalorder %s29, 3
      %p332 = pnand %p330, %p331
      %p333 = pneg %p332
      // Predicated region
      $region9: #{tpu_custom_call.1} parent=5 // pred_check
        _
      $region10: #{tpu_custom_call.1} parent=5 // pred_check_branch
        %335 = sbr.rel (%p332) target = $region12
      $region11: #{tpu_custom_call.1} parent=5 // pred_region
        %s336 = ssub.s32 %s29, 1
        // Predicated region
        $region13: #{tpu_custom_call.1} parent=11 // pred_check
          %p337 = pneg %p128
        $region14: #{tpu_custom_call.1} parent=11 // pred_check_branch
          %339 = sbr.rel (%p337) target = $region16
        $region15: #{tpu_custom_call.1} parent=11 // pred_region
          %s341 = ssub.s32 256, 256
          %342 = vsyncadd [#allocation9], %s341
          %s343 = sshll.u32 [#allocation8], 4
          %s344 = int_to_ptr.vmem [resolvable:$true] %s343
          %349 = dma.hbm_to_vmem [thread:$0]  %s3, 256, %s344, [#allocation9], 64, 64, 4
        $region16: #{tpu_custom_call.1} parent=11 // pred_fallthru
          _
        // Predicated region
        $region17: #{tpu_custom_call.1} parent=11 // pred_check
          %p350 = pneg %p149
        $region18: #{tpu_custom_call.1} parent=11 // pred_check_branch
          %352 = sbr.rel (%p350) target = $region20
        $region19: #{tpu_custom_call.1} parent=11 // pred_region
          %s354 = ssub.s32 256, 256
          %355 = vsyncadd [#allocation9], %s354
          %s356 = sshll.u32 [#allocation10], 4
          %s357 = int_to_ptr.vmem [resolvable:$true] %s356
          %362 = dma.hbm_to_vmem [thread:$0]  %s4, 256, %s357, [#allocation9], 64, 64, 4
        $region20: #{tpu_custom_call.1} parent=11 // pred_fallthru
          _
        // Predicated region
        $region21: #{tpu_custom_call.1} parent=11 // pred_check
          %p363 = pneg %p170
        $region22: #{tpu_custom_call.1} parent=11 // pred_check_branch
          %365 = sbr.rel (%p363) target = $region24
        $region23: #{tpu_custom_call.1} parent=11 // pred_region
          _
        $region24: #{tpu_custom_call.1} parent=11 // pred_fallthru
          _
        // Predicated region
        $region25: #{tpu_custom_call.1} parent=11 // pred_check
          %p366 = pneg %p191
        $region26: #{tpu_custom_call.1} parent=11 // pred_check_branch
          %368 = sbr.rel (%p366) target = $region28
        $region27: #{tpu_custom_call.1} parent=11 // pred_region
          _
        $region28: #{tpu_custom_call.1} parent=11 // pred_fallthru
          _
        // Predicated region
        $region29: #{tpu_custom_call.1} parent=11 // pred_check
          %p369 = pneg %p212
        $region30: #{tpu_custom_call.1} parent=11 // pred_check_branch
          %371 = sbr.rel (%p369) target = $region32
        $region31: #{tpu_custom_call.1} parent=11 // pred_region
          _
        $region32: #{tpu_custom_call.1} parent=11 // pred_fallthru
          _
        // Predicated region
        $region33: #{tpu_custom_call.1} parent=11 // pred_check
          %p372 = pneg %p233
        $region34: #{tpu_custom_call.1} parent=11 // pred_check_branch
          %374 = sbr.rel (%p372) target = $region36
        $region35: #{tpu_custom_call.1} parent=11 // pred_region
          %s376 = ssub.s32 16, 16
          %377 = vsyncadd [#allocation12], %s376
          %s379 = sshll.u32 [#allocation11], 4
          %s380 = int_to_ptr.vmem [resolvable:$true] %s379
          %382 = dma.hbm_to_vmem [thread:$0]  %s8, 16, %s380, [#allocation12]
        $region36: #{tpu_custom_call.1} parent=11 // pred_fallthru
          _
        // Predicated region
        $region37: #{tpu_custom_call.1} parent=11 // pred_check
          %p383 = pneg %p254
        $region38: #{tpu_custom_call.1} parent=11 // pred_check_branch
          %385 = sbr.rel (%p383) target = $region40
        $region39: #{tpu_custom_call.1} parent=11 // pred_region
          %s387 = ssub.s32 64, 64
          %388 = vsyncadd [#allocation12], %s387
          %s390 = sshll.u32 [#allocation13], 4
          %s391 = int_to_ptr.vmem [resolvable:$true] %s390
          %393 = dma.hbm_to_vmem [thread:$0]  %s9, 64, %s391, [#allocation12]
        $region40: #{tpu_custom_call.1} parent=11 // pred_fallthru
          _
        // Predicated region
        $region41: #{tpu_custom_call.1} parent=11 // pred_check
          %p394 = pneg %p275
        $region42: #{tpu_custom_call.1} parent=11 // pred_check_branch
          %396 = sbr.rel (%p394) target = $region44
        $region43: #{tpu_custom_call.1} parent=11 // pred_region
          _
        $region44: #{tpu_custom_call.1} parent=11 // pred_fallthru
          _
        // Predicated region
        $region45: #{tpu_custom_call.1} parent=11 // pred_check
          %p397 = pneg %p296
        $region46: #{tpu_custom_call.1} parent=11 // pred_check_branch
          %399 = sbr.rel (%p397) target = $region48
        $region47: #{tpu_custom_call.1} parent=11 // pred_region
          _
        $region48: #{tpu_custom_call.1} parent=11 // pred_fallthru
          _
      $region12: #{tpu_custom_call.1} parent=5 // pred_fallthru
        _
      %p400 = scmp.lt.s32.totalorder %s29, 2
      // Predicated region
      $region49: #{tpu_custom_call.1} parent=5 // pred_check
        %p401 = pneg %p400
      $region50: #{tpu_custom_call.1} parent=5 // pred_check_branch
        %403 = sbr.rel (%p401) target = $region52
      $region51: #{tpu_custom_call.1} parent=5 // pred_region
        // Predicated region
        $region53: #{tpu_custom_call.1} parent=51 // pred_check
          %p404 = pneg %p49
        $region54: #{tpu_custom_call.1} parent=51 // pred_check_branch
          %406 = sbr.rel (%p404) target = $region56
        $region55: #{tpu_custom_call.1} parent=51 // pred_region
          %s407 = sand.u32 %s39, 1
          %s408 = scalar_lea.sflag [#allocation3], %s407
          %s409 = sand.u32 %s39, 1
          %s410 = smul.addr %s409, 4
          %s411 = scalar_lea.vmem [#allocation2], %s410
          %s413 = ssub.s32 64, 64
          %414 = vsyncadd %s408, %s413
          %s415 = smul.addr %s29, 64
          %s416 = scalar_lea.hbm %s0, %s415
          %s418 = sshll.u32 %s411, 4
          %s419 = int_to_ptr.vmem [resolvable:$true] %s418
          %421 = dma.hbm_to_vmem [thread:$0]  %s416, 64, %s419, %s408
        $region56: #{tpu_custom_call.1} parent=51 // pred_fallthru
          _
        // Predicated region
        $region57: #{tpu_custom_call.1} parent=51 // pred_check
          %p422 = pneg %p75
        $region58: #{tpu_custom_call.1} parent=51 // pred_check_branch
          %424 = sbr.rel (%p422) target = $region60
        $region59: #{tpu_custom_call.1} parent=51 // pred_region
          %s425 = sand.u32 %s29, 1
          %s426 = scalar_lea.sflag [#allocation6], %s425
          %s427 = sand.u32 %s65, 1
          %s428 = smul.addr %s427, 4
          %s429 = scalar_lea.vmem [#allocation5], %s428
          %s431 = ssub.s32 64, 64
          %432 = vsyncadd %s426, %s431
          %s433 = smul.addr %s29, 64
          %s434 = scalar_lea.hbm %s1, %s433
          %s436 = sshll.u32 %s429, 4
          %s437 = int_to_ptr.vmem [resolvable:$true] %s436
          %439 = dma.hbm_to_vmem [thread:$0]  %s434, 64, %s437, %s426
        $region60: #{tpu_custom_call.1} parent=51 // pred_fallthru
          _
        // Predicated region
        $region61: #{tpu_custom_call.1} parent=51 // pred_check
          %p440 = pneg %p101
        $region62: #{tpu_custom_call.1} parent=51 // pred_check_branch
          %442 = sbr.rel (%p440) target = $region64
        $region63: #{tpu_custom_call.1} parent=51 // pred_region
          %s443 = sand.u32 %s29, 1
          %s444 = scalar_lea.sflag [#allocation6], %s443
          %s445 = sand.u32 %s91, 1
          %s446 = smul.addr %s445, 4
          %s447 = scalar_lea.vmem [#allocation7], %s446
          %s449 = ssub.s32 64, 64
          %450 = vsyncadd %s444, %s449
          %s451 = smul.addr %s29, 64
          %s452 = scalar_lea.hbm %s2, %s451
          %s454 = sshll.u32 %s447, 4
          %s455 = int_to_ptr.vmem [resolvable:$true] %s454
          %457 = dma.hbm_to_vmem [thread:$0]  %s452, 64, %s455, %s444
        $region64: #{tpu_custom_call.1} parent=51 // pred_fallthru
          _
      $region52: #{tpu_custom_call.1} parent=5 // pred_fallthru
        _
      %p458 = scmp.le.s32.totalorder 1, %s29
      %p459 = scmp.lt.s32.totalorder %s29, 3
      %p460 = pnand %p458, %p459
      %p461 = pneg %p460
      // Predicated region
      $region65: #{tpu_custom_call.1} parent=5 // pred_check
        _
      $region66: #{tpu_custom_call.1} parent=5 // pred_check_branch
        %463 = sbr.rel (%p460) target = $region68
      $region67: #{tpu_custom_call.1} parent=5 // pred_region
        %s464 = ssub.s32 %s29, 1
        %s465 = sand.u32 %s42, 1
        %s466 = scalar_lea.sflag [#allocation3], %s465
        %s467 = sand.u32 %s42, 1
        %s468 = smul.addr %s467, 4
        %s469 = scalar_lea.vmem [#allocation2], %s468
        // Predicated region
        $region69: #{tpu_custom_call.1} parent=67 // pred_check
          %p470 = pneg %p55
        $region70: #{tpu_custom_call.1} parent=67 // pred_check_branch
          %472 = sbr.rel (%p470) target = $region72
        $region71: #{tpu_custom_call.1} parent=67 // pred_region
          %473 = dma.done %s466, 64
        $region72: #{tpu_custom_call.1} parent=67 // pred_fallthru
          _
        %s474 = sand.u32 %s34, 1
        %s475 = scalar_lea.sflag [#allocation6], %s474
        %s476 = sand.u32 %s68, 1
        %s477 = smul.addr %s476, 4
        %s478 = scalar_lea.vmem [#allocation5], %s477
        // Predicated region
        $region73: #{tpu_custom_call.1} parent=67 // pred_check
          %p479 = pneg %p81
        $region74: #{tpu_custom_call.1} parent=67 // pred_check_branch
          %481 = sbr.rel (%p479) target = $region76
        $region75: #{tpu_custom_call.1} parent=67 // pred_region
          %482 = dma.done %s475, 64
        $region76: #{tpu_custom_call.1} parent=67 // pred_fallthru
          _
        %s483 = sand.u32 %s34, 1
        %s484 = scalar_lea.sflag [#allocation6], %s483
        %s485 = sand.u32 %s94, 1
        %s486 = smul.addr %s485, 4
        %s487 = scalar_lea.vmem [#allocation7], %s486
        // Predicated region
        $region77: #{tpu_custom_call.1} parent=67 // pred_check
          %p488 = pneg %p107
        $region78: #{tpu_custom_call.1} parent=67 // pred_check_branch
          %490 = sbr.rel (%p488) target = $region80
        $region79: #{tpu_custom_call.1} parent=67 // pred_region
          %491 = dma.done %s484, 64
        $region80: #{tpu_custom_call.1} parent=67 // pred_fallthru
          _
        // Predicated region
        $region81: #{tpu_custom_call.1} parent=67 // pred_check
          %p492 = pneg %p128
        $region82: #{tpu_custom_call.1} parent=67 // pred_check_branch
          %494 = sbr.rel (%p492) target = $region84
        $region83: #{tpu_custom_call.1} parent=67 // pred_region
          %495 = dma.done [#allocation9], 256
        $region84: #{tpu_custom_call.1} parent=67 // pred_fallthru
          _
        // Predicated region
        $region85: #{tpu_custom_call.1} parent=67 // pred_check
          %p496 = pneg %p149
        $region86: #{tpu_custom_call.1} parent=67 // pred_check_branch
          %498 = sbr.rel (%p496) target = $region88
        $region87: #{tpu_custom_call.1} parent=67 // pred_region
          %499 = dma.done [#allocation9], 256
        $region88: #{tpu_custom_call.1} parent=67 // pred_fallthru
          _
        // Predicated region
        $region89: #{tpu_custom_call.1} parent=67 // pred_check
          %p500 = pneg %p233
        $region90: #{tpu_custom_call.1} parent=67 // pred_check_branch
          %502 = sbr.rel (%p500) target = $region92
        $region91: #{tpu_custom_call.1} parent=67 // pred_region
          %503 = dma.done [#allocation12], 16
        $region92: #{tpu_custom_call.1} parent=67 // pred_fallthru
          _
        // Predicated region
        $region93: #{tpu_custom_call.1} parent=67 // pred_check
          %p504 = pneg %p254
        $region94: #{tpu_custom_call.1} parent=67 // pred_check_branch
          %506 = sbr.rel (%p504) target = $region96
        $region95: #{tpu_custom_call.1} parent=67 // pred_region
          %507 = dma.done [#allocation12], 64
        $region96: #{tpu_custom_call.1} parent=67 // pred_fallthru
          _
        %s508 = sand.u32 %s42, 1
        %s509 = scalar_lea.sflag [#allocation3], %s508
        %s510 = sand.u32 %s42, 1
        %s511 = smul.addr %s510, 4
        %s512 = scalar_lea.vmem [#allocation2], %s511
        %p513 = pneg %p55
        %p514 = pneg %p52
        %s515 = sand.u32 %s34, 1
        %s516 = scalar_lea.sflag [#allocation6], %s515
        %s517 = sand.u32 %s68, 1
        %s518 = smul.addr %s517, 4
        %s519 = scalar_lea.vmem [#allocation5], %s518
        %p520 = pneg %p81
        %p521 = pneg %p78
        %s522 = sand.u32 %s34, 1
        %s523 = scalar_lea.sflag [#allocation6], %s522
        %s524 = sand.u32 %s94, 1
        %s525 = smul.addr %s524, 4
        %s526 = scalar_lea.vmem [#allocation7], %s525
        %p527 = pneg %p107
        %p528 = pneg %p104
        %p529 = pneg %p128
        %p530 = pneg %p125
        %p531 = pneg %p149
        %p532 = pneg %p146
        %p533 = pneg %p170
        %p534 = pneg %p167
        %p535 = pneg %p191
        %p536 = pneg %p188
        %p537 = pneg %p212
        %p538 = pneg %p209
        %p539 = pneg %p233
        %p540 = pneg %p230
        %p541 = pneg %p254
        %p542 = pneg %p251
        %p543 = pneg %p275
        %p544 = pneg %p272
        %p545 = pneg %p296
        %p546 = pneg %p293
        %p547 = pneg %p322
        %p548 = pneg %p319
        %s549 = sand.u32 %s309, 1
        %s550 = scalar_lea.sflag [#allocation4], %s549
        %s551 = sand.u32 %s309, 1
        %s552 = smul.addr %s551, 8
        %s553 = scalar_lea.vmem [#allocation14], %s552
        %v555 = vld [vmem:[%s469] sm:$0xf]
        %v556 = vld [vmem:[%s478] sm:$0xf]
        %v557 = vld [vmem:[%s487] sm:$0xf]
        %v558 = vld [vmem:[#allocation8] sm:$0xf]
        %v559 = vld [vmem:[#allocation8 + $0x4] sm:$0xf]
        %v560 = vld [vmem:[#allocation8 + $0x8] sm:$0xf]
        %v561 = vld [vmem:[#allocation8 + $0xc] sm:$0xf]
        %v562 = vld [vmem:[%s6] sm:$0x1]
        %v564 = vlaneseq
        %v565 = vshrl.u32 %v564, 7
        %v566 = vsub.s32 0, %v565
        %v567 = vrot.slane %v562, %v566
        %v573 = vunpack.c.l.b16 %v558
        %v574 = vunpack.c.l.b16 %v559
        %v575 = vunpack.c.l.b16 %v560
        %v576 = vunpack.c.l.b16 %v561
        %v577 = vpack.c.b16 %v574, %v573
        %v578 = vpack.c.b16 %v576, %v575
        %vm581 = vcmask 261120
        %v583 = vsel %vm581, %v555, 0
        %585 = vmatprep.subr.bf16.mxu0 0
        %586 = vmatpush1.bf16.msra.mxu0 %v577
        %587 = vmatprep.subr.bf16.mxu0 0
        %588 = vmatpush1.bf16.msra.mxu0 %v578
        %589 = vmatprep.subr.bf16.mxu0 0
        %590 = vmatpush1.bf16.msra.mxu0 0
        %591 = vmatprep.subr.bf16.mxu0 0
        %592 = vmatpush1.bf16.msra.mxu0 0
        %593 = vmatprep.subr.bf16.mxu0 0
        %594 = vmatpush1.bf16.msra.mxu0 0
        %595 = vmatprep.subr.bf16.mxu0 0
        %596 = vmatpush1.bf16.msra.mxu0 0
        %597 = vmatprep.subr.bf16.mxu0 0
        %598 = vmatpush1.bf16.msra.mxu0 0
        %599 = vmatprep.subr.bf16.mxu0 0
        %600 = vmatpush1.bf16.msra.mxu0 0
        %601 = vmatprep.subr.bf16.mxu0 0
        %602 = vmatpush1.bf16.msra.mxu0 0
        %603 = vmatprep.subr.bf16.mxu0 0
        %604 = vmatpush1.bf16.msra.mxu0 0
        %605 = vmatprep.subr.bf16.mxu0 0
        %606 = vmatpush1.bf16.msra.mxu0 0
        %607 = vmatprep.subr.bf16.mxu0 0
        %608 = vmatpush1.bf16.msra.mxu0 0
        %609 = vmatprep.subr.bf16.mxu0 0
        %610 = vmatpush1.bf16.msra.mxu0 0
        %611 = vmatprep.subr.bf16.mxu0 0
        %612 = vmatpush1.bf16.msra.mxu0 0
        %613 = vmatprep.subr.bf16.mxu0 0
        %614 = vmatpush1.bf16.msra.mxu0 0
        %615 = vmatprep.subr.bf16.mxu0 0
        %616 = vmatpush1.bf16.msra.mxu0 0
        %617 = vmatprep.mubr.bf16.mxu0 0
        %618 = vmatmul.mubr.bf16.gmra.mrb[0].mxu0 %v583
        %v619 = vpop.f32.mrb[0].mxu0
        %v620 = vadd.f32 %v567, %v619
        %v621 = vpop.f32.mrb[0].mxu0
        %v622 = vpop.f32.mrb[0].mxu0
        %v623 = vpop.f32.mrb[0].mxu0
        %624 = vdwg.mxu0
        %v625 = vmul.f32 %v620, 0.35355338
        %v626 = vld [vmem:[#allocation10] sm:$0xf]
        %v627 = vld [vmem:[#allocation10 + $0x4] sm:$0xf]
        %v628 = vld [vmem:[#allocation10 + $0x8] sm:$0xf]
        %v629 = vld [vmem:[#allocation10 + $0xc] sm:$0xf]
        %v630 = vld [vmem:[%s7] sm:$0x1]
        %v632 = vlaneseq
        %v633 = vshrl.u32 %v632, 7
        %v634 = vsub.s32 0, %v633
        %v635 = vrot.slane %v630, %v634
        %v641 = vunpack.c.l.b16 %v626
        %v642 = vunpack.c.l.b16 %v627
        %v643 = vunpack.c.l.b16 %v628
        %v644 = vunpack.c.l.b16 %v629
        %v645 = vpack.c.b16 %v642, %v641
        %v646 = vpack.c.b16 %v644, %v643
        %v650 = vsel %vm581, %v556, 0
        %652 = vmatprep.subr.bf16.mxu0 0
        %653 = vmatpush1.bf16.msra.mxu0 %v645
        %654 = vmatprep.subr.bf16.mxu0 0
        %655 = vmatpush1.bf16.msra.mxu0 %v646
        %656 = vmatprep.subr.bf16.mxu0 0
        %657 = vmatpush1.bf16.msra.mxu0 0
        %658 = vmatprep.subr.bf16.mxu0 0
        %659 = vmatpush1.bf16.msra.mxu0 0
        %660 = vmatprep.subr.bf16.mxu0 0
        %661 = vmatpush1.bf16.msra.mxu0 0
        %662 = vmatprep.subr.bf16.mxu0 0
        %663 = vmatpush1.bf16.msra.mxu0 0
        %664 = vmatprep.subr.bf16.mxu0 0
        %665 = vmatpush1.bf16.msra.mxu0 0
        %666 = vmatprep.subr.bf16.mxu0 0
        %667 = vmatpush1.bf16.msra.mxu0 0
        %668 = vmatprep.subr.bf16.mxu0 0
        %669 = vmatpush1.bf16.msra.mxu0 0
        %670 = vmatprep.subr.bf16.mxu0 0
        %671 = vmatpush1.bf16.msra.mxu0 0
        %672 = vmatprep.subr.bf16.mxu0 0
        %673 = vmatpush1.bf16.msra.mxu0 0
        %674 = vmatprep.subr.bf16.mxu0 0
        %675 = vmatpush1.bf16.msra.mxu0 0
        %676 = vmatprep.subr.bf16.mxu0 0
        %677 = vmatpush1.bf16.msra.mxu0 0
        %678 = vmatprep.subr.bf16.mxu0 0
        %679 = vmatpush1.bf16.msra.mxu0 0
        %680 = vmatprep.subr.bf16.mxu0 0
        %681 = vmatpush1.bf16.msra.mxu0 0
        %682 = vmatprep.subr.bf16.mxu0 0
        %683 = vmatpush1.bf16.msra.mxu0 0
        %684 = vmatprep.mubr.bf16.mxu0 0
        %685 = vmatmul.mubr.bf16.gmra.mrb[0].mxu0 %v650
        %v686 = vpop.f32.mrb[0].mxu0
        %v687 = vadd.f32 %v635, %v686
        %v688 = vpop.f32.mrb[0].mxu0
        %v689 = vpop.f32.mrb[0].mxu0
        %v690 = vpop.f32.mrb[0].mxu0
        %691 = vdwg.mxu0
        %v692 = vld [vmem:[%s5] sm:$0xf]
        %v693 = vld [vmem:[%s5 + $0x4] sm:$0xf]
        %v694 = vld [vmem:[%s5 + $0x8] sm:$0xf]
        %v695 = vld [vmem:[%s5 + $0xc] sm:$0xf]
        %v696 = vld [vmem:[#allocation11] sm:$0x1]
        %v698 = vlaneseq
        %v699 = vshrl.u32 %v698, 7
        %v700 = vsub.s32 0, %v699
        %v701 = vrot.slane %v696, %v700
        %v707 = vunpack.c.l.b16 %v692
        %v708 = vunpack.c.l.b16 %v693
        %v709 = vunpack.c.l.b16 %v694
        %v710 = vunpack.c.l.b16 %v695
        %v711 = vpack.c.b16 %v708, %v707
        %v712 = vpack.c.b16 %v710, %v709
        %v716 = vsel %vm581, %v557, 0
        %718 = vmatprep.subr.bf16.mxu0 0
        %719 = vmatpush1.bf16.msra.mxu0 %v711
        %720 = vmatprep.subr.bf16.mxu0 0
        %721 = vmatpush1.bf16.msra.mxu0 %v712
        %722 = vmatprep.subr.bf16.mxu0 0
        %723 = vmatpush1.bf16.msra.mxu0 0
        %724 = vmatprep.subr.bf16.mxu0 0
        %725 = vmatpush1.bf16.msra.mxu0 0
        %726 = vmatprep.subr.bf16.mxu0 0
        %727 = vmatpush1.bf16.msra.mxu0 0
        %728 = vmatprep.subr.bf16.mxu0 0
        %729 = vmatpush1.bf16.msra.mxu0 0
        %730 = vmatprep.subr.bf16.mxu0 0
        %731 = vmatpush1.bf16.msra.mxu0 0
        %732 = vmatprep.subr.bf16.mxu0 0
        %733 = vmatpush1.bf16.msra.mxu0 0
        %734 = vmatprep.subr.bf16.mxu0 0
        %735 = vmatpush1.bf16.msra.mxu0 0
        %736 = vmatprep.subr.bf16.mxu0 0
        %737 = vmatpush1.bf16.msra.mxu0 0
        %738 = vmatprep.subr.bf16.mxu0 0
        %739 = vmatpush1.bf16.msra.mxu0 0
        %740 = vmatprep.subr.bf16.mxu0 0
        %741 = vmatpush1.bf16.msra.mxu0 0
        %742 = vmatprep.subr.bf16.mxu0 0
        %743 = vmatpush1.bf16.msra.mxu0 0
        %744 = vmatprep.subr.bf16.mxu0 0
        %745 = vmatpush1.bf16.msra.mxu0 0
        %746 = vmatprep.subr.bf16.mxu0 0
        %747 = vmatpush1.bf16.msra.mxu0 0
        %748 = vmatprep.subr.bf16.mxu0 0
        %749 = vmatpush1.bf16.msra.mxu0 0
        %750 = vmatprep.mubr.bf16.mxu0 0
        %751 = vmatmul.mubr.bf16.gmra.mrb[0].mxu0 %v716
        %v752 = vpop.f32.mrb[0].mxu0
        %v753 = vadd.f32 %v701, %v752
        %v754 = vpop.f32.mrb[0].mxu0
        %v755 = vpop.f32.mrb[0].mxu0
        %v756 = vpop.f32.mrb[0].mxu0
        %757 = vdwg.mxu0
        %759 = vrot.lane.b32.xlu0 %v625, 120
        %v760 = vpop.permute.xlu0 %759
        %762 = vrot.lane.b32.xlu0 %v625, 112
        %v763 = vpop.permute.xlu0 %762
        %765 = vrot.lane.b32.xlu0 %v625, 104
        %v766 = vpop.permute.xlu0 %765
        %v768 = vpack.c.bf16 %v760, %v625
        %v769 = vpack.c.bf16 %v766, %v763
        %v770 = vld [vmem:[#allocation13] sm:$0xf]
        %vm771 = vcmask 64512
        %v773 = vsel %vm771, %v768, 0
        %v776 = vsel %vm771, %v769, 0
        %v779 = vsel %vm771, %v770, 0
        %781 = vmatprep.subr.bf16.mxu0 0
        %782 = vmatpush1.bf16.xpose.msra.mxu0 %v779
        %783 = vmatprep.subr.bf16.mxu0 0
        %784 = vmatpush1.bf16.xpose.msra.mxu0 0
        %785 = vmatprep.subr.bf16.mxu0 0
        %786 = vmatpush1.bf16.xpose.msra.mxu0 0
        %787 = vmatprep.subr.bf16.mxu0 0
        %788 = vmatpush1.bf16.xpose.msra.mxu0 0
        %789 = vmatprep.subr.bf16.mxu0 0
        %790 = vmatpush1.bf16.xpose.msra.mxu0 0
        %791 = vmatprep.subr.bf16.mxu0 0
        %792 = vmatpush1.bf16.xpose.msra.mxu0 0
        %793 = vmatprep.subr.bf16.mxu0 0
        %794 = vmatpush1.bf16.xpose.msra.mxu0 0
        %795 = vmatprep.subr.bf16.mxu0 0
        %796 = vmatpush1.bf16.xpose.msra.mxu0 0
        %797 = vmatprep.subr.bf16.mxu0 0
        %798 = vmatpush1.bf16.xpose.msra.mxu0 0
        %799 = vmatprep.subr.bf16.mxu0 0
        %800 = vmatpush1.bf16.xpose.msra.mxu0 0
        %801 = vmatprep.subr.bf16.mxu0 0
        %802 = vmatpush1.bf16.xpose.msra.mxu0 0
        %803 = vmatprep.subr.bf16.mxu0 0
        %804 = vmatpush1.bf16.xpose.msra.mxu0 0
        %805 = vmatprep.subr.bf16.mxu0 0
        %806 = vmatpush1.bf16.xpose.msra.mxu0 0
        %807 = vmatprep.subr.bf16.mxu0 0
        %808 = vmatpush1.bf16.xpose.msra.mxu0 0
        %809 = vmatprep.subr.bf16.mxu0 0
        %810 = vmatpush1.bf16.xpose.msra.mxu0 0
        %811 = vmatprep.subr.bf16.mxu0 0
        %812 = vmatpush1.bf16.xpose.msra.mxu0 0
        %813 = vmatprep.mubr.bf16.mxu0 0
        %814 = vmatmul.mubr.bf16.gmra.mrb[0].mxu0 %v773
        %v815 = vpop.f32.mrb[0].mxu0
        %v816 = vadd.f32 0.0, %v815
        %v817 = vpop.f32.mrb[0].mxu0
        %v818 = vpop.f32.mrb[0].mxu0
        %v819 = vadd.f32 0.0, %v818
        %v820 = vpop.f32.mrb[0].mxu0
        %821 = vmatprep.mubr.bf16.mxu0 0
        %822 = vmatmul.mubr.bf16.gmra.mrb[0].mxu0 %v776
        %v823 = vpop.f32.mrb[0].mxu0
        %v824 = vadd.f32 0.0, %v823
        %v825 = vpop.f32.mrb[0].mxu0
        %v826 = vpop.f32.mrb[0].mxu0
        %v827 = vadd.f32 0.0, %v826
        %v828 = vpop.f32.mrb[0].mxu0
        %829 = vdwg.mxu0
        %v830 = vlaneseq
        %v831 = vshrl.u32 %v830, 7
        %v832 = vlaneseq
        %v833 = vand.u32 %v832, 127
        %834 = vset.pattern.permute.xlu0 0
        %835 = vperm.xlu0 %834, %v831
        %v836 = vpop.permute.xlu0 %835
        %vm837 = vcmp.le.s32.totalorder %v833, %v836
        %v838 = vsub.s32 7, %v831
        %vm839 = vcmask 1047616
        %840 = vrot.lane.b32.xlu0 %v816, 8
        %v841 = vpop.permute.xlu0 %840
        %v842 = vsel %vm839, %v841, %v816
        %843 = vrot.lane.b32.xlu0 %v819, 8
        %v844 = vpop.permute.xlu0 %843
        %v845 = vsel %vm839, %v844, %v819
        %846 = vrot.lane.b32.xlu0 %v824, 8
        %v847 = vpop.permute.xlu0 %846
        %v848 = vsel %vm839, %v847, %v824
        %849 = vrot.lane.b32.xlu0 %v827, 8
        %v850 = vpop.permute.xlu0 %849
        %v851 = vsel %vm839, %v850, %v827
        %852 = vrot.lane.b32.xlu0 %v842, 8
        %v853 = vpop.permute.xlu0 %852
        %854 = vrot.lane.b32.xlu0 %v845, 8
        %v855 = vpop.permute.xlu0 %854
        %856 = vrot.lane.b32.xlu0 %v848, 8
        %v857 = vpop.permute.xlu0 %856
        %858 = vrot.lane.b32.xlu0 %v851, 8
        %v859 = vpop.permute.xlu0 %858
        %v860 = vsel %vm839, %v853, %v816
        %v861 = vsel %vm839, %v855, %v819
        %v862 = vsel %vm839, %v857, %v824
        %v863 = vsel %vm839, %v859, %v827
        %v864 = vand.u32 %v838, 1
        %vm865 = vcmp.eq.s32.totalorder %v864, 1
        %v866 = vsel %vm865, 1, 0
        %867 = vset.pattern.permute.xlu0 0
        %868 = vperm.xlu0 %867, %v866
        %v869 = vpop.permute.xlu0 %868
        %vm870 = vcmp.eq.s32.totalorder %v869, 1
        %875 = vrot.lane.b32.xlu0 %v816, 1
        %v876 = vpop.permute.xlu0 %875
        %877 = vrot.lane.b32.xlu0 %v819, 1
        %v878 = vpop.permute.xlu0 %877
        %879 = vrot.lane.b32.xlu0 %v824, 1
        %v880 = vpop.permute.xlu0 %879
        %881 = vrot.lane.b32.xlu0 %v827, 1
        %v882 = vpop.permute.xlu0 %881
        %v887 = vsel %vm870, %v860, %v876
        %v888 = vsel %vm870, %v861, %v878
        %v889 = vsel %vm870, %v862, %v880
        %v890 = vsel %vm870, %v863, %v882
        %895 = vrot.lane.b32.xlu0 %v887, 127
        %v896 = vpop.permute.xlu0 %895
        %897 = vrot.lane.b32.xlu0 %v888, 127
        %v898 = vpop.permute.xlu0 %897
        %899 = vrot.lane.b32.xlu0 %v889, 127
        %v900 = vpop.permute.xlu0 %899
        %901 = vrot.lane.b32.xlu0 %v890, 127
        %v902 = vpop.permute.xlu0 %901
        %907 = vrot.lane.b32.xlu0 %v896, 8
        %v908 = vpop.permute.xlu0 %907
        %v909 = vsel %vm839, %v908, %v896
        %910 = vrot.lane.b32.xlu0 %v898, 8
        %v911 = vpop.permute.xlu0 %910
        %v912 = vsel %vm839, %v911, %v898
        %913 = vrot.lane.b32.xlu0 %v900, 8
        %v914 = vpop.permute.xlu0 %913
        %v915 = vsel %vm839, %v914, %v900
        %916 = vrot.lane.b32.xlu0 %v902, 8
        %v917 = vpop.permute.xlu0 %916
        %v918 = vsel %vm839, %v917, %v902
        %919 = vrot.lane.b32.xlu0 %v909, 8
        %v920 = vpop.permute.xlu0 %919
        %921 = vrot.lane.b32.xlu0 %v912, 8
        %v922 = vpop.permute.xlu0 %921
        %923 = vrot.lane.b32.xlu0 %v915, 8
        %v924 = vpop.permute.xlu0 %923
        %925 = vrot.lane.b32.xlu0 %v918, 8
        %v926 = vpop.permute.xlu0 %925
        %v927 = vsel %vm839, %v920, %v896
        %v928 = vsel %vm839, %v922, %v898
        %v929 = vsel %vm839, %v924, %v900
        %v930 = vsel %vm839, %v926, %v902
        %v931 = vshra.s32 %v838, 1
        %v932 = vand.u32 %v931, 1
        %vm933 = vcmp.eq.s32.totalorder %v932, 1
        %v934 = vsel %vm933, 1, 0
        %935 = vset.pattern.permute.xlu0 0
        %936 = vperm.xlu0 %935, %v934
        %v937 = vpop.permute.xlu0 %936
        %vm938 = vcmp.eq.s32.totalorder %v937, 1
        %939 = vrot.lane.b32.xlu0 %v887, 1
        %v940 = vpop.permute.xlu0 %939
        %941 = vrot.lane.b32.xlu0 %v888, 1
        %v942 = vpop.permute.xlu0 %941
        %943 = vrot.lane.b32.xlu0 %v889, 1
        %v944 = vpop.permute.xlu0 %943
        %945 = vrot.lane.b32.xlu0 %v890, 1
        %v946 = vpop.permute.xlu0 %945
        %v951 = vsel %vm938, %v927, %v940
        %v952 = vsel %vm938, %v928, %v942
        %v953 = vsel %vm938, %v929, %v944
        %v954 = vsel %vm938, %v930, %v946
        %959 = vrot.lane.b32.xlu0 %v951, 126
        %v960 = vpop.permute.xlu0 %959
        %961 = vrot.lane.b32.xlu0 %v952, 126
        %v962 = vpop.permute.xlu0 %961
        %963 = vrot.lane.b32.xlu0 %v953, 126
        %v964 = vpop.permute.xlu0 %963
        %965 = vrot.lane.b32.xlu0 %v954, 126
        %v966 = vpop.permute.xlu0 %965
        %971 = vrot.lane.b32.xlu0 %v960, 8
        %v972 = vpop.permute.xlu0 %971
        %v973 = vsel %vm839, %v972, %v960
        %974 = vrot.lane.b32.xlu0 %v962, 8
        %v975 = vpop.permute.xlu0 %974
        %v976 = vsel %vm839, %v975, %v962
        %977 = vrot.lane.b32.xlu0 %v964, 8
        %v978 = vpop.permute.xlu0 %977
        %v979 = vsel %vm839, %v978, %v964
        %980 = vrot.lane.b32.xlu0 %v966, 8
        %v981 = vpop.permute.xlu0 %980
        %v982 = vsel %vm839, %v981, %v966
        %983 = vrot.lane.b32.xlu0 %v973, 8
        %v984 = vpop.permute.xlu0 %983
        %985 = vrot.lane.b32.xlu0 %v976, 8
        %v986 = vpop.permute.xlu0 %985
        %987 = vrot.lane.b32.xlu0 %v979, 8
        %v988 = vpop.permute.xlu0 %987
        %989 = vrot.lane.b32.xlu0 %v982, 8
        %v990 = vpop.permute.xlu0 %989
        %v991 = vsel %vm839, %v984, %v960
        %v992 = vsel %vm839, %v986, %v962
        %v993 = vsel %vm839, %v988, %v964
        %v994 = vsel %vm839, %v990, %v966
        %v995 = vshra.s32 %v838, 2
        %v996 = vand.u32 %v995, 1
        %vm997 = vcmp.eq.s32.totalorder %v996, 1
        %v998 = vsel %vm997, 1, 0
        %999 = vset.pattern.permute.xlu0 0
        %1000 = vperm.xlu0 %999, %v998
        %v1001 = vpop.permute.xlu0 %1000
        %vm1002 = vcmp.eq.s32.totalorder %v1001, 1
        %1003 = vrot.lane.b32.xlu0 %v951, 2
        %v1004 = vpop.permute.xlu0 %1003
        %1005 = vrot.lane.b32.xlu0 %v952, 2
        %v1006 = vpop.permute.xlu0 %1005
        %1007 = vrot.lane.b32.xlu0 %v953, 2
        %v1008 = vpop.permute.xlu0 %1007
        %1009 = vrot.lane.b32.xlu0 %v954, 2
        %v1010 = vpop.permute.xlu0 %1009
        %v1015 = vsel %vm1002, %v991, %v1004
        %v1016 = vsel %vm1002, %v992, %v1006
        %v1017 = vsel %vm1002, %v993, %v1008
        %v1018 = vsel %vm1002, %v994, %v1010
        %1023 = vrot.lane.b32.xlu0 %v1015, 124
        %v1024 = vpop.permute.xlu0 %1023
        %1025 = vrot.lane.b32.xlu0 %v1016, 124
        %v1026 = vpop.permute.xlu0 %1025
        %1027 = vrot.lane.b32.xlu0 %v1017, 124
        %v1028 = vpop.permute.xlu0 %1027
        %1029 = vrot.lane.b32.xlu0 %v1018, 124
        %v1030 = vpop.permute.xlu0 %1029
        %v1035 = vsel %vm837, %v1024, 0.0
        %v1036 = vsel %vm837, %v1026, 0.0
        %v1037 = vsel %vm837, %v1028, 0.0
        %v1038 = vsel %vm837, %v1030, 0.0
        %v1039 = vpack.c.bf16 %v687, %v687
        %v1040 = vpack.c.bf16 %v753, %v753
        %v1042 = vsel %vm771, %v1039, 0
        %1044 = vmatprep.subr.bf16.mxu0 0
        %1045 = vmatpush1.bf16.xpose.msra.mxu0 %v1042
        %1046 = vmatprep.subr.bf16.mxu0 0
        %1047 = vmatpush1.bf16.xpose.msra.mxu0 0
        %1048 = vmatprep.subr.bf16.mxu0 0
        %1049 = vmatpush1.bf16.xpose.msra.mxu0 0
        %1050 = vmatprep.subr.bf16.mxu0 0
        %1051 = vmatpush1.bf16.xpose.msra.mxu0 0
        %1052 = vmatprep.subr.bf16.mxu0 0
        %1053 = vmatpush1.bf16.xpose.msra.mxu0 0
        %1054 = vmatprep.subr.bf16.mxu0 0
        %1055 = vmatpush1.bf16.xpose.msra.mxu0 0
        %1056 = vmatprep.subr.bf16.mxu0 0
        %1057 = vmatpush1.bf16.xpose.msra.mxu0 0
        %1058 = vmatprep.subr.bf16.mxu0 0
        %1059 = vmatpush1.bf16.xpose.msra.mxu0 0
        %1060 = vmatprep.subr.bf16.mxu0 0
        %1061 = vmatpush1.bf16.xpose.msra.mxu0 0
        %1062 = vmatprep.subr.bf16.mxu0 0
        %1063 = vmatpush1.bf16.xpose.msra.mxu0 0
        %1064 = vmatprep.subr.bf16.mxu0 0
        %1065 = vmatpush1.bf16.xpose.msra.mxu0 0
        %1066 = vmatprep.subr.bf16.mxu0 0
        %1067 = vmatpush1.bf16.xpose.msra.mxu0 0
        %1068 = vmatprep.subr.bf16.mxu0 0
        %1069 = vmatpush1.bf16.xpose.msra.mxu0 0
        %1070 = vmatprep.subr.bf16.mxu0 0
        %1071 = vmatpush1.bf16.xpose.msra.mxu0 0
        %1072 = vmatprep.subr.bf16.mxu0 0
        %1073 = vmatpush1.bf16.xpose.msra.mxu0 0
        %1074 = vmatprep.subr.bf16.mxu0 0
        %1075 = vmatpush1.bf16.xpose.msra.mxu0 0
        %1076 = vmatprep.mubr.bf16.mxu0 0
        %1077 = vmatmul.mubr.bf16.gmra.mrb[0].mxu0 %v773
        %v1078 = vpop.f32.mrb[0].mxu0
        %v1079 = vadd.f32 %v1035, %v1078
        %v1080 = vpop.f32.mrb[0].mxu0
        %v1081 = vpop.f32.mrb[0].mxu0
        %v1082 = vpop.f32.mrb[0].mxu0
        %1083 = vdwg.mxu0
        %v1084 = vsel %vm771, %v1079, -inf
        %1085 = vmax.xlane.f32.xlu0 %v1084
        %v1086 = vpop.xlane.xlu0 %1085
        %v1087 = vsub.f32 %v1079, %v1086
        %v1088 = vmul.f32 %v1087, 1.442695
        %v1089 = vpow.pop %v1088
        %v1090 = vsel %vm771, %v1089, 0.0
        %1091 = vadd.xlane.f32.xlu0 %v1090
        %v1092 = vpop.xlane.xlu0 %1091
        %v1093 = vrcp.pop %v1092
        %v1094 = vmul.f32 %v1089, %v1093
        %v1095 = vpack.c.bf16 %v1094, %v1094
        %v1097 = vsel %vm771, %v1095, 0
        %vm1099 = vcmask 1043456
        %v1101 = vsel %vm1099, %v1040, 0
        %1103 = vmatprep.subr.bf16.mxu0 0
        %1104 = vmatpush1.bf16.msra.mxu0 %v1101
        %1105 = vmatprep.subr.bf16.mxu0 0
        %1106 = vmatpush1.bf16.msra.mxu0 0
        %1107 = vmatprep.subr.bf16.mxu0 0
        %1108 = vmatpush1.bf16.msra.mxu0 0
        %1109 = vmatprep.subr.bf16.mxu0 0
        %1110 = vmatpush1.bf16.msra.mxu0 0
        %1111 = vmatprep.subr.bf16.mxu0 0
        %1112 = vmatpush1.bf16.msra.mxu0 0
        %1113 = vmatprep.subr.bf16.mxu0 0
        %1114 = vmatpush1.bf16.msra.mxu0 0
        %1115 = vmatprep.subr.bf16.mxu0 0
        %1116 = vmatpush1.bf16.msra.mxu0 0
        %1117 = vmatprep.subr.bf16.mxu0 0
        %1118 = vmatpush1.bf16.msra.mxu0 0
        %1119 = vmatprep.subr.bf16.mxu0 0
        %1120 = vmatpush1.bf16.msra.mxu0 0
        %1121 = vmatprep.subr.bf16.mxu0 0
        %1122 = vmatpush1.bf16.msra.mxu0 0
        %1123 = vmatprep.subr.bf16.mxu0 0
        %1124 = vmatpush1.bf16.msra.mxu0 0
        %1125 = vmatprep.subr.bf16.mxu0 0
        %1126 = vmatpush1.bf16.msra.mxu0 0
        %1127 = vmatprep.subr.bf16.mxu0 0
        %1128 = vmatpush1.bf16.msra.mxu0 0
        %1129 = vmatprep.subr.bf16.mxu0 0
        %1130 = vmatpush1.bf16.msra.mxu0 0
        %1131 = vmatprep.subr.bf16.mxu0 0
        %1132 = vmatpush1.bf16.msra.mxu0 0
        %1133 = vmatprep.subr.bf16.mxu0 0
        %1134 = vmatpush1.bf16.msra.mxu0 0
        %1135 = vmatprep.mubr.bf16.mxu0 0
        %1136 = vmatmul.mubr.bf16.gmra.mrb[0].mxu0 %v1097
        %v1137 = vpop.f32.mrb[0].mxu0
        %v1138 = vadd.f32 0.0, %v1137
        %v1139 = vpop.f32.mrb[0].mxu0
        %v1140 = vpop.f32.mrb[0].mxu0
        %v1141 = vpop.f32.mrb[0].mxu0
        %1142 = vdwg.mxu0
        %v1144 = vrot.slane %v768, 4
        %1146 = vrot.lane.b32.xlu0 %v1039, 120
        %v1147 = vpop.permute.xlu0 %1146
        %v1149 = vsel %vm771, %v1144, 0
        %v1152 = vsel %vm771, %v1147, 0
        %1154 = vmatprep.subr.bf16.mxu0 0
        %1155 = vmatpush1.bf16.xpose.msra.mxu0 %v1152
        %1156 = vmatprep.subr.bf16.mxu0 0
        %1157 = vmatpush1.bf16.xpose.msra.mxu0 0
        %1158 = vmatprep.subr.bf16.mxu0 0
        %1159 = vmatpush1.bf16.xpose.msra.mxu0 0
        %1160 = vmatprep.subr.bf16.mxu0 0
        %1161 = vmatpush1.bf16.xpose.msra.mxu0 0
        %1162 = vmatprep.subr.bf16.mxu0 0
        %1163 = vmatpush1.bf16.xpose.msra.mxu0 0
        %1164 = vmatprep.subr.bf16.mxu0 0
        %1165 = vmatpush1.bf16.xpose.msra.mxu0 0
        %1166 = vmatprep.subr.bf16.mxu0 0
        %1167 = vmatpush1.bf16.xpose.msra.mxu0 0
        %1168 = vmatprep.subr.bf16.mxu0 0
        %1169 = vmatpush1.bf16.xpose.msra.mxu0 0
        %1170 = vmatprep.subr.bf16.mxu0 0
        %1171 = vmatpush1.bf16.xpose.msra.mxu0 0
        %1172 = vmatprep.subr.bf16.mxu0 0
        %1173 = vmatpush1.bf16.xpose.msra.mxu0 0
        %1174 = vmatprep.subr.bf16.mxu0 0
        %1175 = vmatpush1.bf16.xpose.msra.mxu0 0
        %1176 = vmatprep.subr.bf16.mxu0 0
        %1177 = vmatpush1.bf16.xpose.msra.mxu0 0
        %1178 = vmatprep.subr.bf16.mxu0 0
        %1179 = vmatpush1.bf16.xpose.msra.mxu0 0
        %1180 = vmatprep.subr.bf16.mxu0 0
        %1181 = vmatpush1.bf16.xpose.msra.mxu0 0
        %1182 = vmatprep.subr.bf16.mxu0 0
        %1183 = vmatpush1.bf16.xpose.msra.mxu0 0
        %1184 = vmatprep.subr.bf16.mxu0 0
        %1185 = vmatpush1.bf16.xpose.msra.mxu0 0
        %1186 = vmatprep.mubr.bf16.mxu0 0
        %1187 = vmatmul.mubr.bf16.gmra.mrb[0].mxu0 %v1149
        %v1188 = vpop.f32.mrb[0].mxu0
        %v1189 = vadd.f32 %v1036, %v1188
        %v1190 = vpop.f32.mrb[0].mxu0
        %v1191 = vpop.f32.mrb[0].mxu0
        %v1192 = vpop.f32.mrb[0].mxu0
        %1193 = vdwg.mxu0
        %v1194 = vsel %vm771, %v1189, -inf
        %1195 = vmax.xlane.f32.xlu0 %v1194
        %v1196 = vpop.xlane.xlu0 %1195
        %v1197 = vsub.f32 %v1189, %v1196
        %v1198 = vmul.f32 %v1197, 1.442695
        %v1199 = vpow.pop %v1198
        %v1200 = vsel %vm771, %v1199, 0.0
        %1201 = vadd.xlane.f32.xlu0 %v1200
        %v1202 = vpop.xlane.xlu0 %1201
        %v1203 = vrcp.pop %v1202
        %v1204 = vmul.f32 %v1199, %v1203
        %v1205 = vpack.c.bf16 %v1204, %v1204
        %1207 = vrot.lane.b32.xlu0 %v1040, 120
        %v1208 = vpop.permute.xlu0 %1207
        %v1210 = vsel %vm771, %v1205, 0
        %v1213 = vsel %vm1099, %v1208, 0
        %1215 = vmatprep.subr.bf16.mxu0 0
        %1216 = vmatpush1.bf16.msra.mxu0 %v1213
        %1217 = vmatprep.subr.bf16.mxu0 0
        %1218 = vmatpush1.bf16.msra.mxu0 0
        %1219 = vmatprep.subr.bf16.mxu0 0
        %1220 = vmatpush1.bf16.msra.mxu0 0
        %1221 = vmatprep.subr.bf16.mxu0 0
        %1222 = vmatpush1.bf16.msra.mxu0 0
        %1223 = vmatprep.subr.bf16.mxu0 0
        %1224 = vmatpush1.bf16.msra.mxu0 0
        %1225 = vmatprep.subr.bf16.mxu0 0
        %1226 = vmatpush1.bf16.msra.mxu0 0
        %1227 = vmatprep.subr.bf16.mxu0 0
        %1228 = vmatpush1.bf16.msra.mxu0 0
        %1229 = vmatprep.subr.bf16.mxu0 0
        %1230 = vmatpush1.bf16.msra.mxu0 0
        %1231 = vmatprep.subr.bf16.mxu0 0
        %1232 = vmatpush1.bf16.msra.mxu0 0
        %1233 = vmatprep.subr.bf16.mxu0 0
        %1234 = vmatpush1.bf16.msra.mxu0 0
        %1235 = vmatprep.subr.bf16.mxu0 0
        %1236 = vmatpush1.bf16.msra.mxu0 0
        %1237 = vmatprep.subr.bf16.mxu0 0
        %1238 = vmatpush1.bf16.msra.mxu0 0
        %1239 = vmatprep.subr.bf16.mxu0 0
        %1240 = vmatpush1.bf16.msra.mxu0 0
        %1241 = vmatprep.subr.bf16.mxu0 0
        %1242 = vmatpush1.bf16.msra.mxu0 0
        %1243 = vmatprep.subr.bf16.mxu0 0
        %1244 = vmatpush1.bf16.msra.mxu0 0
        %1245 = vmatprep.subr.bf16.mxu0 0
        %1246 = vmatpush1.bf16.msra.mxu0 0
        %1247 = vmatprep.mubr.bf16.mxu0 0
        %1248 = vmatmul.mubr.bf16.gmra.mrb[0].mxu0 %v1210
        %v1249 = vpop.f32.mrb[0].mxu0
        %v1250 = vadd.f32 0.0, %v1249
        %v1251 = vpop.f32.mrb[0].mxu0
        %v1252 = vpop.f32.mrb[0].mxu0
        %v1253 = vpop.f32.mrb[0].mxu0
        %1254 = vdwg.mxu0
        %1255 = vrot.lane.b32.xlu0 %v1039, 112
        %v1256 = vpop.permute.xlu0 %1255
        %v1258 = vsel %vm771, %v1256, 0
        %1260 = vmatprep.subr.bf16.mxu0 0
        %1261 = vmatpush1.bf16.xpose.msra.mxu0 %v1258
        %1262 = vmatprep.subr.bf16.mxu0 0
        %1263 = vmatpush1.bf16.xpose.msra.mxu0 0
        %1264 = vmatprep.subr.bf16.mxu0 0
        %1265 = vmatpush1.bf16.xpose.msra.mxu0 0
        %1266 = vmatprep.subr.bf16.mxu0 0
        %1267 = vmatpush1.bf16.xpose.msra.mxu0 0
        %1268 = vmatprep.subr.bf16.mxu0 0
        %1269 = vmatpush1.bf16.xpose.msra.mxu0 0
        %1270 = vmatprep.subr.bf16.mxu0 0
        %1271 = vmatpush1.bf16.xpose.msra.mxu0 0
        %1272 = vmatprep.subr.bf16.mxu0 0
        %1273 = vmatpush1.bf16.xpose.msra.mxu0 0
        %1274 = vmatprep.subr.bf16.mxu0 0
        %1275 = vmatpush1.bf16.xpose.msra.mxu0 0
        %1276 = vmatprep.subr.bf16.mxu0 0
        %1277 = vmatpush1.bf16.xpose.msra.mxu0 0
        %1278 = vmatprep.subr.bf16.mxu0 0
        %1279 = vmatpush1.bf16.xpose.msra.mxu0 0
        %1280 = vmatprep.subr.bf16.mxu0 0
        %1281 = vmatpush1.bf16.xpose.msra.mxu0 0
        %1282 = vmatprep.subr.bf16.mxu0 0
        %1283 = vmatpush1.bf16.xpose.msra.mxu0 0
        %1284 = vmatprep.subr.bf16.mxu0 0
        %1285 = vmatpush1.bf16.xpose.msra.mxu0 0
        %1286 = vmatprep.subr.bf16.mxu0 0
        %1287 = vmatpush1.bf16.xpose.msra.mxu0 0
        %1288 = vmatprep.subr.bf16.mxu0 0
        %1289 = vmatpush1.bf16.xpose.msra.mxu0 0
        %1290 = vmatprep.subr.bf16.mxu0 0
        %1291 = vmatpush1.bf16.xpose.msra.mxu0 0
        %1292 = vmatprep.mubr.bf16.mxu0 0
        %1293 = vmatmul.mubr.bf16.gmra.mrb[0].mxu0 %v776
        %v1294 = vpop.f32.mrb[0].mxu0
        %v1295 = vadd.f32 %v1037, %v1294
        %v1296 = vpop.f32.mrb[0].mxu0
        %v1297 = vpop.f32.mrb[0].mxu0
        %v1298 = vpop.f32.mrb[0].mxu0
        %1299 = vdwg.mxu0
        %v1300 = vsel %vm771, %v1295, -inf
        %1301 = vmax.xlane.f32.xlu0 %v1300
        %v1302 = vpop.xlane.xlu0 %1301
        %v1303 = vsub.f32 %v1295, %v1302
        %v1304 = vmul.f32 %v1303, 1.442695
        %v1305 = vpow.pop %v1304
        %v1306 = vsel %vm771, %v1305, 0.0
        %1307 = vadd.xlane.f32.xlu0 %v1306
        %v1308 = vpop.xlane.xlu0 %1307
        %v1309 = vrcp.pop %v1308
        %v1310 = vmul.f32 %v1305, %v1309
        %v1311 = vpack.c.bf16 %v1310, %v1310
        %1312 = vrot.lane.b32.xlu0 %v1040, 112
        %v1313 = vpop.permute.xlu0 %1312
        %v1315 = vsel %vm771, %v1311, 0
        %v1318 = vsel %vm1099, %v1313, 0
        %1320 = vmatprep.subr.bf16.mxu0 0
        %1321 = vmatpush1.bf16.msra.mxu0 %v1318
        %1322 = vmatprep.subr.bf16.mxu0 0
        %1323 = vmatpush1.bf16.msra.mxu0 0
        %1324 = vmatprep.subr.bf16.mxu0 0
        %1325 = vmatpush1.bf16.msra.mxu0 0
        %1326 = vmatprep.subr.bf16.mxu0 0
        %1327 = vmatpush1.bf16.msra.mxu0 0
        %1328 = vmatprep.subr.bf16.mxu0 0
        %1329 = vmatpush1.bf16.msra.mxu0 0
        %1330 = vmatprep.subr.bf16.mxu0 0
        %1331 = vmatpush1.bf16.msra.mxu0 0
        %1332 = vmatprep.subr.bf16.mxu0 0
        %1333 = vmatpush1.bf16.msra.mxu0 0
        %1334 = vmatprep.subr.bf16.mxu0 0
        %1335 = vmatpush1.bf16.msra.mxu0 0
        %1336 = vmatprep.subr.bf16.mxu0 0
        %1337 = vmatpush1.bf16.msra.mxu0 0
        %1338 = vmatprep.subr.bf16.mxu0 0
        %1339 = vmatpush1.bf16.msra.mxu0 0
        %1340 = vmatprep.subr.bf16.mxu0 0
        %1341 = vmatpush1.bf16.msra.mxu0 0
        %1342 = vmatprep.subr.bf16.mxu0 0
        %1343 = vmatpush1.bf16.msra.mxu0 0
        %1344 = vmatprep.subr.bf16.mxu0 0
        %1345 = vmatpush1.bf16.msra.mxu0 0
        %1346 = vmatprep.subr.bf16.mxu0 0
        %1347 = vmatpush1.bf16.msra.mxu0 0
        %1348 = vmatprep.subr.bf16.mxu0 0
        %1349 = vmatpush1.bf16.msra.mxu0 0
        %1350 = vmatprep.subr.bf16.mxu0 0
        %1351 = vmatpush1.bf16.msra.mxu0 0
        %1352 = vmatprep.mubr.bf16.mxu0 0
        %1353 = vmatmul.mubr.bf16.gmra.mrb[0].mxu0 %v1315
        %v1354 = vpop.f32.mrb[0].mxu0
        %v1355 = vadd.f32 0.0, %v1354
        %v1356 = vpop.f32.mrb[0].mxu0
        %v1357 = vpop.f32.mrb[0].mxu0
        %v1358 = vpop.f32.mrb[0].mxu0
        %1359 = vdwg.mxu0
        %v1361 = vrot.slane %v769, 4
        %1362 = vrot.lane.b32.xlu0 %v1039, 104
        %v1363 = vpop.permute.xlu0 %1362
        %v1365 = vsel %vm771, %v1361, 0
        %v1368 = vsel %vm771, %v1363, 0
        %1370 = vmatprep.subr.bf16.mxu0 0
        %1371 = vmatpush1.bf16.xpose.msra.mxu0 %v1368
        %1372 = vmatprep.subr.bf16.mxu0 0
        %1373 = vmatpush1.bf16.xpose.msra.mxu0 0
        %1374 = vmatprep.subr.bf16.mxu0 0
        %1375 = vmatpush1.bf16.xpose.msra.mxu0 0
        %1376 = vmatprep.subr.bf16.mxu0 0
        %1377 = vmatpush1.bf16.xpose.msra.mxu0 0
        %1378 = vmatprep.subr.bf16.mxu0 0
        %1379 = vmatpush1.bf16.xpose.msra.mxu0 0
        %1380 = vmatprep.subr.bf16.mxu0 0
        %1381 = vmatpush1.bf16.xpose.msra.mxu0 0
        %1382 = vmatprep.subr.bf16.mxu0 0
        %1383 = vmatpush1.bf16.xpose.msra.mxu0 0
        %1384 = vmatprep.subr.bf16.mxu0 0
        %1385 = vmatpush1.bf16.xpose.msra.mxu0 0
        %1386 = vmatprep.subr.bf16.mxu0 0
        %1387 = vmatpush1.bf16.xpose.msra.mxu0 0
        %1388 = vmatprep.subr.bf16.mxu0 0
        %1389 = vmatpush1.bf16.xpose.msra.mxu0 0
        %1390 = vmatprep.subr.bf16.mxu0 0
        %1391 = vmatpush1.bf16.xpose.msra.mxu0 0
        %1392 = vmatprep.subr.bf16.mxu0 0
        %1393 = vmatpush1.bf16.xpose.msra.mxu0 0
        %1394 = vmatprep.subr.bf16.mxu0 0
        %1395 = vmatpush1.bf16.xpose.msra.mxu0 0
        %1396 = vmatprep.subr.bf16.mxu0 0
        %1397 = vmatpush1.bf16.xpose.msra.mxu0 0
        %1398 = vmatprep.subr.bf16.mxu0 0
        %1399 = vmatpush1.bf16.xpose.msra.mxu0 0
        %1400 = vmatprep.subr.bf16.mxu0 0
        %1401 = vmatpush1.bf16.xpose.msra.mxu0 0
        %1402 = vmatprep.mubr.bf16.mxu0 0
        %1403 = vmatmul.mubr.bf16.gmra.mrb[0].mxu0 %v1365
        %v1404 = vpop.f32.mrb[0].mxu0
        %v1405 = vadd.f32 %v1038, %v1404
        %v1406 = vpop.f32.mrb[0].mxu0
        %v1407 = vpop.f32.mrb[0].mxu0
        %v1408 = vpop.f32.mrb[0].mxu0
        %1409 = vdwg.mxu0
        %v1410 = vsel %vm771, %v1405, -inf
        %1411 = vmax.xlane.f32.xlu0 %v1410
        %v1412 = vpop.xlane.xlu0 %1411
        %v1413 = vsub.f32 %v1405, %v1412
        %v1414 = vmul.f32 %v1413, 1.442695
        %v1415 = vpow.pop %v1414
        %v1416 = vsel %vm771, %v1415, 0.0
        %1417 = vadd.xlane.f32.xlu0 %v1416
        %v1418 = vpop.xlane.xlu0 %1417
        %v1419 = vrcp.pop %v1418
        %v1420 = vmul.f32 %v1415, %v1419
        %v1421 = vpack.c.bf16 %v1420, %v1420
        %1422 = vrot.lane.b32.xlu0 %v1040, 104
        %v1423 = vpop.permute.xlu0 %1422
        %v1425 = vsel %vm771, %v1421, 0
        %v1428 = vsel %vm1099, %v1423, 0
        %1430 = vmatprep.subr.bf16.mxu0 0
        %1431 = vmatpush1.bf16.msra.mxu0 %v1428
        %1432 = vmatprep.subr.bf16.mxu0 0
        %1433 = vmatpush1.bf16.msra.mxu0 0
        %1434 = vmatprep.subr.bf16.mxu0 0
        %1435 = vmatpush1.bf16.msra.mxu0 0
        %1436 = vmatprep.subr.bf16.mxu0 0
        %1437 = vmatpush1.bf16.msra.mxu0 0
        %1438 = vmatprep.subr.bf16.mxu0 0
        %1439 = vmatpush1.bf16.msra.mxu0 0
        %1440 = vmatprep.subr.bf16.mxu0 0
        %1441 = vmatpush1.bf16.msra.mxu0 0
        %1442 = vmatprep.subr.bf16.mxu0 0
        %1443 = vmatpush1.bf16.msra.mxu0 0
        %1444 = vmatprep.subr.bf16.mxu0 0
        %1445 = vmatpush1.bf16.msra.mxu0 0
        %1446 = vmatprep.subr.bf16.mxu0 0
        %1447 = vmatpush1.bf16.msra.mxu0 0
        %1448 = vmatprep.subr.bf16.mxu0 0
        %1449 = vmatpush1.bf16.msra.mxu0 0
        %1450 = vmatprep.subr.bf16.mxu0 0
        %1451 = vmatpush1.bf16.msra.mxu0 0
        %1452 = vmatprep.subr.bf16.mxu0 0
        %1453 = vmatpush1.bf16.msra.mxu0 0
        %1454 = vmatprep.subr.bf16.mxu0 0
        %1455 = vmatpush1.bf16.msra.mxu0 0
        %1456 = vmatprep.subr.bf16.mxu0 0
        %1457 = vmatpush1.bf16.msra.mxu0 0
        %1458 = vmatprep.subr.bf16.mxu0 0
        %1459 = vmatpush1.bf16.msra.mxu0 0
        %1460 = vmatprep.subr.bf16.mxu0 0
        %1461 = vmatpush1.bf16.msra.mxu0 0
        %1462 = vmatprep.mubr.bf16.mxu0 0
        %1463 = vmatmul.mubr.bf16.gmra.mrb[0].mxu0 %v1425
        %v1464 = vpop.f32.mrb[0].mxu0
        %v1465 = vadd.f32 0.0, %v1464
        %v1466 = vpop.f32.mrb[0].mxu0
        %v1467 = vpop.f32.mrb[0].mxu0
        %v1468 = vpop.f32.mrb[0].mxu0
        %1469 = vdwg.mxu0
        %1471 = vrot.lane.b32.xlu0 %v1250, 8
        %v1472 = vpop.permute.xlu0 %1471
        %1475 = vrot.lane.b32.xlu0 %v1355, 16
        %v1476 = vpop.permute.xlu0 %1475
        %1479 = vrot.lane.b32.xlu0 %v1465, 24
        %v1480 = vpop.permute.xlu0 %1479
        %v1482 = vsel %vm771, %v1138, %v1472
        %vm1483 = vcmask 130048
        %v1484 = vsel %vm1483, %v1482, %v1476
        %vm1485 = vcmask 195584
        %v1486 = vsel %vm1485, %v1484, %v1480
        %v1487 = vpack.c.bf16 %v1486, %v1486
        %v1488 = vld [vmem:[%s10] sm:$0xf]
        %v1489 = vld [vmem:[%s10 + $0x4] sm:$0xf]
        %v1490 = vld [vmem:[%s10 + $0x8] sm:$0xf]
        %v1491 = vld [vmem:[%s10 + $0xc] sm:$0xf]
        %v1492 = vld [vmem:[%s11] sm:$0x1]
        %v1494 = vlaneseq
        %v1495 = vshrl.u32 %v1494, 7
        %v1496 = vsub.s32 0, %v1495
        %v1497 = vrot.slane %v1492, %v1496
        %v1503 = vunpack.c.l.b16 %v1488
        %v1504 = vunpack.c.l.b16 %v1489
        %v1505 = vunpack.c.l.b16 %v1490
        %v1506 = vunpack.c.l.b16 %v1491
        %v1507 = vpack.c.b16 %v1504, %v1503
        %v1508 = vpack.c.b16 %v1506, %v1505
        %v1512 = vsel %vm581, %v1487, 0
        %1514 = vmatprep.subr.bf16.mxu0 0
        %1515 = vmatpush1.bf16.msra.mxu0 %v1507
        %1516 = vmatprep.subr.bf16.mxu0 0
        %1517 = vmatpush1.bf16.msra.mxu0 %v1508
        %1518 = vmatprep.subr.bf16.mxu0 0
        %1519 = vmatpush1.bf16.msra.mxu0 0
        %1520 = vmatprep.subr.bf16.mxu0 0
        %1521 = vmatpush1.bf16.msra.mxu0 0
        %1522 = vmatprep.subr.bf16.mxu0 0
        %1523 = vmatpush1.bf16.msra.mxu0 0
        %1524 = vmatprep.subr.bf16.mxu0 0
        %1525 = vmatpush1.bf16.msra.mxu0 0
        %1526 = vmatprep.subr.bf16.mxu0 0
        %1527 = vmatpush1.bf16.msra.mxu0 0
        %1528 = vmatprep.subr.bf16.mxu0 0
        %1529 = vmatpush1.bf16.msra.mxu0 0
        %1530 = vmatprep.subr.bf16.mxu0 0
        %1531 = vmatpush1.bf16.msra.mxu0 0
        %1532 = vmatprep.subr.bf16.mxu0 0
        %1533 = vmatpush1.bf16.msra.mxu0 0
        %1534 = vmatprep.subr.bf16.mxu0 0
        %1535 = vmatpush1.bf16.msra.mxu0 0
        %1536 = vmatprep.subr.bf16.mxu0 0
        %1537 = vmatpush1.bf16.msra.mxu0 0
        %1538 = vmatprep.subr.bf16.mxu0 0
        %1539 = vmatpush1.bf16.msra.mxu0 0
        %1540 = vmatprep.subr.bf16.mxu0 0
        %1541 = vmatpush1.bf16.msra.mxu0 0
        %1542 = vmatprep.subr.bf16.mxu0 0
        %1543 = vmatpush1.bf16.msra.mxu0 0
        %1544 = vmatprep.subr.bf16.mxu0 0
        %1545 = vmatpush1.bf16.msra.mxu0 0
        %1546 = vmatprep.mubr.bf16.mxu0 0
        %1547 = vmatmul.mubr.bf16.gmra.mrb[0].mxu0 %v1512
        %v1548 = vpop.f32.mrb[0].mxu0
        %v1549 = vadd.f32 %v1497, %v1548
        %v1550 = vpop.f32.mrb[0].mxu0
        %v1551 = vpop.f32.mrb[0].mxu0
        %v1552 = vpop.f32.mrb[0].mxu0
        %1553 = vdwg.mxu0
        %1554 = vst.msk [vmem:[%s553] sm:$0xff] %vm581, %v1549
        %s1555 = sand.u32 %s309, 1
        %s1556 = scalar_lea.sflag [#allocation4], %s1555
        %s1557 = sand.u32 %s309, 1
        %s1558 = smul.addr %s1557, 8
        %s1559 = scalar_lea.vmem [#allocation14], %s1558
        // Predicated region
        $region97: #{tpu_custom_call.1} parent=67 // pred_check
          %p1560 = pneg %p319
        $region98: #{tpu_custom_call.1} parent=67 // pred_check_branch
          %1562 = sbr.rel (%p1560) target = $region100
        $region99: #{tpu_custom_call.1} parent=67 // pred_region
          %s1564 = ssub.s32 128, 128
          %1565 = vsyncadd %s1556, %s1564
          %s1566 = smul.addr %s34, 128
          %s1567 = scalar_lea.hbm %s12, %s1566
          %s1569 = sshll.u32 %s1559, 4
          %s1570 = int_to_ptr.vmem [resolvable:$true] %s1569
          %1572 = dma.vmem_to_hbm [thread:$0]  %s1570, 128, %s1567, %s1556
        $region100: #{tpu_custom_call.1} parent=67 // pred_fallthru
          _
      $region68: #{tpu_custom_call.1} parent=5 // pred_fallthru
        _
      %p1573 = scmp.le.s32.totalorder 2, %s29
      // Predicated region
      $region101: #{tpu_custom_call.1} parent=5 // pred_check
        %p1574 = pneg %p1573
      $region102: #{tpu_custom_call.1} parent=5 // pred_check_branch
        %1576 = sbr.rel (%p1574) target = $region104
      $region103: #{tpu_custom_call.1} parent=5 // pred_region
        %s1577 = ssub.s32 %s29, 2
        // Predicated region
        $region105: #{tpu_custom_call.1} parent=103 // pred_check
          %p1578 = pneg %p325
        $region106: #{tpu_custom_call.1} parent=103 // pred_check_branch
          %1580 = sbr.rel (%p1578) target = $region108
        $region107: #{tpu_custom_call.1} parent=103 // pred_region
          %s1581 = sand.u32 %s310, 1
          %s1582 = scalar_lea.sflag [#allocation4], %s1581
          %s1583 = sand.u32 %s310, 1
          %s1584 = smul.addr %s1583, 8
          %s1585 = scalar_lea.vmem [#allocation14], %s1584
          %1586 = dma.done %s1582, 128
        $region108: #{tpu_custom_call.1} parent=103 // pred_fallthru
          _
      $region104: #{tpu_custom_call.1} parent=5 // pred_fallthru
        _
    $region6: #{tpu_custom_call.1} parent=1 // loop_footer
      %s33 = sadd.s32 1, %s29
    $region7: #{tpu_custom_call.1} parent=1 // loop_footer_branch
      %28 = sbr.rel target = $region3
    $region8: #{tpu_custom_call.1} parent=1 // loop_exit
      _
    %1587 = vsyncpa [#allocation3], 1
    %s1588 = scalar_lea.sflag [#allocation3], 1
    %1589 = vsyncpa %s1588, 1
    %1590 = vsyncpa [#allocation6], 1
    %s1591 = scalar_lea.sflag [#allocation6], 1
    %1592 = vsyncpa %s1591, 1
    %1593 = vsyncpa [#allocation9], 1
    %1594 = vsyncpa [#allocation12], 1
    %1595 = vsyncpa [#allocation4], 1
    %s1596 = scalar_lea.sflag [#allocation4], 1
    %1597 = vsyncpa %s1596, 1

</llo_original>
